<compile_context>
chip_gen: v7x
topology: tpu7x:2x2x1
jax: 0.10.0
libtpu: 0.0.40
codegen_flags: <defaults>
</compile_context>

<pallas_src>
import functools

import jax
import jax.numpy as jnp
from jax import lax
from jax.experimental import pallas as pl
from jax.experimental.pallas import tpu as pltpu


def _gru_dir_kernel(emb_ref, wih_ref, whh_ref, bih_ref, bhh_ref, h0_ref,
                    out_ref, hn_ref, gi_ref):
    """One grid step = one GRU direction (0 = forward, 1 = reverse).

    emb_ref : (T, B, H)        wih_ref/whh_ref : (3, H, H)   (per-gate, pre-transposed)
    bih_ref/bhh_ref : (3, 1, H)  h0_ref : (B, H)
    out_ref : (T, B, H)        hn_ref : (B, H)
    gi_ref  : VMEM scratch (3, T*B, H) f32 — precomputed input projections
    """
    T, B, H = emb_ref.shape
    d = pl.program_id(0)

    # ---- hoisted input projection: one large GEMM per gate (fills the MXU) ---
    emb2d = emb_ref[...].reshape(T * B, H)
    # Fold b_ih (all gates) and b_hh for r/z (they sit outside the r* term).
    gi_ref[0] = (jnp.dot(emb2d, wih_ref[0], preferred_element_type=jnp.float32)
                 + bih_ref[0] + bhh_ref[0])
    gi_ref[1] = (jnp.dot(emb2d, wih_ref[1], preferred_element_type=jnp.float32)
                 + bih_ref[1] + bhh_ref[1])
    gi_ref[2] = (jnp.dot(emb2d, wih_ref[2], preferred_element_type=jnp.float32)
                 + bih_ref[2])

    # ---- loop-invariants hoisted out of the recurrence ----
    whh_r = whh_ref[0]                              # (H, H)
    whh_z = whh_ref[1]
    whh_n = whh_ref[2]
    bhh_n = jnp.broadcast_to(bhh_ref[2], (B, H))    # hoisted broadcast

    # forward walks t = 0..T-1, reverse walks t = T-1..0 (branchless affine idx)
    start = d * (T - 1)
    stride = 1 - 2 * d

    def step(s, h):
        t = start + stride * s
        row = pl.multiple_of(t * B, B)              # B is a multiple of 8
        gi_r = gi_ref[0, pl.ds(row, B), :]
        gi_z = gi_ref[1, pl.ds(row, B), :]
        gi_n = gi_ref[2, pl.ds(row, B), :]
        gh_r = jnp.dot(h, whh_r, preferred_element_type=jnp.float32)
        gh_z = jnp.dot(h, whh_z, preferred_element_type=jnp.float32)
        gh_n = jnp.dot(h, whh_n, preferred_element_type=jnp.float32)
        r = jax.nn.sigmoid(gi_r + gh_r)
        z = jax.nn.sigmoid(gi_z + gh_z)
        n = jnp.tanh(gi_n + r * (gh_n + bhh_n))
        h_new = (1.0 - z) * n + z * h
        out_ref[t] = h_new.astype(out_ref.dtype)
        return h_new

    unroll = True if T <= 16 else 4
    h_last = lax.fori_loop(0, T, step, h0_ref[...], unroll=unroll)
    hn_ref[...] = h_last.astype(hn_ref.dtype)


def bidir_gru_pallas(emb_tbh, wih, whh, bih, bhh, h0):
    """emb_tbh: (T,Bp,H) f32; wih/whh: (2,3,H,H); bih/bhh: (2,3,1,H); h0: (2,Bp,H)."""
    T, Bp, H = emb_tbh.shape

    out, hn = pl.pallas_call(
        _gru_dir_kernel,
        out_shape=(
            jax.ShapeDtypeStruct((2, T, Bp, H), jnp.float32),   # per-dir hidden seq
            jax.ShapeDtypeStruct((2, Bp, H), jnp.float32),      # per-dir final hidden
        ),
        grid=(2,),
        in_specs=[
            pl.BlockSpec((T, Bp, H), lambda d: (0, 0, 0)),              # embedded
            pl.BlockSpec((None, 3, H, H), lambda d: (d, 0, 0, 0)),      # W_ih[d] per-gate
            pl.BlockSpec((None, 3, H, H), lambda d: (d, 0, 0, 0)),      # W_hh[d] per-gate
            pl.BlockSpec((None, 3, 1, H), lambda d: (d, 0, 0, 0)),      # b_ih[d]
            pl.BlockSpec((None, 3, 1, H), lambda d: (d, 0, 0, 0)),      # b_hh[d]
            pl.BlockSpec((None, Bp, H), lambda d: (d, 0, 0)),           # h0[d]
        ],
        out_specs=(
            pl.BlockSpec((None, T, Bp, H), lambda d: (d, 0, 0, 0)),
            pl.BlockSpec((None, Bp, H), lambda d: (d, 0, 0)),
        ),
        scratch_shapes=[pltpu.VMEM((3, T * Bp, H), jnp.float32)],
        compiler_params=pltpu.CompilerParams(
            # Directions are fully independent -> shard across v7x's 2 TCs.
            dimension_semantics=("parallel",)),
    )(emb_tbh, wih, whh, bih, bhh, h0)
    return out, hn


def _prep_gru_params(w_ih, w_hh, b_ih, b_hh, H):
    """torch layout (2,3H,H)/(2,3H) -> lane-aligned per-gate kernel layout."""
    wih_g = jnp.transpose(w_ih.reshape(2, 3, H, H), (0, 1, 3, 2))   # (2,3,H_in,H_out)
    whh_g = jnp.transpose(w_hh.reshape(2, 3, H, H), (0, 1, 3, 2))
    bih_g = b_ih.reshape(2, 3, 1, H)
    bhh_g = b_hh.reshape(2, 3, 1, H)
    return wih_g, whh_g, bih_g, bhh_g


def encoder_rnn_forward(params, tokens, hidden):
    """Mirrors EncoderRNN.forward: embedding -> bidirectional GRU.

    tokens: (B, T) int32; hidden: (2, B, H) f32.
    Returns (output (B, T, 2H), hidden (2, B, H)) like torch with batch_first=True.
    """
    H = params["w_hh"].shape[-1]
    B, T = tokens.shape

    # Embedding lookup (gather) — plain JAX glue.
    emb = jnp.take(params["embedding"], tokens, axis=0)           # (B, T, H)
    emb_tbh = jnp.transpose(emb, (1, 0, 2)).astype(jnp.float32)   # (T, B, H)

    # Pad batch to a multiple of 8 so vreg sublanes are filled.
    Bp = max(8, -(-B // 8) * 8)
    h0 = hidden.astype(jnp.float32)
    if Bp != B:
        emb_tbh = jnp.pad(emb_tbh, ((0, 0), (0, Bp - B), (0, 0)))
        h0 = jnp.pad(h0, ((0, 0), (0, Bp - B), (0, 0)))

    wih_g, whh_g, bih_g, bhh_g = _prep_gru_params(
        params["w_ih"], params["w_hh"], params["b_ih"], params["b_hh"], H)

    out_dtbh, hn = bidir_gru_pallas(emb_tbh, wih_g, whh_g, bih_g, bhh_g, h0)

    # out_dtbh: (2, T, Bp, H) -> torch output (B, T, 2H) = concat([fwd, bwd], -1)
    output = jnp.concatenate([out_dtbh[0], out_dtbh[1]], axis=-1)  # (T, Bp, 2H)
    output = jnp.transpose(output, (1, 0, 2))[:B]                  # (B, T, 2H)
    return output, hn[:, :B]


# -------------------- pure-JAX reference (for correctness check) --------------
def _gru_cell_ref(x_t, h, w_ih, w_hh, b_ih, b_hh, H):
    gi = x_t @ w_ih.T + b_ih
    gh = h @ w_hh.T + b_hh
    r = jax.nn.sigmoid(gi[:, :H] + gh[:, :H])
    z = jax.nn.sigmoid(gi[:, H:2 * H] + gh[:, H:2 * H])
    n = jnp.tanh(gi[:, 2 * H:] + r * gh[:, 2 * H:])
    return (1.0 - z) * n + z * h


def encoder_rnn_reference(params, tokens, hidden):
    H = params["w_hh"].shape[-1]
    emb = jnp.take(params["embedding"], tokens, axis=0)           # (B, T, H)
    emb_tbh = jnp.transpose(emb, (1, 0, 2)).astype(jnp.float32)   # (T, B, H)

    def scan_dir(d, xs):
        def body(h, x_t):
            h_new = _gru_cell_ref(x_t, h, params["w_ih"][d], params["w_hh"][d],
                                  params["b_ih"][d], params["b_hh"][d], H)
            return h_new, h_new
        return lax.scan(body, hidden[d].astype(jnp.float32), xs)

    hN_f, out_f = scan_dir(0, emb_tbh)
    hN_b, out_b_rev = scan_dir(1, emb_tbh[::-1])
    out_b = out_b_rev[::-1]
    output = jnp.concatenate([out_f, out_b], axis=-1)             # (T, B, 2H)
    output = jnp.transpose(output, (1, 0, 2))                     # (B, T, 2H)
    hn = jnp.stack([hN_f, hN_b], axis=0)
    return output, hn


# ------------------------------- parameter init -------------------------------
def init_params(key, input_size, hidden_size):
    H = hidden_size
    k_emb, k1, k2, k3, k4 = jax.random.split(key, 5)
    bound = 1.0 / float(jnp.sqrt(jnp.float32(H)))
    uni = lambda k, shape: jax.random.uniform(k, shape, jnp.float32, -bound, bound)
    return {
        # nn.Embedding(input_size, hidden_size): N(0, 1)
        "embedding": jax.random.normal(k_emb, (input_size, H), jnp.float32),
        # nn.GRU parameters in torch layout, gate order (r, z, n), per direction
        "w_ih": uni(k1, (2, 3 * H, H)),
        "w_hh": uni(k2, (2, 3 * H, H)),
        "b_ih": uni(k3, (2, 3 * H)),
        "b_hh": uni(k4, (2, 3 * H)),
    }


if __name__ == "__main__":
    B, T, H, VOCAB = 2, 8, 32, 50
    key = jax.random.PRNGKey(0)
    k_params, k_tok, k_hid = jax.random.split(key, 3)

    params = init_params(k_params, VOCAB, H)
    tokens = jax.random.randint(k_tok, (B, T), 0, VOCAB, dtype=jnp.int32)
    # EncoderRNN.initHidden -> zeros((n_layers*2, B, H)); use random to exercise it.
    hidden0 = jax.random.normal(k_hid, (2, B, H), jnp.float32) * 0.1

    out, hn = jax.jit(functools.partial(encoder_rnn_forward, params))(tokens, hidden0)
    jax.block_until_ready((out, hn))

    out_ref, hn_ref = encoder_rnn_reference(params, tokens, hidden0)
    assert out.shape == (B, T, 2 * H) and hn.shape == (2, B, H)
    assert jnp.allclose(out, out_ref, atol=1e-4, rtol=1e-4), "output mismatch"
    assert jnp.allclose(hn, hn_ref, atol=1e-4, rtol=1e-4), "hidden mismatch"

    print("KERNEL_OK")
</pallas_src>

<mosaic_0001>
module attributes {stable_mosaic.version = 11 : i64} {
  func.func @_gru_dir_kernel(%arg0: i32, %arg1: memref<8x8x32xf32, #tpu.memory_space<vmem>>, %arg2: memref<1x3x32x32xf32, #tpu.memory_space<vmem>>, %arg3: memref<1x3x32x32xf32, #tpu.memory_space<vmem>>, %arg4: memref<1x3x1x32xf32, #tpu.memory_space<vmem>>, %arg5: memref<1x3x1x32xf32, #tpu.memory_space<vmem>>, %arg6: memref<1x8x32xf32, #tpu.memory_space<vmem>>, %arg7: memref<1x8x8x32xf32, #tpu.memory_space<vmem>>, %arg8: memref<1x8x32xf32, #tpu.memory_space<vmem>>, %arg9: memref<3x64x32xf32, #tpu.memory_space<vmem>>) attributes {dimension_semantics = [#tpu.dimension_semantics<parallel>], iteration_bounds = array<i64: 2>, scalar_prefetch = 0 : i64, scratch_operands = 1 : i64, tpu.core_type = #tpu.core_type<tc>, window_params = [{pipeline_mode = #tpu.pipeline_mode<synchronous>, transform_indices = @transform_0, window_bounds = array<i64: 8, 8, 32>}, {transform_indices = @transform_1, window_bounds = array<i64: 1, 3, 32, 32>}, {transform_indices = @transform_2, window_bounds = array<i64: 1, 3, 32, 32>}, {transform_indices = @transform_3, window_bounds = array<i64: 1, 3, 1, 32>}, {transform_indices = @transform_4, window_bounds = array<i64: 1, 3, 1, 32>}, {transform_indices = @transform_5, window_bounds = array<i64: 1, 8, 32>}, {transform_indices = @transform_6, window_bounds = array<i64: 1, 8, 8, 32>}, {transform_indices = @transform_7, window_bounds = array<i64: 1, 8, 32>}]} {
    %c0 = arith.constant 0 : index
    %c0_0 = arith.constant 0 : index
    %c0_1 = arith.constant 0 : index
    %0 = vector.load %arg1[%c0, %c0_0, %c0_1] : memref<8x8x32xf32, #tpu.memory_space<vmem>>, vector<8x8x32xf32>
    %1 = vector.shape_cast %0 : vector<8x8x32xf32> to vector<64x32xf32>
    %c0_2 = arith.constant 0 : index
    %c0_3 = arith.constant 0 : index
    %c0_4 = arith.constant 0 : index
    %c0_5 = arith.constant 0 : index
    %2 = vector.load %arg2[%c0_2, %c0_3, %c0_4, %c0_5] : memref<1x3x32x32xf32, #tpu.memory_space<vmem>>, vector<1x1x32x32xf32>
    %3 = vector.shape_cast %2 : vector<1x1x32x32xf32> to vector<32x32xf32>
    %cst = arith.constant dense<0.000000e+00> : vector<64x32xf32>
    %4 = tpu.matmul %1, %3, %cst {dimension_numbers = #tpu.dot_dimension_numbers<[1], [0], [0], [1], [0, 0, 1, 1], [], []>} : vector<64x32xf32>, vector<32x32xf32>, vector<64x32xf32> -> vector<64x32xf32>
    %c0_6 = arith.constant 0 : index
    %c0_7 = arith.constant 0 : index
    %c0_8 = arith.constant 0 : index
    %c0_9 = arith.constant 0 : index
    %5 = vector.load %arg4[%c0_6, %c0_7, %c0_8, %c0_9] : memref<1x3x1x32xf32, #tpu.memory_space<vmem>>, vector<1x1x1x32xf32>
    %6 = vector.shape_cast %5 : vector<1x1x1x32xf32> to vector<1x32xf32>
    %7 = vector.broadcast %6 : vector<1x32xf32> to vector<64x32xf32>
    %8 = arith.addf %4, %7 : vector<64x32xf32>
    %c0_10 = arith.constant 0 : index
    %c0_11 = arith.constant 0 : index
    %c0_12 = arith.constant 0 : index
    %c0_13 = arith.constant 0 : index
    %9 = vector.load %arg5[%c0_10, %c0_11, %c0_12, %c0_13] : memref<1x3x1x32xf32, #tpu.memory_space<vmem>>, vector<1x1x1x32xf32>
    %10 = vector.shape_cast %9 : vector<1x1x1x32xf32> to vector<1x32xf32>
    %11 = vector.broadcast %10 : vector<1x32xf32> to vector<64x32xf32>
    %12 = arith.addf %8, %11 : vector<64x32xf32>
    %c0_14 = arith.constant 0 : index
    %c0_15 = arith.constant 0 : index
    %c0_16 = arith.constant 0 : index
    %13 = vector.load %arg9[%c0_14, %c0_15, %c0_16] : memref<3x64x32xf32, #tpu.memory_space<vmem>>, vector<1x64x32xf32>
    %14 = vector.shape_cast %13 : vector<1x64x32xf32> to vector<64x32xf32>
    %15 = vector.shape_cast %12 : vector<64x32xf32> to vector<1x64x32xf32>
    tpu.vector_store %arg9[%c0_14, %c0_15, %c0_16], %15 {strides = array<i32>} : memref<3x64x32xf32, #tpu.memory_space<vmem>>, vector<1x64x32xf32>,
    %c0_17 = arith.constant 0 : index
    %c1 = arith.constant 1 : index
    %c0_18 = arith.constant 0 : index
    %c0_19 = arith.constant 0 : index
    %16 = vector.load %arg2[%c0_17, %c1, %c0_18, %c0_19] : memref<1x3x32x32xf32, #tpu.memory_space<vmem>>, vector<1x1x32x32xf32>
    %17 = vector.shape_cast %16 : vector<1x1x32x32xf32> to vector<32x32xf32>
    %cst_20 = arith.constant dense<0.000000e+00> : vector<64x32xf32>
    %18 = tpu.matmul %1, %17, %cst_20 {dimension_numbers = #tpu.dot_dimension_numbers<[1], [0], [0], [1], [0, 0, 1, 1], [], []>} : vector<64x32xf32>, vector<32x32xf32>, vector<64x32xf32> -> vector<64x32xf32>
    %c0_21 = arith.constant 0 : index
    %c1_22 = arith.constant 1 : index
    %c0_23 = arith.constant 0 : index
    %c0_24 = arith.constant 0 : index
    %19 = vector.load %arg4[%c0_21, %c1_22, %c0_23, %c0_24] : memref<1x3x1x32xf32, #tpu.memory_space<vmem>>, vector<1x1x1x32xf32>
    %20 = vector.shape_cast %19 : vector<1x1x1x32xf32> to vector<1x32xf32>
    %21 = vector.broadcast %20 : vector<1x32xf32> to vector<64x32xf32>
    %22 = arith.addf %18, %21 : vector<64x32xf32>
    %c0_25 = arith.constant 0 : index
    %c1_26 = arith.constant 1 : index
    %c0_27 = arith.constant 0 : index
    %c0_28 = arith.constant 0 : index
    %23 = vector.load %arg5[%c0_25, %c1_26, %c0_27, %c0_28] : memref<1x3x1x32xf32, #tpu.memory_space<vmem>>, vector<1x1x1x32xf32>
    %24 = vector.shape_cast %23 : vector<1x1x1x32xf32> to vector<1x32xf32>
    %25 = vector.broadcast %24 : vector<1x32xf32> to vector<64x32xf32>
    %26 = arith.addf %22, %25 : vector<64x32xf32>
    %c1_29 = arith.constant 1 : index
    %c0_30 = arith.constant 0 : index
    %c0_31 = arith.constant 0 : index
    %27 = vector.load %arg9[%c1_29, %c0_30, %c0_31] : memref<3x64x32xf32, #tpu.memory_space<vmem>>, vector<1x64x32xf32>
    %28 = vector.shape_cast %27 : vector<1x64x32xf32> to vector<64x32xf32>
    %29 = vector.shape_cast %26 : vector<64x32xf32> to vector<1x64x32xf32>
    tpu.vector_store %arg9[%c1_29, %c0_30, %c0_31], %29 {strides = array<i32>} : memref<3x64x32xf32, #tpu.memory_space<vmem>>, vector<1x64x32xf32>,
    %c0_32 = arith.constant 0 : index
    %c2 = arith.constant 2 : index
    %c0_33 = arith.constant 0 : index
    %c0_34 = arith.constant 0 : index
    %30 = vector.load %arg2[%c0_32, %c2, %c0_33, %c0_34] : memref<1x3x32x32xf32, #tpu.memory_space<vmem>>, vector<1x1x32x32xf32>
    %31 = vector.shape_cast %30 : vector<1x1x32x32xf32> to vector<32x32xf32>
    %cst_35 = arith.constant dense<0.000000e+00> : vector<64x32xf32>
    %32 = tpu.matmul %1, %31, %cst_35 {dimension_numbers = #tpu.dot_dimension_numbers<[1], [0], [0], [1], [0, 0, 1, 1], [], []>} : vector<64x32xf32>, vector<32x32xf32>, vector<64x32xf32> -> vector<64x32xf32>
    %c0_36 = arith.constant 0 : index
    %c2_37 = arith.constant 2 : index
    %c0_38 = arith.constant 0 : index
    %c0_39 = arith.constant 0 : index
    %33 = vector.load %arg4[%c0_36, %c2_37, %c0_38, %c0_39] : memref<1x3x1x32xf32, #tpu.memory_space<vmem>>, vector<1x1x1x32xf32>
    %34 = vector.shape_cast %33 : vector<1x1x1x32xf32> to vector<1x32xf32>
    %35 = vector.broadcast %34 : vector<1x32xf32> to vector<64x32xf32>
    %36 = arith.addf %32, %35 : vector<64x32xf32>
    %c2_40 = arith.constant 2 : index
    %c0_41 = arith.constant 0 : index
    %c0_42 = arith.constant 0 : index
    %37 = vector.load %arg9[%c2_40, %c0_41, %c0_42] : memref<3x64x32xf32, #tpu.memory_space<vmem>>, vector<1x64x32xf32>
    %38 = vector.shape_cast %37 : vector<1x64x32xf32> to vector<64x32xf32>
    %39 = vector.shape_cast %36 : vector<64x32xf32> to vector<1x64x32xf32>
    tpu.vector_store %arg9[%c2_40, %c0_41, %c0_42], %39 {strides = array<i32>} : memref<3x64x32xf32, #tpu.memory_space<vmem>>, vector<1x64x32xf32>,
    %c0_43 = arith.constant 0 : index
    %c0_44 = arith.constant 0 : index
    %c0_45 = arith.constant 0 : index
    %c0_46 = arith.constant 0 : index
    %40 = vector.load %arg3[%c0_43, %c0_44, %c0_45, %c0_46] : memref<1x3x32x32xf32, #tpu.memory_space<vmem>>, vector<1x1x32x32xf32>
    %41 = vector.shape_cast %40 : vector<1x1x32x32xf32> to vector<32x32xf32>
    %c0_47 = arith.constant 0 : index
    %c1_48 = arith.constant 1 : index
    %c0_49 = arith.constant 0 : index
    %c0_50 = arith.constant 0 : index
    %42 = vector.load %arg3[%c0_47, %c1_48, %c0_49, %c0_50] : memref<1x3x32x32xf32, #tpu.memory_space<vmem>>, vector<1x1x32x32xf32>
    %43 = vector.shape_cast %42 : vector<1x1x32x32xf32> to vector<32x32xf32>
    %c0_51 = arith.constant 0 : index
    %c2_52 = arith.constant 2 : index
    %c0_53 = arith.constant 0 : index
    %c0_54 = arith.constant 0 : index
    %44 = vector.load %arg3[%c0_51, %c2_52, %c0_53, %c0_54] : memref<1x3x32x32xf32, #tpu.memory_space<vmem>>, vector<1x1x32x32xf32>
    %45 = vector.shape_cast %44 : vector<1x1x32x32xf32> to vector<32x32xf32>
    %c0_55 = arith.constant 0 : index
    %c2_56 = arith.constant 2 : index
    %c0_57 = arith.constant 0 : index
    %c0_58 = arith.constant 0 : index
    %46 = vector.load %arg5[%c0_55, %c2_56, %c0_57, %c0_58] : memref<1x3x1x32xf32, #tpu.memory_space<vmem>>, vector<1x1x1x32xf32>
    %47 = vector.shape_cast %46 : vector<1x1x1x32xf32> to vector<1x32xf32>
    %48 = vector.shape_cast %47 : vector<1x32xf32> to vector<1x32xf32>
    %49 = vector.broadcast %48 : vector<1x32xf32> to vector<8x32xf32>
    %c7_i32 = arith.constant 7 : i32
    %50 = arith.muli %arg0, %c7_i32 : i32
    %c2_i32 = arith.constant 2 : i32
    %51 = arith.muli %c2_i32, %arg0 : i32
    %c1_i32 = arith.constant 1 : i32
    %52 = arith.subi %c1_i32, %51 : i32
    %c0_59 = arith.constant 0 : index
    %c0_60 = arith.constant 0 : index
    %c0_61 = arith.constant 0 : index
    %53 = vector.load %arg6[%c0_59, %c0_60, %c0_61] : memref<1x8x32xf32, #tpu.memory_space<vmem>>, vector<1x8x32xf32>
    %54 = vector.shape_cast %53 : vector<1x8x32xf32> to vector<8x32xf32>
    %c0_i32 = arith.constant 0 : i32
    %55 = arith.muli %52, %c0_i32 : i32
    %56 = arith.addi %50, %55 : i32
    %c8_i32 = arith.constant 8 : i32
    %57 = arith.muli %56, %c8_i32 : i32
    %58 = tpu.assume_multiple %57, 8 : i32
    %c0_62 = arith.constant 0 : index
    %59 = arith.index_cast %58 : i32 to index
    %c0_63 = arith.constant 0 : index
    %60 = vector.load %arg9[%c0_62, %59, %c0_63] : memref<3x64x32xf32, #tpu.memory_space<vmem>>, vector<1x8x32xf32>
    %61 = vector.shape_cast %60 : vector<1x8x32xf32> to vector<8x32xf32>
    %c1_64 = arith.constant 1 : index
    %62 = arith.index_cast %58 : i32 to index
    %c0_65 = arith.constant 0 : index
    %63 = vector.load %arg9[%c1_64, %62, %c0_65] : memref<3x64x32xf32, #tpu.memory_space<vmem>>, vector<1x8x32xf32>
    %64 = vector.shape_cast %63 : vector<1x8x32xf32> to vector<8x32xf32>
    %c2_66 = arith.constant 2 : index
    %65 = arith.index_cast %58 : i32 to index
    %c0_67 = arith.constant 0 : index
    %66 = vector.load %arg9[%c2_66, %65, %c0_67] : memref<3x64x32xf32, #tpu.memory_space<vmem>>, vector<1x8x32xf32>
    %67 = vector.shape_cast %66 : vector<1x8x32xf32> to vector<8x32xf32>
    %cst_68 = arith.constant dense<0.000000e+00> : vector<8x32xf32>
    %68 = tpu.matmul %54, %41, %cst_68 {dimension_numbers = #tpu.dot_dimension_numbers<[1], [0], [0], [1], [0, 0, 1, 1], [], []>} : vector<8x32xf32>, vector<32x32xf32>, vector<8x32xf32> -> vector<8x32xf32>
    %cst_69 = arith.constant dense<0.000000e+00> : vector<8x32xf32>
    %69 = tpu.matmul %54, %43, %cst_69 {dimension_numbers = #tpu.dot_dimension_numbers<[1], [0], [0], [1], [0, 0, 1, 1], [], []>} : vector<8x32xf32>, vector<32x32xf32>, vector<8x32xf32> -> vector<8x32xf32>
    %cst_70 = arith.constant dense<0.000000e+00> : vector<8x32xf32>
    %70 = tpu.matmul %54, %45, %cst_70 {dimension_numbers = #tpu.dot_dimension_numbers<[1], [0], [0], [1], [0, 0, 1, 1], [], []>} : vector<8x32xf32>, vector<32x32xf32>, vector<8x32xf32> -> vector<8x32xf32>
    %71 = arith.addf %61, %68 : vector<8x32xf32>
    %72 = arith.negf %71 : vector<8x32xf32>
    %73 = math.exp %72 : vector<8x32xf32>
    %cst_71 = arith.constant 1.000000e+00 : f32
    %74 = vector.broadcast %cst_71 : f32 to vector<8x32xf32>
    %75 = arith.addf %74, %73 : vector<8x32xf32>
    %76 = arith.divf %74, %75 : vector<8x32xf32>
    %77 = arith.addf %64, %69 : vector<8x32xf32>
    %78 = arith.negf %77 : vector<8x32xf32>
    %79 = math.exp %78 : vector<8x32xf32>
    %cst_72 = arith.constant 1.000000e+00 : f32
    %80 = vector.broadcast %cst_72 : f32 to vector<8x32xf32>
    %81 = arith.addf %80, %79 : vector<8x32xf32>
    %82 = arith.divf %80, %81 : vector<8x32xf32>
    %83 = arith.addf %70, %49 : vector<8x32xf32>
    %84 = arith.mulf %76, %83 : vector<8x32xf32>
    %85 = arith.addf %67, %84 : vector<8x32xf32>
    %86 = math.tanh %85 : vector<8x32xf32>
    %cst_73 = arith.constant 1.000000e+00 : f32
    %87 = vector.broadcast %cst_73 : f32 to vector<8x32xf32>
    %88 = arith.subf %87, %82 : vector<8x32xf32>
    %89 = arith.mulf %88, %86 : vector<8x32xf32>
    %90 = arith.mulf %82, %54 : vector<8x32xf32>
    %91 = arith.addf %89, %90 : vector<8x32xf32>
    %c0_74 = arith.constant 0 : index
    %92 = arith.index_cast %56 : i32 to index
    %c0_75 = arith.constant 0 : index
    %c0_76 = arith.constant 0 : index
    %93 = vector.load %arg7[%c0_74, %92, %c0_75, %c0_76] : memref<1x8x8x32xf32, #tpu.memory_space<vmem>>, vector<1x1x8x32xf32>
    %94 = vector.shape_cast %93 : vector<1x1x8x32xf32> to vector<8x32xf32>
    %95 = vector.shape_cast %91 : vector<8x32xf32> to vector<1x1x8x32xf32>
    tpu.vector_store %arg7[%c0_74, %92, %c0_75, %c0_76], %95 {strides = array<i32>} : memref<1x8x8x32xf32, #tpu.memory_space<vmem>>, vector<1x1x8x32xf32>,
    %c1_i32_77 = arith.constant 1 : i32
    %96 = arith.muli %52, %c1_i32_77 : i32
    %97 = arith.addi %50, %96 : i32
    %c8_i32_78 = arith.constant 8 : i32
    %98 = arith.muli %97, %c8_i32_78 : i32
    %99 = tpu.assume_multiple %98, 8 : i32
    %c0_79 = arith.constant 0 : index
    %100 = arith.index_cast %99 : i32 to index
    %c0_80 = arith.constant 0 : index
    %101 = vector.load %arg9[%c0_79, %100, %c0_80] : memref<3x64x32xf32, #tpu.memory_space<vmem>>, vector<1x8x32xf32>
    %102 = vector.shape_cast %101 : vector<1x8x32xf32> to vector<8x32xf32>
    %c1_81 = arith.constant 1 : index
    %103 = arith.index_cast %99 : i32 to index
    %c0_82 = arith.constant 0 : index
    %104 = vector.load %arg9[%c1_81, %103, %c0_82] : memref<3x64x32xf32, #tpu.memory_space<vmem>>, vector<1x8x32xf32>
    %105 = vector.shape_cast %104 : vector<1x8x32xf32> to vector<8x32xf32>
    %c2_83 = arith.constant 2 : index
    %106 = arith.index_cast %99 : i32 to index
    %c0_84 = arith.constant 0 : index
    %107 = vector.load %arg9[%c2_83, %106, %c0_84] : memref<3x64x32xf32, #tpu.memory_space<vmem>>, vector<1x8x32xf32>
    %108 = vector.shape_cast %107 : vector<1x8x32xf32> to vector<8x32xf32>
    %cst_85 = arith.constant dense<0.000000e+00> : vector<8x32xf32>
    %109 = tpu.matmul %91, %41, %cst_85 {dimension_numbers = #tpu.dot_dimension_numbers<[1], [0], [0], [1], [0, 0, 1, 1], [], []>} : vector<8x32xf32>, vector<32x32xf32>, vector<8x32xf32> -> vector<8x32xf32>
    %cst_86 = arith.constant dense<0.000000e+00> : vector<8x32xf32>
    %110 = tpu.matmul %91, %43, %cst_86 {dimension_numbers = #tpu.dot_dimension_numbers<[1], [0], [0], [1], [0, 0, 1, 1], [], []>} : vector<8x32xf32>, vector<32x32xf32>, vector<8x32xf32> -> vector<8x32xf32>
    %cst_87 = arith.constant dense<0.000000e+00> : vector<8x32xf32>
    %111 = tpu.matmul %91, %45, %cst_87 {dimension_numbers = #tpu.dot_dimension_numbers<[1], [0], [0], [1], [0, 0, 1, 1], [], []>} : vector<8x32xf32>, vector<32x32xf32>, vector<8x32xf32> -> vector<8x32xf32>
    %112 = arith.addf %102, %109 : vector<8x32xf32>
    %113 = arith.negf %112 : vector<8x32xf32>
    %114 = math.exp %113 : vector<8x32xf32>
    %cst_88 = arith.constant 1.000000e+00 : f32
    %115 = vector.broadcast %cst_88 : f32 to vector<8x32xf32>
    %116 = arith.addf %115, %114 : vector<8x32xf32>
    %117 = arith.divf %115, %116 : vector<8x32xf32>
    %118 = arith.addf %105, %110 : vector<8x32xf32>
    %119 = arith.negf %118 : vector<8x32xf32>
    %120 = math.exp %119 : vector<8x32xf32>
    %cst_89 = arith.constant 1.000000e+00 : f32
    %121 = vector.broadcast %cst_89 : f32 to vector<8x32xf32>
    %122 = arith.addf %121, %120 : vector<8x32xf32>
    %123 = arith.divf %121, %122 : vector<8x32xf32>
    %124 = arith.addf %111, %49 : vector<8x32xf32>
    %125 = arith.mulf %117, %124 : vector<8x32xf32>
    %126 = arith.addf %108, %125 : vector<8x32xf32>
    %127 = math.tanh %126 : vector<8x32xf32>
    %cst_90 = arith.constant 1.000000e+00 : f32
    %128 = vector.broadcast %cst_90 : f32 to vector<8x32xf32>
    %129 = arith.subf %128, %123 : vector<8x32xf32>
    %130 = arith.mulf %129, %127 : vector<8x32xf32>
    %131 = arith.mulf %123, %91 : vector<8x32xf32>
    %132 = arith.addf %130, %131 : vector<8x32xf32>
    %c0_91 = arith.constant 0 : index
    %133 = arith.index_cast %97 : i32 to index
    %c0_92 = arith.constant 0 : index
    %c0_93 = arith.constant 0 : index
    %134 = vector.load %arg7[%c0_91, %133, %c0_92, %c0_93] : memref<1x8x8x32xf32, #tpu.memory_space<vmem>>, vector<1x1x8x32xf32>
    %135 = vector.shape_cast %134 : vector<1x1x8x32xf32> to vector<8x32xf32>
    %136 = vector.shape_cast %132 : vector<8x32xf32> to vector<1x1x8x32xf32>
    tpu.vector_store %arg7[%c0_91, %133, %c0_92, %c0_93], %136 {strides = array<i32>} : memref<1x8x8x32xf32, #tpu.memory_space<vmem>>, vector<1x1x8x32xf32>,
    %c2_i32_94 = arith.constant 2 : i32
    %137 = arith.muli %52, %c2_i32_94 : i32
    %138 = arith.addi %50, %137 : i32
    %c8_i32_95 = arith.constant 8 : i32
    %139 = arith.muli %138, %c8_i32_95 : i32
    %140 = tpu.assume_multiple %139, 8 : i32
    %c0_96 = arith.constant 0 : index
    %141 = arith.index_cast %140 : i32 to index
    %c0_97 = arith.constant 0 : index
    %142 = vector.load %arg9[%c0_96, %141, %c0_97] : memref<3x64x32xf32, #tpu.memory_space<vmem>>, vector<1x8x32xf32>
    %143 = vector.shape_cast %142 : vector<1x8x32xf32> to vector<8x32xf32>
    %c1_98 = arith.constant 1 : index
    %144 = arith.index_cast %140 : i32 to index
    %c0_99 = arith.constant 0 : index
    %145 = vector.load %arg9[%c1_98, %144, %c0_99] : memref<3x64x32xf32, #tpu.memory_space<vmem>>, vector<1x8x32xf32>
    %146 = vector.shape_cast %145 : vector<1x8x32xf32> to vector<8x32xf32>
    %c2_100 = arith.constant 2 : index
    %147 = arith.index_cast %140 : i32 to index
    %c0_101 = arith.constant 0 : index
    %148 = vector.load %arg9[%c2_100, %147, %c0_101] : memref<3x64x32xf32, #tpu.memory_space<vmem>>, vector<1x8x32xf32>
    %149 = vector.shape_cast %148 : vector<1x8x32xf32> to vector<8x32xf32>
    %cst_102 = arith.constant dense<0.000000e+00> : vector<8x32xf32>
    %150 = tpu.matmul %132, %41, %cst_102 {dimension_numbers = #tpu.dot_dimension_numbers<[1], [0], [0], [1], [0, 0, 1, 1], [], []>} : vector<8x32xf32>, vector<32x32xf32>, vector<8x32xf32> -> vector<8x32xf32>
    %cst_103 = arith.constant dense<0.000000e+00> : vector<8x32xf32>
    %151 = tpu.matmul %132, %43, %cst_103 {dimension_numbers = #tpu.dot_dimension_numbers<[1], [0], [0], [1], [0, 0, 1, 1], [], []>} : vector<8x32xf32>, vector<32x32xf32>, vector<8x32xf32> -> vector<8x32xf32>
    %cst_104 = arith.constant dense<0.000000e+00> : vector<8x32xf32>
    %152 = tpu.matmul %132, %45, %cst_104 {dimension_numbers = #tpu.dot_dimension_numbers<[1], [0], [0], [1], [0, 0, 1, 1], [], []>} : vector<8x32xf32>, vector<32x32xf32>, vector<8x32xf32> -> vector<8x32xf32>
    %153 = arith.addf %143, %150 : vector<8x32xf32>
    %154 = arith.negf %153 : vector<8x32xf32>
    %155 = math.exp %154 : vector<8x32xf32>
    %cst_105 = arith.constant 1.000000e+00 : f32
    %156 = vector.broadcast %cst_105 : f32 to vector<8x32xf32>
    %157 = arith.addf %156, %155 : vector<8x32xf32>
    %158 = arith.divf %156, %157 : vector<8x32xf32>
    %159 = arith.addf %146, %151 : vector<8x32xf32>
    %160 = arith.negf %159 : vector<8x32xf32>
    %161 = math.exp %160 : vector<8x32xf32>
    %cst_106 = arith.constant 1.000000e+00 : f32
    %162 = vector.broadcast %cst_106 : f32 to vector<8x32xf32>
    %163 = arith.addf %162, %161 : vector<8x32xf32>
    %164 = arith.divf %162, %163 : vector<8x32xf32>
    %165 = arith.addf %152, %49 : vector<8x32xf32>
    %166 = arith.mulf %158, %165 : vector<8x32xf32>
    %167 = arith.addf %149, %166 : vector<8x32xf32>
    %168 = math.tanh %167 : vector<8x32xf32>
    %cst_107 = arith.constant 1.000000e+00 : f32
    %169 = vector.broadcast %cst_107 : f32 to vector<8x32xf32>
    %170 = arith.subf %169, %164 : vector<8x32xf32>
    %171 = arith.mulf %170, %168 : vector<8x32xf32>
    %172 = arith.mulf %164, %132 : vector<8x32xf32>
    %173 = arith.addf %171, %172 : vector<8x32xf32>
    %c0_108 = arith.constant 0 : index
    %174 = arith.index_cast %138 : i32 to index
    %c0_109 = arith.constant 0 : index
    %c0_110 = arith.constant 0 : index
    %175 = vector.load %arg7[%c0_108, %174, %c0_109, %c0_110] : memref<1x8x8x32xf32, #tpu.memory_space<vmem>>, vector<1x1x8x32xf32>
    %176 = vector.shape_cast %175 : vector<1x1x8x32xf32> to vector<8x32xf32>
    %177 = vector.shape_cast %173 : vector<8x32xf32> to vector<1x1x8x32xf32>
    tpu.vector_store %arg7[%c0_108, %174, %c0_109, %c0_110], %177 {strides = array<i32>} : memref<1x8x8x32xf32, #tpu.memory_space<vmem>>, vector<1x1x8x32xf32>,
    %c3_i32 = arith.constant 3 : i32
    %178 = arith.muli %52, %c3_i32 : i32
    %179 = arith.addi %50, %178 : i32
    %c8_i32_111 = arith.constant 8 : i32
    %180 = arith.muli %179, %c8_i32_111 : i32
    %181 = tpu.assume_multiple %180, 8 : i32
    %c0_112 = arith.constant 0 : index
    %182 = arith.index_cast %181 : i32 to index
    %c0_113 = arith.constant 0 : index
    %183 = vector.load %arg9[%c0_112, %182, %c0_113] : memref<3x64x32xf32, #tpu.memory_space<vmem>>, vector<1x8x32xf32>
    %184 = vector.shape_cast %183 : vector<1x8x32xf32> to vector<8x32xf32>
    %c1_114 = arith.constant 1 : index
    %185 = arith.index_cast %181 : i32 to index
    %c0_115 = arith.constant 0 : index
    %186 = vector.load %arg9[%c1_114, %185, %c0_115] : memref<3x64x32xf32, #tpu.memory_space<vmem>>, vector<1x8x32xf32>
    %187 = vector.shape_cast %186 : vector<1x8x32xf32> to vector<8x32xf32>
    %c2_116 = arith.constant 2 : index
    %188 = arith.index_cast %181 : i32 to index
    %c0_117 = arith.constant 0 : index
    %189 = vector.load %arg9[%c2_116, %188, %c0_117] : memref<3x64x32xf32, #tpu.memory_space<vmem>>, vector<1x8x32xf32>
    %190 = vector.shape_cast %189 : vector<1x8x32xf32> to vector<8x32xf32>
    %cst_118 = arith.constant dense<0.000000e+00> : vector<8x32xf32>
    %191 = tpu.matmul %173, %41, %cst_118 {dimension_numbers = #tpu.dot_dimension_numbers<[1], [0], [0], [1], [0, 0, 1, 1], [], []>} : vector<8x32xf32>, vector<32x32xf32>, vector<8x32xf32> -> vector<8x32xf32>
    %cst_119 = arith.constant dense<0.000000e+00> : vector<8x32xf32>
    %192 = tpu.matmul %173, %43, %cst_119 {dimension_numbers = #tpu.dot_dimension_numbers<[1], [0], [0], [1], [0, 0, 1, 1], [], []>} : vector<8x32xf32>, vector<32x32xf32>, vector<8x32xf32> -> vector<8x32xf32>
    %cst_120 = arith.constant dense<0.000000e+00> : vector<8x32xf32>
    %193 = tpu.matmul %173, %45, %cst_120 {dimension_numbers = #tpu.dot_dimension_numbers<[1], [0], [0], [1], [0, 0, 1, 1], [], []>} : vector<8x32xf32>, vector<32x32xf32>, vector<8x32xf32> -> vector<8x32xf32>
    %194 = arith.addf %184, %191 : vector<8x32xf32>
    %195 = arith.negf %194 : vector<8x32xf32>
    %196 = math.exp %195 : vector<8x32xf32>
    %cst_121 = arith.constant 1.000000e+00 : f32
    %197 = vector.broadcast %cst_121 : f32 to vector<8x32xf32>
    %198 = arith.addf %197, %196 : vector<8x32xf32>
    %199 = arith.divf %197, %198 : vector<8x32xf32>
    %200 = arith.addf %187, %192 : vector<8x32xf32>
    %201 = arith.negf %200 : vector<8x32xf32>
    %202 = math.exp %201 : vector<8x32xf32>
    %cst_122 = arith.constant 1.000000e+00 : f32
    %203 = vector.broadcast %cst_122 : f32 to vector<8x32xf32>
    %204 = arith.addf %203, %202 : vector<8x32xf32>
    %205 = arith.divf %203, %204 : vector<8x32xf32>
    %206 = arith.addf %193, %49 : vector<8x32xf32>
    %207 = arith.mulf %199, %206 : vector<8x32xf32>
    %208 = arith.addf %190, %207 : vector<8x32xf32>
    %209 = math.tanh %208 : vector<8x32xf32>
    %cst_123 = arith.constant 1.000000e+00 : f32
    %210 = vector.broadcast %cst_123 : f32 to vector<8x32xf32>
    %211 = arith.subf %210, %205 : vector<8x32xf32>
    %212 = arith.mulf %211, %209 : vector<8x32xf32>
    %213 = arith.mulf %205, %173 : vector<8x32xf32>
    %214 = arith.addf %212, %213 : vector<8x32xf32>
    %c0_124 = arith.constant 0 : index
    %215 = arith.index_cast %179 : i32 to index
    %c0_125 = arith.constant 0 : index
    %c0_126 = arith.constant 0 : index
    %216 = vector.load %arg7[%c0_124, %215, %c0_125, %c0_126] : memref<1x8x8x32xf32, #tpu.memory_space<vmem>>, vector<1x1x8x32xf32>
    %217 = vector.shape_cast %216 : vector<1x1x8x32xf32> to vector<8x32xf32>
    %218 = vector.shape_cast %214 : vector<8x32xf32> to vector<1x1x8x32xf32>
    tpu.vector_store %arg7[%c0_124, %215, %c0_125, %c0_126], %218 {strides = array<i32>} : memref<1x8x8x32xf32, #tpu.memory_space<vmem>>, vector<1x1x8x32xf32>,
    %c4_i32 = arith.constant 4 : i32
    %219 = arith.muli %52, %c4_i32 : i32
    %220 = arith.addi %50, %219 : i32
    %c8_i32_127 = arith.constant 8 : i32
    %221 = arith.muli %220, %c8_i32_127 : i32
    %222 = tpu.assume_multiple %221, 8 : i32
    %c0_128 = arith.constant 0 : index
    %223 = arith.index_cast %222 : i32 to index
    %c0_129 = arith.constant 0 : index
    %224 = vector.load %arg9[%c0_128, %223, %c0_129] : memref<3x64x32xf32, #tpu.memory_space<vmem>>, vector<1x8x32xf32>
    %225 = vector.shape_cast %224 : vector<1x8x32xf32> to vector<8x32xf32>
    %c1_130 = arith.constant 1 : index
    %226 = arith.index_cast %222 : i32 to index
    %c0_131 = arith.constant 0 : index
    %227 = vector.load %arg9[%c1_130, %226, %c0_131] : memref<3x64x32xf32, #tpu.memory_space<vmem>>, vector<1x8x32xf32>
    %228 = vector.shape_cast %227 : vector<1x8x32xf32> to vector<8x32xf32>
    %c2_132 = arith.constant 2 : index
    %229 = arith.index_cast %222 : i32 to index
    %c0_133 = arith.constant 0 : index
    %230 = vector.load %arg9[%c2_132, %229, %c0_133] : memref<3x64x32xf32, #tpu.memory_space<vmem>>, vector<1x8x32xf32>
    %231 = vector.shape_cast %230 : vector<1x8x32xf32> to vector<8x32xf32>
    %cst_134 = arith.constant dense<0.000000e+00> : vector<8x32xf32>
    %232 = tpu.matmul %214, %41, %cst_134 {dimension_numbers = #tpu.dot_dimension_numbers<[1], [0], [0], [1], [0, 0, 1, 1], [], []>} : vector<8x32xf32>, vector<32x32xf32>, vector<8x32xf32> -> vector<8x32xf32>
    %cst_135 = arith.constant dense<0.000000e+00> : vector<8x32xf32>
    %233 = tpu.matmul %214, %43, %cst_135 {dimension_numbers = #tpu.dot_dimension_numbers<[1], [0], [0], [1], [0, 0, 1, 1], [], []>} : vector<8x32xf32>, vector<32x32xf32>, vector<8x32xf32> -> vector<8x32xf32>
    %cst_136 = arith.constant dense<0.000000e+00> : vector<8x32xf32>
    %234 = tpu.matmul %214, %45, %cst_136 {dimension_numbers = #tpu.dot_dimension_numbers<[1], [0], [0], [1], [0, 0, 1, 1], [], []>} : vector<8x32xf32>, vector<32x32xf32>, vector<8x32xf32> -> vector<8x32xf32>
    %235 = arith.addf %225, %232 : vector<8x32xf32>
    %236 = arith.negf %235 : vector<8x32xf32>
    %237 = math.exp %236 : vector<8x32xf32>
    %cst_137 = arith.constant 1.000000e+00 : f32
    %238 = vector.broadcast %cst_137 : f32 to vector<8x32xf32>
    %239 = arith.addf %238, %237 : vector<8x32xf32>
    %240 = arith.divf %238, %239 : vector<8x32xf32>
    %241 = arith.addf %228, %233 : vector<8x32xf32>
    %242 = arith.negf %241 : vector<8x32xf32>
    %243 = math.exp %242 : vector<8x32xf32>
    %cst_138 = arith.constant 1.000000e+00 : f32
    %244 = vector.broadcast %cst_138 : f32 to vector<8x32xf32>
    %245 = arith.addf %244, %243 : vector<8x32xf32>
    %246 = arith.divf %244, %245 : vector<8x32xf32>
    %247 = arith.addf %234, %49 : vector<8x32xf32>
    %248 = arith.mulf %240, %247 : vector<8x32xf32>
    %249 = arith.addf %231, %248 : vector<8x32xf32>
    %250 = math.tanh %249 : vector<8x32xf32>
    %cst_139 = arith.constant 1.000000e+00 : f32
    %251 = vector.broadcast %cst_139 : f32 to vector<8x32xf32>
    %252 = arith.subf %251, %246 : vector<8x32xf32>
    %253 = arith.mulf %252, %250 : vector<8x32xf32>
    %254 = arith.mulf %246, %214 : vector<8x32xf32>
    %255 = arith.addf %253, %254 : vector<8x32xf32>
    %c0_140 = arith.constant 0 : index
    %256 = arith.index_cast %220 : i32 to index
    %c0_141 = arith.constant 0 : index
    %c0_142 = arith.constant 0 : index
    %257 = vector.load %arg7[%c0_140, %256, %c0_141, %c0_142] : memref<1x8x8x32xf32, #tpu.memory_space<vmem>>, vector<1x1x8x32xf32>
    %258 = vector.shape_cast %257 : vector<1x1x8x32xf32> to vector<8x32xf32>
    %259 = vector.shape_cast %255 : vector<8x32xf32> to vector<1x1x8x32xf32>
    tpu.vector_store %arg7[%c0_140, %256, %c0_141, %c0_142], %259 {strides = array<i32>} : memref<1x8x8x32xf32, #tpu.memory_space<vmem>>, vector<1x1x8x32xf32>,
    %c5_i32 = arith.constant 5 : i32
    %260 = arith.muli %52, %c5_i32 : i32
    %261 = arith.addi %50, %260 : i32
    %c8_i32_143 = arith.constant 8 : i32
    %262 = arith.muli %261, %c8_i32_143 : i32
    %263 = tpu.assume_multiple %262, 8 : i32
    %c0_144 = arith.constant 0 : index
    %264 = arith.index_cast %263 : i32 to index
    %c0_145 = arith.constant 0 : index
    %265 = vector.load %arg9[%c0_144, %264, %c0_145] : memref<3x64x32xf32, #tpu.memory_space<vmem>>, vector<1x8x32xf32>
    %266 = vector.shape_cast %265 : vector<1x8x32xf32> to vector<8x32xf32>
    %c1_146 = arith.constant 1 : index
    %267 = arith.index_cast %263 : i32 to index
    %c0_147 = arith.constant 0 : index
    %268 = vector.load %arg9[%c1_146, %267, %c0_147] : memref<3x64x32xf32, #tpu.memory_space<vmem>>, vector<1x8x32xf32>
    %269 = vector.shape_cast %268 : vector<1x8x32xf32> to vector<8x32xf32>
    %c2_148 = arith.constant 2 : index
    %270 = arith.index_cast %263 : i32 to index
    %c0_149 = arith.constant 0 : index
    %271 = vector.load %arg9[%c2_148, %270, %c0_149] : memref<3x64x32xf32, #tpu.memory_space<vmem>>, vector<1x8x32xf32>
    %272 = vector.shape_cast %271 : vector<1x8x32xf32> to vector<8x32xf32>
    %cst_150 = arith.constant dense<0.000000e+00> : vector<8x32xf32>
    %273 = tpu.matmul %255, %41, %cst_150 {dimension_numbers = #tpu.dot_dimension_numbers<[1], [0], [0], [1], [0, 0, 1, 1], [], []>} : vector<8x32xf32>, vector<32x32xf32>, vector<8x32xf32> -> vector<8x32xf32>
    %cst_151 = arith.constant dense<0.000000e+00> : vector<8x32xf32>
    %274 = tpu.matmul %255, %43, %cst_151 {dimension_numbers = #tpu.dot_dimension_numbers<[1], [0], [0], [1], [0, 0, 1, 1], [], []>} : vector<8x32xf32>, vector<32x32xf32>, vector<8x32xf32> -> vector<8x32xf32>
    %cst_152 = arith.constant dense<0.000000e+00> : vector<8x32xf32>
    %275 = tpu.matmul %255, %45, %cst_152 {dimension_numbers = #tpu.dot_dimension_numbers<[1], [0], [0], [1], [0, 0, 1, 1], [], []>} : vector<8x32xf32>, vector<32x32xf32>, vector<8x32xf32> -> vector<8x32xf32>
    %276 = arith.addf %266, %273 : vector<8x32xf32>
    %277 = arith.negf %276 : vector<8x32xf32>
    %278 = math.exp %277 : vector<8x32xf32>
    %cst_153 = arith.constant 1.000000e+00 : f32
    %279 = vector.broadcast %cst_153 : f32 to vector<8x32xf32>
    %280 = arith.addf %279, %278 : vector<8x32xf32>
    %281 = arith.divf %279, %280 : vector<8x32xf32>
    %282 = arith.addf %269, %274 : vector<8x32xf32>
    %283 = arith.negf %282 : vector<8x32xf32>
    %284 = math.exp %283 : vector<8x32xf32>
    %cst_154 = arith.constant 1.000000e+00 : f32
    %285 = vector.broadcast %cst_154 : f32 to vector<8x32xf32>
    %286 = arith.addf %285, %284 : vector<8x32xf32>
    %287 = arith.divf %285, %286 : vector<8x32xf32>
    %288 = arith.addf %275, %49 : vector<8x32xf32>
    %289 = arith.mulf %281, %288 : vector<8x32xf32>
    %290 = arith.addf %272, %289 : vector<8x32xf32>
    %291 = math.tanh %290 : vector<8x32xf32>
    %cst_155 = arith.constant 1.000000e+00 : f32
    %292 = vector.broadcast %cst_155 : f32 to vector<8x32xf32>
    %293 = arith.subf %292, %287 : vector<8x32xf32>
    %294 = arith.mulf %293, %291 : vector<8x32xf32>
    %295 = arith.mulf %287, %255 : vector<8x32xf32>
    %296 = arith.addf %294, %295 : vector<8x32xf32>
    %c0_156 = arith.constant 0 : index
    %297 = arith.index_cast %261 : i32 to index
    %c0_157 = arith.constant 0 : index
    %c0_158 = arith.constant 0 : index
    %298 = vector.load %arg7[%c0_156, %297, %c0_157, %c0_158] : memref<1x8x8x32xf32, #tpu.memory_space<vmem>>, vector<1x1x8x32xf32>
    %299 = vector.shape_cast %298 : vector<1x1x8x32xf32> to vector<8x32xf32>
    %300 = vector.shape_cast %296 : vector<8x32xf32> to vector<1x1x8x32xf32>
    tpu.vector_store %arg7[%c0_156, %297, %c0_157, %c0_158], %300 {strides = array<i32>} : memref<1x8x8x32xf32, #tpu.memory_space<vmem>>, vector<1x1x8x32xf32>,
    %c6_i32 = arith.constant 6 : i32
    %301 = arith.muli %52, %c6_i32 : i32
    %302 = arith.addi %50, %301 : i32
    %c8_i32_159 = arith.constant 8 : i32
    %303 = arith.muli %302, %c8_i32_159 : i32
    %304 = tpu.assume_multiple %303, 8 : i32
    %c0_160 = arith.constant 0 : index
    %305 = arith.index_cast %304 : i32 to index
    %c0_161 = arith.constant 0 : index
    %306 = vector.load %arg9[%c0_160, %305, %c0_161] : memref<3x64x32xf32, #tpu.memory_space<vmem>>, vector<1x8x32xf32>
    %307 = vector.shape_cast %306 : vector<1x8x32xf32> to vector<8x32xf32>
    %c1_162 = arith.constant 1 : index
    %308 = arith.index_cast %304 : i32 to index
    %c0_163 = arith.constant 0 : index
    %309 = vector.load %arg9[%c1_162, %308, %c0_163] : memref<3x64x32xf32, #tpu.memory_space<vmem>>, vector<1x8x32xf32>
    %310 = vector.shape_cast %309 : vector<1x8x32xf32> to vector<8x32xf32>
    %c2_164 = arith.constant 2 : index
    %311 = arith.index_cast %304 : i32 to index
    %c0_165 = arith.constant 0 : index
    %312 = vector.load %arg9[%c2_164, %311, %c0_165] : memref<3x64x32xf32, #tpu.memory_space<vmem>>, vector<1x8x32xf32>
    %313 = vector.shape_cast %312 : vector<1x8x32xf32> to vector<8x32xf32>
    %cst_166 = arith.constant dense<0.000000e+00> : vector<8x32xf32>
    %314 = tpu.matmul %296, %41, %cst_166 {dimension_numbers = #tpu.dot_dimension_numbers<[1], [0], [0], [1], [0, 0, 1, 1], [], []>} : vector<8x32xf32>, vector<32x32xf32>, vector<8x32xf32> -> vector<8x32xf32>
    %cst_167 = arith.constant dense<0.000000e+00> : vector<8x32xf32>
    %315 = tpu.matmul %296, %43, %cst_167 {dimension_numbers = #tpu.dot_dimension_numbers<[1], [0], [0], [1], [0, 0, 1, 1], [], []>} : vector<8x32xf32>, vector<32x32xf32>, vector<8x32xf32> -> vector<8x32xf32>
    %cst_168 = arith.constant dense<0.000000e+00> : vector<8x32xf32>
    %316 = tpu.matmul %296, %45, %cst_168 {dimension_numbers = #tpu.dot_dimension_numbers<[1], [0], [0], [1], [0, 0, 1, 1], [], []>} : vector<8x32xf32>, vector<32x32xf32>, vector<8x32xf32> -> vector<8x32xf32>
    %317 = arith.addf %307, %314 : vector<8x32xf32>
    %318 = arith.negf %317 : vector<8x32xf32>
    %319 = math.exp %318 : vector<8x32xf32>
    %cst_169 = arith.constant 1.000000e+00 : f32
    %320 = vector.broadcast %cst_169 : f32 to vector<8x32xf32>
    %321 = arith.addf %320, %319 : vector<8x32xf32>
    %322 = arith.divf %320, %321 : vector<8x32xf32>
    %323 = arith.addf %310, %315 : vector<8x32xf32>
    %324 = arith.negf %323 : vector<8x32xf32>
    %325 = math.exp %324 : vector<8x32xf32>
    %cst_170 = arith.constant 1.000000e+00 : f32
    %326 = vector.broadcast %cst_170 : f32 to vector<8x32xf32>
    %327 = arith.addf %326, %325 : vector<8x32xf32>
    %328 = arith.divf %326, %327 : vector<8x32xf32>
    %329 = arith.addf %316, %49 : vector<8x32xf32>
    %330 = arith.mulf %322, %329 : vector<8x32xf32>
    %331 = arith.addf %313, %330 : vector<8x32xf32>
    %332 = math.tanh %331 : vector<8x32xf32>
    %cst_171 = arith.constant 1.000000e+00 : f32
    %333 = vector.broadcast %cst_171 : f32 to vector<8x32xf32>
    %334 = arith.subf %333, %328 : vector<8x32xf32>
    %335 = arith.mulf %334, %332 : vector<8x32xf32>
    %336 = arith.mulf %328, %296 : vector<8x32xf32>
    %337 = arith.addf %335, %336 : vector<8x32xf32>
    %c0_172 = arith.constant 0 : index
    %338 = arith.index_cast %302 : i32 to index
    %c0_173 = arith.constant 0 : index
    %c0_174 = arith.constant 0 : index
    %339 = vector.load %arg7[%c0_172, %338, %c0_173, %c0_174] : memref<1x8x8x32xf32, #tpu.memory_space<vmem>>, vector<1x1x8x32xf32>
    %340 = vector.shape_cast %339 : vector<1x1x8x32xf32> to vector<8x32xf32>
    %341 = vector.shape_cast %337 : vector<8x32xf32> to vector<1x1x8x32xf32>
    tpu.vector_store %arg7[%c0_172, %338, %c0_173, %c0_174], %341 {strides = array<i32>} : memref<1x8x8x32xf32, #tpu.memory_space<vmem>>, vector<1x1x8x32xf32>,
    %c7_i32_175 = arith.constant 7 : i32
    %342 = arith.muli %52, %c7_i32_175 : i32
    %343 = arith.addi %50, %342 : i32
    %c8_i32_176 = arith.constant 8 : i32
    %344 = arith.muli %343, %c8_i32_176 : i32
    %345 = tpu.assume_multiple %344, 8 : i32
    %c0_177 = arith.constant 0 : index
    %346 = arith.index_cast %345 : i32 to index
    %c0_178 = arith.constant 0 : index
    %347 = vector.load %arg9[%c0_177, %346, %c0_178] : memref<3x64x32xf32, #tpu.memory_space<vmem>>, vector<1x8x32xf32>
    %348 = vector.shape_cast %347 : vector<1x8x32xf32> to vector<8x32xf32>
    %c1_179 = arith.constant 1 : index
    %349 = arith.index_cast %345 : i32 to index
    %c0_180 = arith.constant 0 : index
    %350 = vector.load %arg9[%c1_179, %349, %c0_180] : memref<3x64x32xf32, #tpu.memory_space<vmem>>, vector<1x8x32xf32>
    %351 = vector.shape_cast %350 : vector<1x8x32xf32> to vector<8x32xf32>
    %c2_181 = arith.constant 2 : index
    %352 = arith.index_cast %345 : i32 to index
    %c0_182 = arith.constant 0 : index
    %353 = vector.load %arg9[%c2_181, %352, %c0_182] : memref<3x64x32xf32, #tpu.memory_space<vmem>>, vector<1x8x32xf32>
    %354 = vector.shape_cast %353 : vector<1x8x32xf32> to vector<8x32xf32>
    %cst_183 = arith.constant dense<0.000000e+00> : vector<8x32xf32>
    %355 = tpu.matmul %337, %41, %cst_183 {dimension_numbers = #tpu.dot_dimension_numbers<[1], [0], [0], [1], [0, 0, 1, 1], [], []>} : vector<8x32xf32>, vector<32x32xf32>, vector<8x32xf32> -> vector<8x32xf32>
    %cst_184 = arith.constant dense<0.000000e+00> : vector<8x32xf32>
    %356 = tpu.matmul %337, %43, %cst_184 {dimension_numbers = #tpu.dot_dimension_numbers<[1], [0], [0], [1], [0, 0, 1, 1], [], []>} : vector<8x32xf32>, vector<32x32xf32>, vector<8x32xf32> -> vector<8x32xf32>
    %cst_185 = arith.constant dense<0.000000e+00> : vector<8x32xf32>
    %357 = tpu.matmul %337, %45, %cst_185 {dimension_numbers = #tpu.dot_dimension_numbers<[1], [0], [0], [1], [0, 0, 1, 1], [], []>} : vector<8x32xf32>, vector<32x32xf32>, vector<8x32xf32> -> vector<8x32xf32>
    %358 = arith.addf %348, %355 : vector<8x32xf32>
    %359 = arith.negf %358 : vector<8x32xf32>
    %360 = math.exp %359 : vector<8x32xf32>
    %cst_186 = arith.constant 1.000000e+00 : f32
    %361 = vector.broadcast %cst_186 : f32 to vector<8x32xf32>
    %362 = arith.addf %361, %360 : vector<8x32xf32>
    %363 = arith.divf %361, %362 : vector<8x32xf32>
    %364 = arith.addf %351, %356 : vector<8x32xf32>
    %365 = arith.negf %364 : vector<8x32xf32>
    %366 = math.exp %365 : vector<8x32xf32>
    %cst_187 = arith.constant 1.000000e+00 : f32
    %367 = vector.broadcast %cst_187 : f32 to vector<8x32xf32>
    %368 = arith.addf %367, %366 : vector<8x32xf32>
    %369 = arith.divf %367, %368 : vector<8x32xf32>
    %370 = arith.addf %357, %49 : vector<8x32xf32>
    %371 = arith.mulf %363, %370 : vector<8x32xf32>
    %372 = arith.addf %354, %371 : vector<8x32xf32>
    %373 = math.tanh %372 : vector<8x32xf32>
    %cst_188 = arith.constant 1.000000e+00 : f32
    %374 = vector.broadcast %cst_188 : f32 to vector<8x32xf32>
    %375 = arith.subf %374, %369 : vector<8x32xf32>
    %376 = arith.mulf %375, %373 : vector<8x32xf32>
    %377 = arith.mulf %369, %337 : vector<8x32xf32>
    %378 = arith.addf %376, %377 : vector<8x32xf32>
    %c0_189 = arith.constant 0 : index
    %379 = arith.index_cast %343 : i32 to index
    %c0_190 = arith.constant 0 : index
    %c0_191 = arith.constant 0 : index
    %380 = vector.load %arg7[%c0_189, %379, %c0_190, %c0_191] : memref<1x8x8x32xf32, #tpu.memory_space<vmem>>, vector<1x1x8x32xf32>
    %381 = vector.shape_cast %380 : vector<1x1x8x32xf32> to vector<8x32xf32>
    %382 = vector.shape_cast %378 : vector<8x32xf32> to vector<1x1x8x32xf32>
    tpu.vector_store %arg7[%c0_189, %379, %c0_190, %c0_191], %382 {strides = array<i32>} : memref<1x8x8x32xf32, #tpu.memory_space<vmem>>, vector<1x1x8x32xf32>,
    %c8_i32_192 = arith.constant 8 : i32
    %c0_193 = arith.constant 0 : index
    %c0_194 = arith.constant 0 : index
    %c0_195 = arith.constant 0 : index
    %383 = vector.load %arg8[%c0_193, %c0_194, %c0_195] : memref<1x8x32xf32, #tpu.memory_space<vmem>>, vector<1x8x32xf32>
    %384 = vector.shape_cast %383 : vector<1x8x32xf32> to vector<8x32xf32>
    %385 = vector.shape_cast %378 : vector<8x32xf32> to vector<1x8x32xf32>
    tpu.vector_store %arg8[%c0_193, %c0_194, %c0_195], %385 {strides = array<i32>} : memref<1x8x32xf32, #tpu.memory_space<vmem>>, vector<1x8x32xf32>,
    return
  }
  func.func @transform_0(%arg0: i32) -> (i32, i32, i32) {
    %c0_i32 = arith.constant 0 : i32
    %c0_i32_0 = arith.constant 0 : i32
    %c0_i32_1 = arith.constant 0 : i32
    %c0_i32_2 = arith.constant 0 : i32
    return %c0_i32, %c0_i32_0, %c0_i32_1 : i32, i32, i32
  }
  func.func @transform_1(%arg0: i32) -> (i32, i32, i32, i32) {
    %c0_i32 = arith.constant 0 : i32
    %c0_i32_0 = arith.constant 0 : i32
    %c0_i32_1 = arith.constant 0 : i32
    %c0_i32_2 = arith.constant 0 : i32
    return %arg0, %c0_i32, %c0_i32_0, %c0_i32_1 : i32, i32, i32, i32
  }
  func.func @transform_2(%arg0: i32) -> (i32, i32, i32, i32) {
    %c0_i32 = arith.constant 0 : i32
    %c0_i32_0 = arith.constant 0 : i32
    %c0_i32_1 = arith.constant 0 : i32
    %c0_i32_2 = arith.constant 0 : i32
    return %arg0, %c0_i32, %c0_i32_0, %c0_i32_1 : i32, i32, i32, i32
  }
  func.func @transform_3(%arg0: i32) -> (i32, i32, i32, i32) {
    %c0_i32 = arith.constant 0 : i32
    %c0_i32_0 = arith.constant 0 : i32
    %c0_i32_1 = arith.constant 0 : i32
    %c0_i32_2 = arith.constant 0 : i32
    return %arg0, %c0_i32, %c0_i32_0, %c0_i32_1 : i32, i32, i32, i32
  }
  func.func @transform_4(%arg0: i32) -> (i32, i32, i32, i32) {
    %c0_i32 = arith.constant 0 : i32
    %c0_i32_0 = arith.constant 0 : i32
    %c0_i32_1 = arith.constant 0 : i32
    %c0_i32_2 = arith.constant 0 : i32
    return %arg0, %c0_i32, %c0_i32_0, %c0_i32_1 : i32, i32, i32, i32
  }
  func.func @transform_5(%arg0: i32) -> (i32, i32, i32) {
    %c0_i32 = arith.constant 0 : i32
    %c0_i32_0 = arith.constant 0 : i32
    %c0_i32_1 = arith.constant 0 : i32
    return %arg0, %c0_i32, %c0_i32_0 : i32, i32, i32
  }
  func.func @transform_6(%arg0: i32) -> (i32, i32, i32, i32) {
    %c0_i32 = arith.constant 0 : i32
    %c0_i32_0 = arith.constant 0 : i32
    %c0_i32_1 = arith.constant 0 : i32
    %c0_i32_2 = arith.constant 0 : i32
    return %arg0, %c0_i32, %c0_i32_0, %c0_i32_1 : i32, i32, i32, i32
  }
  func.func @transform_7(%arg0: i32) -> (i32, i32, i32) {
    %c0_i32 = arith.constant 0 : i32
    %c0_i32_0 = arith.constant 0 : i32
    %c0_i32_1 = arith.constant 0 : i32
    return %arg0, %c0_i32, %c0_i32_0 : i32, i32, i32
  }
}

</mosaic_0001>

<llo_original>
// kernel: encoder_rnn_forward.1
$region0: #{encoder_rnn_forward.1}
  #allocation0 [shape = 'u32[]', space=smem, size = 0x4, offset = 0x4, fixed_abs, tag = 'smem constant byte address 0x4 - core index']
  #allocation1 [shape = 'u32[144,128]{1,0:T(1,128)}', space=vmem, size = 0x12000, scoped, tag = 'internal scratch']
  #allocation2 [shape = 'f32[3,64,32]{2,1,0:T(8,128)}', space=vmem, size = 0x18000, scoped, tag = 'scratch operand']
  %s0 = inlined_call_operand.vmem [shape: f32[8,8,32], index: 0, kind: input, shape index: {}]
  %s1 = inlined_call_operand.vmem [shape: f32[2,3,32,32], index: 1, kind: input, shape index: {}]
  %s2 = inlined_call_operand.hbm [shape: f32[2,3,32,32], index: 2, kind: input, shape index: {}]
  %s3 = inlined_call_operand.vmem [shape: f32[2,3,1,32], index: 3, kind: input, shape index: {}]
  %s4 = inlined_call_operand.vmem [shape: f32[2,3,1,32], index: 4, kind: input, shape index: {}]
  %s5 = inlined_call_operand.vmem [shape: f32[2,8,32], index: 5, kind: input, shape index: {}]
  %s6 = inlined_call_operand.vmem [shape: f32[2,8,8,32], index: 6, kind: output, shape index: {0}]
  %s7 = inlined_call_operand.vmem [shape: f32[2,8,32], index: 7, kind: output, shape index: {1}]
  %8 = xla_tuple %s6, %s7
  %s9 = sld [smem:[#allocation0]]
  $region69: #{encoder_rnn_forward.1} parent=0
    _
  %s11 = ssub.s32 1, %s9
  %s12 = scalar_select 0, %s11, %s9
  $region1: #{encoder_rnn_forward.1} parent=0
    #allocation3 [shape = 'u8[98304]{0}', space=vmem, size = 0x18000, scoped, tag = 'input window, operand 2']
    #allocation4 [shape = 's32[2]{0}', space=sflag, size = 0x8, scoped, tag = 'scoped memory for encoder_rnn_forward.1']
    %13 = vsyncpa [#allocation4], 0
    %s14 = scalar_lea.sflag [#allocation4], 1
    %15 = vsyncpa %s14, 0
    loop: start=0, step=1, limit=4
    $region2: #{encoder_rnn_forward.1} parent=1 // loop_pre_header
      _
    $region3: #{encoder_rnn_forward.1} parent=1 // loop_header
      %s17 = sphi 0, %s21
      %p18 = scmp.ge.s32.totalorder %s17, 4
      %s25 = sphi 0, %s25
      %s27 = sphi 0, %s25
      %s28 = sphi 0, %s27
      %s42 = sphi 0, %s28
      %s48 = sphi 0, %s50
      %s51 = sphi 0, %s48
      %s52 = sphi 0, %s51
      %s68 = sphi 0, %s52
      %s74 = sphi 0, %s76
      %s77 = sphi 0, %s74
      %s78 = sphi 0, %s77
      %s94 = sphi 0, %s78
      %s100 = sphi 0, %s102
      %s103 = sphi 0, %s100
      %s104 = sphi 0, %s103
      %s120 = sphi 0, %s104
      %s126 = sphi 0, %s128
      %s129 = sphi 0, %s126
      %s130 = sphi 0, %s129
      %s146 = sphi 0, %s130
      %s152 = sphi 0, %s154
      %s155 = sphi 0, %s152
      %s156 = sphi 0, %s155
      %s172 = sphi 0, %s156
      %s178 = sphi 0, %s180
      %s181 = sphi 0, %s178
      %s182 = sphi 0, %s181
      %s198 = sphi 0, %s182
      %s204 = sphi 0, %s206
      %s207 = sphi 0, %s204
      %s208 = sphi 0, %s207
      %s224 = sphi 0, %s208
    $region4: #{encoder_rnn_forward.1} parent=1 // loop_header_branch
      %20 = sbr.rel (%p18) target = $region8
    $region5: #{encoder_rnn_forward.1} parent=1 // loop_body
      %s22 = ssub.s32 %s17, 1
      %s23 = ssub.s32 %s17, 2
      %s24 = sadd.s32 %s17, 1
      %s26 = sadd.s32 %s25, 1
      %p29 = scmp.eq.s32.totalorder %s17, 1
      %p30 = scmp.ne.s32.totalorder %s25, %s27
      %p31 = scmp.eq.s32.totalorder %s17, 0
      %p32 = por %p30, %p31
      %p33 = scmp.ne.s32.totalorder %s25, %s27
      %p34 = scmp.eq.s32.totalorder %s22, 1
      %p35 = por %p33, %p34
      %p36 = scmp.ne.s32.totalorder %s27, %s28
      %p37 = scmp.eq.s32.totalorder %s22, 0
      %p38 = por %p36, %p37
      %p39 = scmp.ne.s32.totalorder %s27, %s28
      %p40 = scmp.eq.s32.totalorder %s23, 1
      %p41 = por %p39, %p40
      %p43 = scmp.ne.s32.totalorder %s28, %s42
      %p44 = scmp.eq.s32.totalorder %s23, 0
      %p45 = por %p43, %p44
      %s46 = ssub.s32 %s17, %s24
      %p47 = scmp.eq.s32.totalorder %s46, 0
      %s49 = sadd.s32 %s48, 1
      %s50 = scalar_select %p47, %s48, %s49
      %p53 = pneg %p47
      %p54 = scmp.eq.s32.totalorder %s17, 1
      %p55 = por %p53, %p54
      %p56 = scmp.ne.s32.totalorder %s48, %s51
      %p57 = scmp.eq.s32.totalorder %s17, 0
      %p58 = por %p56, %p57
      %p59 = scmp.ne.s32.totalorder %s48, %s51
      %p60 = scmp.eq.s32.totalorder %s22, 1
      %p61 = por %p59, %p60
      %p62 = scmp.ne.s32.totalorder %s51, %s52
      %p63 = scmp.eq.s32.totalorder %s22, 0
      %p64 = por %p62, %p63
      %p65 = scmp.ne.s32.totalorder %s51, %s52
      %p66 = scmp.eq.s32.totalorder %s23, 1
      %p67 = por %p65, %p66
      %p69 = scmp.ne.s32.totalorder %s52, %s68
      %p70 = scmp.eq.s32.totalorder %s23, 0
      %p71 = por %p69, %p70
      %s72 = ssub.s32 %s17, %s24
      %p73 = scmp.eq.s32.totalorder %s72, 0
      %s75 = sadd.s32 %s74, 1
      %s76 = scalar_select %p73, %s74, %s75
      %p79 = pneg %p73
      %p80 = scmp.eq.s32.totalorder %s17, 1
      %p81 = por %p79, %p80
      %p82 = scmp.ne.s32.totalorder %s74, %s77
      %p83 = scmp.eq.s32.totalorder %s17, 0
      %p84 = por %p82, %p83
      %p85 = scmp.ne.s32.totalorder %s74, %s77
      %p86 = scmp.eq.s32.totalorder %s22, 1
      %p87 = por %p85, %p86
      %p88 = scmp.ne.s32.totalorder %s77, %s78
      %p89 = scmp.eq.s32.totalorder %s22, 0
      %p90 = por %p88, %p89
      %p91 = scmp.ne.s32.totalorder %s77, %s78
      %p92 = scmp.eq.s32.totalorder %s23, 1
      %p93 = por %p91, %p92
      %p95 = scmp.ne.s32.totalorder %s78, %s94
      %p96 = scmp.eq.s32.totalorder %s23, 0
      %p97 = por %p95, %p96
      %s98 = ssub.s32 %s17, %s24
      %p99 = scmp.eq.s32.totalorder %s98, 0
      %s101 = sadd.s32 %s100, 1
      %s102 = scalar_select %p99, %s100, %s101
      %p105 = pneg %p99
      %p106 = scmp.eq.s32.totalorder %s17, 1
      %p107 = por %p105, %p106
      %p108 = scmp.ne.s32.totalorder %s100, %s103
      %p109 = scmp.eq.s32.totalorder %s17, 0
      %p110 = por %p108, %p109
      %p111 = scmp.ne.s32.totalorder %s100, %s103
      %p112 = scmp.eq.s32.totalorder %s22, 1
      %p113 = por %p111, %p112
      %p114 = scmp.ne.s32.totalorder %s103, %s104
      %p115 = scmp.eq.s32.totalorder %s22, 0
      %p116 = por %p114, %p115
      %p117 = scmp.ne.s32.totalorder %s103, %s104
      %p118 = scmp.eq.s32.totalorder %s23, 1
      %p119 = por %p117, %p118
      %p121 = scmp.ne.s32.totalorder %s104, %s120
      %p122 = scmp.eq.s32.totalorder %s23, 0
      %p123 = por %p121, %p122
      %s124 = ssub.s32 %s17, %s24
      %p125 = scmp.eq.s32.totalorder %s124, 0
      %s127 = sadd.s32 %s126, 1
      %s128 = scalar_select %p125, %s126, %s127
      %p131 = pneg %p125
      %p132 = scmp.eq.s32.totalorder %s17, 1
      %p133 = por %p131, %p132
      %p134 = scmp.ne.s32.totalorder %s126, %s129
      %p135 = scmp.eq.s32.totalorder %s17, 0
      %p136 = por %p134, %p135
      %p137 = scmp.ne.s32.totalorder %s126, %s129
      %p138 = scmp.eq.s32.totalorder %s22, 1
      %p139 = por %p137, %p138
      %p140 = scmp.ne.s32.totalorder %s129, %s130
      %p141 = scmp.eq.s32.totalorder %s22, 0
      %p142 = por %p140, %p141
      %p143 = scmp.ne.s32.totalorder %s129, %s130
      %p144 = scmp.eq.s32.totalorder %s23, 1
      %p145 = por %p143, %p144
      %p147 = scmp.ne.s32.totalorder %s130, %s146
      %p148 = scmp.eq.s32.totalorder %s23, 0
      %p149 = por %p147, %p148
      %s150 = ssub.s32 %s17, %s24
      %p151 = scmp.eq.s32.totalorder %s150, 0
      %s153 = sadd.s32 %s152, 1
      %s154 = scalar_select %p151, %s152, %s153
      %p157 = pneg %p151
      %p158 = scmp.eq.s32.totalorder %s17, 1
      %p159 = por %p157, %p158
      %p160 = scmp.ne.s32.totalorder %s152, %s155
      %p161 = scmp.eq.s32.totalorder %s17, 0
      %p162 = por %p160, %p161
      %p163 = scmp.ne.s32.totalorder %s152, %s155
      %p164 = scmp.eq.s32.totalorder %s22, 1
      %p165 = por %p163, %p164
      %p166 = scmp.ne.s32.totalorder %s155, %s156
      %p167 = scmp.eq.s32.totalorder %s22, 0
      %p168 = por %p166, %p167
      %p169 = scmp.ne.s32.totalorder %s155, %s156
      %p170 = scmp.eq.s32.totalorder %s23, 1
      %p171 = por %p169, %p170
      %p173 = scmp.ne.s32.totalorder %s156, %s172
      %p174 = scmp.eq.s32.totalorder %s23, 0
      %p175 = por %p173, %p174
      %s176 = ssub.s32 %s17, %s24
      %p177 = scmp.eq.s32.totalorder %s176, 0
      %s179 = sadd.s32 %s178, 1
      %s180 = scalar_select %p177, %s178, %s179
      %p183 = pneg %p177
      %p184 = scmp.eq.s32.totalorder %s17, 1
      %p185 = por %p183, %p184
      %p186 = scmp.ne.s32.totalorder %s178, %s181
      %p187 = scmp.eq.s32.totalorder %s17, 0
      %p188 = por %p186, %p187
      %p189 = scmp.ne.s32.totalorder %s178, %s181
      %p190 = scmp.eq.s32.totalorder %s22, 1
      %p191 = por %p189, %p190
      %p192 = scmp.ne.s32.totalorder %s181, %s182
      %p193 = scmp.eq.s32.totalorder %s22, 0
      %p194 = por %p192, %p193
      %p195 = scmp.ne.s32.totalorder %s181, %s182
      %p196 = scmp.eq.s32.totalorder %s23, 1
      %p197 = por %p195, %p196
      %p199 = scmp.ne.s32.totalorder %s182, %s198
      %p200 = scmp.eq.s32.totalorder %s23, 0
      %p201 = por %p199, %p200
      %s202 = ssub.s32 %s17, %s24
      %p203 = scmp.eq.s32.totalorder %s202, 0
      %s205 = sadd.s32 %s204, 1
      %s206 = scalar_select %p203, %s204, %s205
      %p209 = pneg %p203
      %p210 = scmp.eq.s32.totalorder %s17, 1
      %p211 = por %p209, %p210
      %p212 = scmp.ne.s32.totalorder %s204, %s207
      %p213 = scmp.eq.s32.totalorder %s17, 0
      %p214 = por %p212, %p213
      %p215 = scmp.ne.s32.totalorder %s204, %s207
      %p216 = scmp.eq.s32.totalorder %s22, 1
      %p217 = por %p215, %p216
      %p218 = scmp.ne.s32.totalorder %s207, %s208
      %p219 = scmp.eq.s32.totalorder %s22, 0
      %p220 = por %p218, %p219
      %p221 = scmp.ne.s32.totalorder %s207, %s208
      %p222 = scmp.eq.s32.totalorder %s23, 1
      %p223 = por %p221, %p222
      %p225 = scmp.ne.s32.totalorder %s208, %s224
      %p226 = scmp.eq.s32.totalorder %s23, 0
      %p227 = por %p225, %p226
      %p228 = scmp.le.s32.totalorder 1, %s17
      %p229 = scmp.lt.s32.totalorder %s17, 3
      %p230 = pnand %p228, %p229
      %p231 = pneg %p230
      // Predicated region
      $region9: #{encoder_rnn_forward.1} parent=5 // pred_check
        _
      $region10: #{encoder_rnn_forward.1} parent=5 // pred_check_branch
        %233 = sbr.rel (%p230) target = $region12
      $region11: #{encoder_rnn_forward.1} parent=5 // pred_region
        %s234 = ssub.s32 %s17, 1
        // Predicated region
        $region13: #{encoder_rnn_forward.1} parent=11 // pred_check
          %p235 = pneg %p38
        $region14: #{encoder_rnn_forward.1} parent=11 // pred_check_branch
          %237 = sbr.rel (%p235) target = $region16
        $region15: #{encoder_rnn_forward.1} parent=11 // pred_region
          _
        $region16: #{encoder_rnn_forward.1} parent=11 // pred_fallthru
          _
      $region12: #{encoder_rnn_forward.1} parent=5 // pred_fallthru
        _
      %p238 = scmp.lt.s32.totalorder %s17, 2
      // Predicated region
      $region17: #{encoder_rnn_forward.1} parent=5 // pred_check
        %p239 = pneg %p238
      $region18: #{encoder_rnn_forward.1} parent=5 // pred_check_branch
        %241 = sbr.rel (%p239) target = $region20
      $region19: #{encoder_rnn_forward.1} parent=5 // pred_region
        // Predicated region
        $region21: #{encoder_rnn_forward.1} parent=19 // pred_check
          %p242 = pneg %p58
        $region22: #{encoder_rnn_forward.1} parent=19 // pred_check_branch
          %244 = sbr.rel (%p242) target = $region24
        $region23: #{encoder_rnn_forward.1} parent=19 // pred_region
          %p245 = scmp.lt.s32.totalorder %s17, 1
          %s246 = scalar_select %p245, %s17, 1
          %s247 = smul.addr %s246, 12
          %s248 = smul.addr %s247, 8
          %s249 = scalar_lea.vmem %s1, %s248
        $region24: #{encoder_rnn_forward.1} parent=19 // pred_fallthru
          _
        // Predicated region
        $region25: #{encoder_rnn_forward.1} parent=19 // pred_check
          %p250 = pneg %p84
        $region26: #{encoder_rnn_forward.1} parent=19 // pred_check_branch
          %252 = sbr.rel (%p250) target = $region28
        $region27: #{encoder_rnn_forward.1} parent=19 // pred_region
          %s253 = sand.u32 %s74, 1
          %s254 = scalar_lea.sflag [#allocation4], %s253
          %s255 = sand.u32 %s74, 1
          %s256 = smul.addr %s255, 96
          %s257 = scalar_lea.vmem [#allocation3], %s256
          %s259 = ssub.s32 1536, 1536
          %260 = vsyncadd %s254, %s259
          %s261 = smul.addr %s17, 12
          %s262 = smul.addr %s261, 128
          %s263 = scalar_lea.hbm %s2, %s262
          %s264 = sshll.u32 %s257, 4
          %s265 = int_to_ptr.vmem [resolvable:$true] %s264
          %270 = dma.hbm_to_vmem [thread:$0]  %s263, 1536, %s265, %s254, 128, 128, 8
        $region28: #{encoder_rnn_forward.1} parent=19 // pred_fallthru
          _
        // Predicated region
        $region29: #{encoder_rnn_forward.1} parent=19 // pred_check
          %p271 = pneg %p110
        $region30: #{encoder_rnn_forward.1} parent=19 // pred_check_branch
          %273 = sbr.rel (%p271) target = $region32
        $region31: #{encoder_rnn_forward.1} parent=19 // pred_region
          %p274 = scmp.lt.s32.totalorder %s17, 1
          %s275 = scalar_select %p274, %s17, 1
          %s276 = smul.addr %s275, 3
          %s277 = scalar_lea.vmem %s3, %s276
        $region32: #{encoder_rnn_forward.1} parent=19 // pred_fallthru
          _
        // Predicated region
        $region33: #{encoder_rnn_forward.1} parent=19 // pred_check
          %p278 = pneg %p136
        $region34: #{encoder_rnn_forward.1} parent=19 // pred_check_branch
          %280 = sbr.rel (%p278) target = $region36
        $region35: #{encoder_rnn_forward.1} parent=19 // pred_region
          %p281 = scmp.lt.s32.totalorder %s17, 1
          %s282 = scalar_select %p281, %s17, 1
          %s283 = smul.addr %s282, 3
          %s284 = scalar_lea.vmem %s4, %s283
        $region36: #{encoder_rnn_forward.1} parent=19 // pred_fallthru
          _
        // Predicated region
        $region37: #{encoder_rnn_forward.1} parent=19 // pred_check
          %p285 = pneg %p162
        $region38: #{encoder_rnn_forward.1} parent=19 // pred_check_branch
          %287 = sbr.rel (%p285) target = $region40
        $region39: #{encoder_rnn_forward.1} parent=19 // pred_region
          %p288 = scmp.lt.s32.totalorder %s17, 1
          %s289 = scalar_select %p288, %s17, 1
          %s290 = smul.addr %s289, 8
          %s291 = scalar_lea.vmem %s5, %s290
        $region40: #{encoder_rnn_forward.1} parent=19 // pred_fallthru
          _
      $region20: #{encoder_rnn_forward.1} parent=5 // pred_fallthru
        _
      %p292 = scmp.le.s32.totalorder 1, %s17
      %p293 = scmp.lt.s32.totalorder %s17, 3
      %p294 = pnand %p292, %p293
      %p295 = pneg %p294
      // Predicated region
      $region41: #{encoder_rnn_forward.1} parent=5 // pred_check
        _
      $region42: #{encoder_rnn_forward.1} parent=5 // pred_check_branch
        %297 = sbr.rel (%p294) target = $region44
      $region43: #{encoder_rnn_forward.1} parent=5 // pred_region
        %s298 = ssub.s32 %s17, 1
        %s299 = sand.u32 %s77, 1
        %s300 = scalar_lea.sflag [#allocation4], %s299
        %s301 = sand.u32 %s77, 1
        %s302 = smul.addr %s301, 96
        %s303 = scalar_lea.vmem [#allocation3], %s302
        // Predicated region
        $region45: #{encoder_rnn_forward.1} parent=43 // pred_check
          %p304 = pneg %p90
        $region46: #{encoder_rnn_forward.1} parent=43 // pred_check_branch
          %306 = sbr.rel (%p304) target = $region48
        $region47: #{encoder_rnn_forward.1} parent=43 // pred_region
          %307 = dma.done %s300, 1536
        $region48: #{encoder_rnn_forward.1} parent=43 // pred_fallthru
          _
        %p308 = pneg %p38
        %p309 = pneg %p35
        %p310 = scmp.lt.s32.totalorder %s22, 1
        %s311 = scalar_select %p310, %s22, 1
        %s312 = smul.addr %s311, 12
        %s313 = smul.addr %s312, 8
        %s314 = scalar_lea.vmem %s1, %s313
        %p315 = pneg %p64
        %p316 = pneg %p61
        %s317 = sand.u32 %s77, 1
        %s318 = scalar_lea.sflag [#allocation4], %s317
        %s319 = sand.u32 %s77, 1
        %s320 = smul.addr %s319, 96
        %s321 = scalar_lea.vmem [#allocation3], %s320
        %p322 = pneg %p90
        %p323 = pneg %p87
        %p324 = scmp.lt.s32.totalorder %s22, 1
        %s325 = scalar_select %p324, %s22, 1
        %s326 = smul.addr %s325, 3
        %s327 = scalar_lea.vmem %s3, %s326
        %p328 = pneg %p116
        %p329 = pneg %p113
        %p330 = scmp.lt.s32.totalorder %s22, 1
        %s331 = scalar_select %p330, %s22, 1
        %s332 = smul.addr %s331, 3
        %s333 = scalar_lea.vmem %s4, %s332
        %p334 = pneg %p142
        %p335 = pneg %p139
        %p336 = scmp.lt.s32.totalorder %s22, 1
        %s337 = scalar_select %p336, %s22, 1
        %s338 = smul.addr %s337, 8
        %s339 = scalar_lea.vmem %s5, %s338
        %p340 = pneg %p168
        %p341 = pneg %p165
        %p342 = pneg %p194
        %p343 = pneg %p191
        %p344 = scmp.lt.s32.totalorder %s22, 1
        %s345 = scalar_select %p344, %s22, 1
        %s346 = smul.addr %s345, 8
        %s347 = smul.addr %s346, 8
        %s348 = scalar_lea.vmem %s6, %s347
        %p349 = pneg %p220
        %p350 = pneg %p217
        %p351 = scmp.lt.s32.totalorder %s22, 1
        %s352 = scalar_select %p351, %s22, 1
        %s353 = smul.addr %s352, 8
        %s354 = scalar_lea.vmem %s7, %s353
        %p355 = scmp.lt.s32.totalorder %s22, 1
        %s356 = scalar_select %p355, %s22, 1
        %s357 = smul.addr %s356, 12
        %s358 = smul.addr %s357, 8
        %s359 = scalar_lea.vmem %s1, %s358
        %p360 = scmp.lt.s32.totalorder %s22, 1
        %s361 = scalar_select %p360, %s22, 1
        %s362 = smul.addr %s361, 3
        %s363 = scalar_lea.vmem %s3, %s362
        %p364 = scmp.lt.s32.totalorder %s22, 1
        %s365 = scalar_select %p364, %s22, 1
        %s366 = smul.addr %s365, 3
        %s367 = scalar_lea.vmem %s4, %s366
        %p368 = scmp.lt.s32.totalorder %s22, 1
        %s369 = scalar_select %p368, %s22, 1
        %s370 = smul.addr %s369, 8
        %s371 = scalar_lea.vmem %s5, %s370
        %p372 = scmp.lt.s32.totalorder %s22, 1
        %s373 = scalar_select %p372, %s22, 1
        %s374 = smul.addr %s373, 8
        %s375 = smul.addr %s374, 8
        %s376 = scalar_lea.vmem %s6, %s375
        %p377 = scmp.lt.s32.totalorder %s22, 1
        %s378 = scalar_select %p377, %s22, 1
        %s379 = smul.addr %s378, 8
        %s380 = scalar_lea.vmem %s7, %s379
        %v381 = vld [vmem:[%s0] sm:$0xff]
        %v382 = vld [vmem:[%s0 + $0x8] sm:$0xff]
        %v383 = vld [vmem:[%s0 + $0x10] sm:$0xff]
        %v384 = vld [vmem:[%s0 + $0x18] sm:$0xff]
        %v385 = vld [vmem:[%s0 + $0x20] sm:$0xff]
        %v386 = vld [vmem:[%s0 + $0x28] sm:$0xff]
        %v387 = vld [vmem:[%s0 + $0x30] sm:$0xff]
        %v388 = vld [vmem:[%s0 + $0x38] sm:$0xff]
        %v389 = vld [vmem:[%s359] sm:$0xff]
        %v390 = vld [vmem:[%s359 + $0x8] sm:$0xff]
        %v391 = vld [vmem:[%s359 + $0x10] sm:$0xff]
        %v392 = vld [vmem:[%s359 + $0x18] sm:$0xff]
        %v393 = vld [vmem:[%s363] sm:$0x1]
        %v395 = vlaneseq
        %v396 = vshrl.u32 %v395, 7
        %v397 = vsub.s32 0, %v396
        %v398 = vrot.slane %v393, %v397
        %vm400 = vcmask 261120
        %v402 = vsel %vm400, %v381, 0
        %v405 = vsel %vm400, %v382, 0
        %v408 = vsel %vm400, %v383, 0
        %v411 = vsel %vm400, %v384, 0
        %v414 = vsel %vm400, %v385, 0
        %v417 = vsel %vm400, %v386, 0
        %v420 = vsel %vm400, %v387, 0
        %v423 = vsel %vm400, %v388, 0
        %425 = vmatprep.subr.mxu0 0.0
        %426 = vmatpush1.msra.mxu0 %v389
        %427 = vmatprep.subr.mxu0 0.0
        %428 = vmatpush1.msra.mxu0 %v390
        %429 = vmatprep.subr.mxu0 0.0
        %430 = vmatpush1.msra.mxu0 %v391
        %431 = vmatprep.subr.mxu0 0.0
        %432 = vmatpush1.msra.mxu0 %v392
        %433 = vmatprep.subr.mxu0 0.0
        %434 = vmatpush1.msra.mxu0 0.0
        %435 = vmatprep.subr.mxu0 0.0
        %436 = vmatpush1.msra.mxu0 0.0
        %437 = vmatprep.subr.mxu0 0.0
        %438 = vmatpush1.msra.mxu0 0.0
        %439 = vmatprep.subr.mxu0 0.0
        %440 = vmatpush1.msra.mxu0 0.0
        %441 = vmatprep.subr.mxu0 0.0
        %442 = vmatpush1.msra.mxu0 0.0
        %443 = vmatprep.subr.mxu0 0.0
        %444 = vmatpush1.msra.mxu0 0.0
        %445 = vmatprep.subr.mxu0 0.0
        %446 = vmatpush1.msra.mxu0 0.0
        %447 = vmatprep.subr.mxu0 0.0
        %448 = vmatpush1.msra.mxu0 0.0
        %449 = vmatprep.subr.mxu0 0.0
        %450 = vmatpush1.msra.mxu0 0.0
        %451 = vmatprep.subr.mxu0 0.0
        %452 = vmatpush1.msra.mxu0 0.0
        %453 = vmatprep.subr.mxu0 0.0
        %454 = vmatpush1.msra.mxu0 0.0
        %455 = vmatprep.subr.mxu0 0.0
        %456 = vmatpush1.msra.mxu0 0.0
        %457 = vmatprep.subr.mxu0 0.0
        %458 = vmatpush1.msra.mxu0 0.0
        %459 = vmatprep.subr.mxu0 0.0
        %460 = vmatpush1.msra.mxu0 0.0
        %461 = vmatprep.subr.mxu0 0.0
        %462 = vmatpush1.msra.mxu0 0.0
        %463 = vmatprep.subr.mxu0 0.0
        %464 = vmatpush1.msra.mxu0 0.0
        %465 = vmatprep.subr.mxu0 0.0
        %466 = vmatpush1.msra.mxu0 0.0
        %467 = vmatprep.subr.mxu0 0.0
        %468 = vmatpush1.msra.mxu0 0.0
        %469 = vmatprep.subr.mxu0 0.0
        %470 = vmatpush1.msra.mxu0 0.0
        %471 = vmatprep.subr.mxu0 0.0
        %472 = vmatpush1.msra.mxu0 0.0
        %473 = vmatprep.subr.mxu0 0.0
        %474 = vmatpush1.msra.mxu0 0.0
        %475 = vmatprep.subr.mxu0 0.0
        %476 = vmatpush1.msra.mxu0 0.0
        %477 = vmatprep.subr.mxu0 0.0
        %478 = vmatpush1.msra.mxu0 0.0
        %479 = vmatprep.subr.mxu0 0.0
        %480 = vmatpush1.msra.mxu0 0.0
        %481 = vmatprep.subr.mxu0 0.0
        %482 = vmatpush1.msra.mxu0 0.0
        %483 = vmatprep.subr.mxu0 0.0
        %484 = vmatpush1.msra.mxu0 0.0
        %485 = vmatprep.subr.mxu0 0.0
        %486 = vmatpush1.msra.mxu0 0.0
        %487 = vmatprep.subr.mxu0 0.0
        %488 = vmatpush1.msra.mxu0 0.0
        %489 = vmatprep.mubr.f32.mxu0 0.0
        %490 = vmatmul.mubr.f32.gmra.mrb[0].mxu0 %v402
        %v491 = vpop.f32.mrb[0].mxu0
        %v492 = vadd.f32 %v398, %v491
        %v493 = vpop.f32.mrb[0].mxu0
        %494 = vmatprep.mubr.f32.mxu0 0.0
        %495 = vmatmul.mubr.f32.gmra.mrb[0].mxu0 %v405
        %v496 = vpop.f32.mrb[0].mxu0
        %v497 = vadd.f32 %v398, %v496
        %v498 = vpop.f32.mrb[0].mxu0
        %499 = vmatprep.mubr.f32.mxu0 0.0
        %500 = vmatmul.mubr.f32.gmra.mrb[0].mxu0 %v408
        %v501 = vpop.f32.mrb[0].mxu0
        %v502 = vadd.f32 %v398, %v501
        %v503 = vpop.f32.mrb[0].mxu0
        %504 = vmatprep.mubr.f32.mxu0 0.0
        %505 = vmatmul.mubr.f32.gmra.mrb[0].mxu0 %v411
        %v506 = vpop.f32.mrb[0].mxu0
        %v507 = vadd.f32 %v398, %v506
        %v508 = vpop.f32.mrb[0].mxu0
        %509 = vmatprep.mubr.f32.mxu0 0.0
        %510 = vmatmul.mubr.f32.gmra.mrb[0].mxu0 %v414
        %v511 = vpop.f32.mrb[0].mxu0
        %v512 = vadd.f32 %v398, %v511
        %v513 = vpop.f32.mrb[0].mxu0
        %514 = vmatprep.mubr.f32.mxu0 0.0
        %515 = vmatmul.mubr.f32.gmra.mrb[0].mxu0 %v417
        %v516 = vpop.f32.mrb[0].mxu0
        %v517 = vadd.f32 %v398, %v516
        %v518 = vpop.f32.mrb[0].mxu0
        %519 = vmatprep.mubr.f32.mxu0 0.0
        %520 = vmatmul.mubr.f32.gmra.mrb[0].mxu0 %v420
        %v521 = vpop.f32.mrb[0].mxu0
        %v522 = vadd.f32 %v398, %v521
        %v523 = vpop.f32.mrb[0].mxu0
        %524 = vmatprep.mubr.f32.mxu0 0.0
        %525 = vmatmul.mubr.f32.gmra.mrb[0].mxu0 %v423
        %v526 = vpop.f32.mrb[0].mxu0
        %v527 = vadd.f32 %v398, %v526
        %v528 = vpop.f32.mrb[0].mxu0
        %529 = vdwg.mxu0
        %v530 = vld [vmem:[%s367] sm:$0x1]
        %v532 = vlaneseq
        %v533 = vshrl.u32 %v532, 7
        %v534 = vsub.s32 0, %v533
        %v535 = vrot.slane %v530, %v534
        %v537 = vadd.f32 %v492, %v535
        %v538 = vadd.f32 %v497, %v535
        %v539 = vadd.f32 %v502, %v535
        %v540 = vadd.f32 %v507, %v535
        %v541 = vadd.f32 %v512, %v535
        %v542 = vadd.f32 %v517, %v535
        %v543 = vadd.f32 %v522, %v535
        %v544 = vadd.f32 %v527, %v535
        %545 = vst.msk [vmem:[#allocation2] sm:$0xff] %vm400, %v537
        %546 = vst.msk [vmem:[#allocation2 + $0x8] sm:$0xff] %vm400, %v538
        %547 = vst.msk [vmem:[#allocation2 + $0x10] sm:$0xff] %vm400, %v539
        %548 = vst.msk [vmem:[#allocation2 + $0x18] sm:$0xff] %vm400, %v540
        %549 = vst.msk [vmem:[#allocation2 + $0x20] sm:$0xff] %vm400, %v541
        %550 = vst.msk [vmem:[#allocation2 + $0x28] sm:$0xff] %vm400, %v542
        %551 = vst.msk [vmem:[#allocation2 + $0x30] sm:$0xff] %vm400, %v543
        %552 = vst.msk [vmem:[#allocation2 + $0x38] sm:$0xff] %vm400, %v544
        %s553 = scalar_lea.vmem %s359, 32
        %v554 = vld [vmem:[%s553] sm:$0xff]
        %v555 = vld [vmem:[%s553 + $0x8] sm:$0xff]
        %v556 = vld [vmem:[%s553 + $0x10] sm:$0xff]
        %v557 = vld [vmem:[%s553 + $0x18] sm:$0xff]
        %s558 = scalar_lea.vmem %s363, 1
        %v559 = vld [vmem:[%s558] sm:$0x1]
        %v561 = vlaneseq
        %v562 = vshrl.u32 %v561, 7
        %v563 = vsub.s32 0, %v562
        %v564 = vrot.slane %v559, %v563
        %566 = vmatprep.subr.mxu0 0.0
        %567 = vmatpush1.msra.mxu0 %v554
        %568 = vmatprep.subr.mxu0 0.0
        %569 = vmatpush1.msra.mxu0 %v555
        %570 = vmatprep.subr.mxu0 0.0
        %571 = vmatpush1.msra.mxu0 %v556
        %572 = vmatprep.subr.mxu0 0.0
        %573 = vmatpush1.msra.mxu0 %v557
        %574 = vmatprep.subr.mxu0 0.0
        %575 = vmatpush1.msra.mxu0 0.0
        %576 = vmatprep.subr.mxu0 0.0
        %577 = vmatpush1.msra.mxu0 0.0
        %578 = vmatprep.subr.mxu0 0.0
        %579 = vmatpush1.msra.mxu0 0.0
        %580 = vmatprep.subr.mxu0 0.0
        %581 = vmatpush1.msra.mxu0 0.0
        %582 = vmatprep.subr.mxu0 0.0
        %583 = vmatpush1.msra.mxu0 0.0
        %584 = vmatprep.subr.mxu0 0.0
        %585 = vmatpush1.msra.mxu0 0.0
        %586 = vmatprep.subr.mxu0 0.0
        %587 = vmatpush1.msra.mxu0 0.0
        %588 = vmatprep.subr.mxu0 0.0
        %589 = vmatpush1.msra.mxu0 0.0
        %590 = vmatprep.subr.mxu0 0.0
        %591 = vmatpush1.msra.mxu0 0.0
        %592 = vmatprep.subr.mxu0 0.0
        %593 = vmatpush1.msra.mxu0 0.0
        %594 = vmatprep.subr.mxu0 0.0
        %595 = vmatpush1.msra.mxu0 0.0
        %596 = vmatprep.subr.mxu0 0.0
        %597 = vmatpush1.msra.mxu0 0.0
        %598 = vmatprep.subr.mxu0 0.0
        %599 = vmatpush1.msra.mxu0 0.0
        %600 = vmatprep.subr.mxu0 0.0
        %601 = vmatpush1.msra.mxu0 0.0
        %602 = vmatprep.subr.mxu0 0.0
        %603 = vmatpush1.msra.mxu0 0.0
        %604 = vmatprep.subr.mxu0 0.0
        %605 = vmatpush1.msra.mxu0 0.0
        %606 = vmatprep.subr.mxu0 0.0
        %607 = vmatpush1.msra.mxu0 0.0
        %608 = vmatprep.subr.mxu0 0.0
        %609 = vmatpush1.msra.mxu0 0.0
        %610 = vmatprep.subr.mxu0 0.0
        %611 = vmatpush1.msra.mxu0 0.0
        %612 = vmatprep.subr.mxu0 0.0
        %613 = vmatpush1.msra.mxu0 0.0
        %614 = vmatprep.subr.mxu0 0.0
        %615 = vmatpush1.msra.mxu0 0.0
        %616 = vmatprep.subr.mxu0 0.0
        %617 = vmatpush1.msra.mxu0 0.0
        %618 = vmatprep.subr.mxu0 0.0
        %619 = vmatpush1.msra.mxu0 0.0
        %620 = vmatprep.subr.mxu0 0.0
        %621 = vmatpush1.msra.mxu0 0.0
        %622 = vmatprep.subr.mxu0 0.0
        %623 = vmatpush1.msra.mxu0 0.0
        %624 = vmatprep.subr.mxu0 0.0
        %625 = vmatpush1.msra.mxu0 0.0
        %626 = vmatprep.subr.mxu0 0.0
        %627 = vmatpush1.msra.mxu0 0.0
        %628 = vmatprep.subr.mxu0 0.0
        %629 = vmatpush1.msra.mxu0 0.0
        %630 = vmatprep.mubr.f32.mxu0 0.0
        %631 = vmatmul.mubr.f32.gmra.mrb[0].mxu0 %v402
        %v632 = vpop.f32.mrb[0].mxu0
        %v633 = vadd.f32 %v564, %v632
        %v634 = vpop.f32.mrb[0].mxu0
        %635 = vmatprep.mubr.f32.mxu0 0.0
        %636 = vmatmul.mubr.f32.gmra.mrb[0].mxu0 %v405
        %v637 = vpop.f32.mrb[0].mxu0
        %v638 = vadd.f32 %v564, %v637
        %v639 = vpop.f32.mrb[0].mxu0
        %640 = vmatprep.mubr.f32.mxu0 0.0
        %641 = vmatmul.mubr.f32.gmra.mrb[0].mxu0 %v408
        %v642 = vpop.f32.mrb[0].mxu0
        %v643 = vadd.f32 %v564, %v642
        %v644 = vpop.f32.mrb[0].mxu0
        %645 = vmatprep.mubr.f32.mxu0 0.0
        %646 = vmatmul.mubr.f32.gmra.mrb[0].mxu0 %v411
        %v647 = vpop.f32.mrb[0].mxu0
        %v648 = vadd.f32 %v564, %v647
        %v649 = vpop.f32.mrb[0].mxu0
        %650 = vmatprep.mubr.f32.mxu0 0.0
        %651 = vmatmul.mubr.f32.gmra.mrb[0].mxu0 %v414
        %v652 = vpop.f32.mrb[0].mxu0
        %v653 = vadd.f32 %v564, %v652
        %v654 = vpop.f32.mrb[0].mxu0
        %655 = vmatprep.mubr.f32.mxu0 0.0
        %656 = vmatmul.mubr.f32.gmra.mrb[0].mxu0 %v417
        %v657 = vpop.f32.mrb[0].mxu0
        %v658 = vadd.f32 %v564, %v657
        %v659 = vpop.f32.mrb[0].mxu0
        %660 = vmatprep.mubr.f32.mxu0 0.0
        %661 = vmatmul.mubr.f32.gmra.mrb[0].mxu0 %v420
        %v662 = vpop.f32.mrb[0].mxu0
        %v663 = vadd.f32 %v564, %v662
        %v664 = vpop.f32.mrb[0].mxu0
        %665 = vmatprep.mubr.f32.mxu0 0.0
        %666 = vmatmul.mubr.f32.gmra.mrb[0].mxu0 %v423
        %v667 = vpop.f32.mrb[0].mxu0
        %v668 = vadd.f32 %v564, %v667
        %v669 = vpop.f32.mrb[0].mxu0
        %670 = vdwg.mxu0
        %s671 = scalar_lea.vmem %s367, 1
        %v672 = vld [vmem:[%s671] sm:$0x1]
        %v674 = vlaneseq
        %v675 = vshrl.u32 %v674, 7
        %v676 = vsub.s32 0, %v675
        %v677 = vrot.slane %v672, %v676
        %v679 = vadd.f32 %v633, %v677
        %v680 = vadd.f32 %v638, %v677
        %v681 = vadd.f32 %v643, %v677
        %v682 = vadd.f32 %v648, %v677
        %v683 = vadd.f32 %v653, %v677
        %v684 = vadd.f32 %v658, %v677
        %v685 = vadd.f32 %v663, %v677
        %v686 = vadd.f32 %v668, %v677
        %s687 = scalar_lea.vmem [#allocation2], 64
        %688 = vst.msk [vmem:[%s687] sm:$0xff] %vm400, %v679
        %689 = vst.msk [vmem:[%s687 + $0x8] sm:$0xff] %vm400, %v680
        %690 = vst.msk [vmem:[%s687 + $0x10] sm:$0xff] %vm400, %v681
        %691 = vst.msk [vmem:[%s687 + $0x18] sm:$0xff] %vm400, %v682
        %692 = vst.msk [vmem:[%s687 + $0x20] sm:$0xff] %vm400, %v683
        %693 = vst.msk [vmem:[%s687 + $0x28] sm:$0xff] %vm400, %v684
        %694 = vst.msk [vmem:[%s687 + $0x30] sm:$0xff] %vm400, %v685
        %695 = vst.msk [vmem:[%s687 + $0x38] sm:$0xff] %vm400, %v686
        %s696 = scalar_lea.vmem %s359, 64
        %v697 = vld [vmem:[%s696] sm:$0xff]
        %v698 = vld [vmem:[%s696 + $0x8] sm:$0xff]
        %v699 = vld [vmem:[%s696 + $0x10] sm:$0xff]
        %v700 = vld [vmem:[%s696 + $0x18] sm:$0xff]
        %s701 = scalar_lea.vmem %s363, 2
        %v702 = vld [vmem:[%s701] sm:$0x1]
        %v704 = vlaneseq
        %v705 = vshrl.u32 %v704, 7
        %v706 = vsub.s32 0, %v705
        %v707 = vrot.slane %v702, %v706
        %709 = vmatprep.subr.mxu0 0.0
        %710 = vmatpush1.msra.mxu0 %v697
        %711 = vmatprep.subr.mxu0 0.0
        %712 = vmatpush1.msra.mxu0 %v698
        %713 = vmatprep.subr.mxu0 0.0
        %714 = vmatpush1.msra.mxu0 %v699
        %715 = vmatprep.subr.mxu0 0.0
        %716 = vmatpush1.msra.mxu0 %v700
        %717 = vmatprep.subr.mxu0 0.0
        %718 = vmatpush1.msra.mxu0 0.0
        %719 = vmatprep.subr.mxu0 0.0
        %720 = vmatpush1.msra.mxu0 0.0
        %721 = vmatprep.subr.mxu0 0.0
        %722 = vmatpush1.msra.mxu0 0.0
        %723 = vmatprep.subr.mxu0 0.0
        %724 = vmatpush1.msra.mxu0 0.0
        %725 = vmatprep.subr.mxu0 0.0
        %726 = vmatpush1.msra.mxu0 0.0
        %727 = vmatprep.subr.mxu0 0.0
        %728 = vmatpush1.msra.mxu0 0.0
        %729 = vmatprep.subr.mxu0 0.0
        %730 = vmatpush1.msra.mxu0 0.0
        %731 = vmatprep.subr.mxu0 0.0
        %732 = vmatpush1.msra.mxu0 0.0
        %733 = vmatprep.subr.mxu0 0.0
        %734 = vmatpush1.msra.mxu0 0.0
        %735 = vmatprep.subr.mxu0 0.0
        %736 = vmatpush1.msra.mxu0 0.0
        %737 = vmatprep.subr.mxu0 0.0
        %738 = vmatpush1.msra.mxu0 0.0
        %739 = vmatprep.subr.mxu0 0.0
        %740 = vmatpush1.msra.mxu0 0.0
        %741 = vmatprep.subr.mxu0 0.0
        %742 = vmatpush1.msra.mxu0 0.0
        %743 = vmatprep.subr.mxu0 0.0
        %744 = vmatpush1.msra.mxu0 0.0
        %745 = vmatprep.subr.mxu0 0.0
        %746 = vmatpush1.msra.mxu0 0.0
        %747 = vmatprep.subr.mxu0 0.0
        %748 = vmatpush1.msra.mxu0 0.0
        %749 = vmatprep.subr.mxu0 0.0
        %750 = vmatpush1.msra.mxu0 0.0
        %751 = vmatprep.subr.mxu0 0.0
        %752 = vmatpush1.msra.mxu0 0.0
        %753 = vmatprep.subr.mxu0 0.0
        %754 = vmatpush1.msra.mxu0 0.0
        %755 = vmatprep.subr.mxu0 0.0
        %756 = vmatpush1.msra.mxu0 0.0
        %757 = vmatprep.subr.mxu0 0.0
        %758 = vmatpush1.msra.mxu0 0.0
        %759 = vmatprep.subr.mxu0 0.0
        %760 = vmatpush1.msra.mxu0 0.0
        %761 = vmatprep.subr.mxu0 0.0
        %762 = vmatpush1.msra.mxu0 0.0
        %763 = vmatprep.subr.mxu0 0.0
        %764 = vmatpush1.msra.mxu0 0.0
        %765 = vmatprep.subr.mxu0 0.0
        %766 = vmatpush1.msra.mxu0 0.0
        %767 = vmatprep.subr.mxu0 0.0
        %768 = vmatpush1.msra.mxu0 0.0
        %769 = vmatprep.subr.mxu0 0.0
        %770 = vmatpush1.msra.mxu0 0.0
        %771 = vmatprep.subr.mxu0 0.0
        %772 = vmatpush1.msra.mxu0 0.0
        %773 = vmatprep.mubr.f32.mxu0 0.0
        %774 = vmatmul.mubr.f32.gmra.mrb[0].mxu0 %v402
        %v775 = vpop.f32.mrb[0].mxu0
        %v776 = vadd.f32 %v707, %v775
        %v777 = vpop.f32.mrb[0].mxu0
        %778 = vmatprep.mubr.f32.mxu0 0.0
        %779 = vmatmul.mubr.f32.gmra.mrb[0].mxu0 %v405
        %v780 = vpop.f32.mrb[0].mxu0
        %v781 = vadd.f32 %v707, %v780
        %v782 = vpop.f32.mrb[0].mxu0
        %783 = vmatprep.mubr.f32.mxu0 0.0
        %784 = vmatmul.mubr.f32.gmra.mrb[0].mxu0 %v408
        %v785 = vpop.f32.mrb[0].mxu0
        %v786 = vadd.f32 %v707, %v785
        %v787 = vpop.f32.mrb[0].mxu0
        %788 = vmatprep.mubr.f32.mxu0 0.0
        %789 = vmatmul.mubr.f32.gmra.mrb[0].mxu0 %v411
        %v790 = vpop.f32.mrb[0].mxu0
        %v791 = vadd.f32 %v707, %v790
        %v792 = vpop.f32.mrb[0].mxu0
        %793 = vmatprep.mubr.f32.mxu0 0.0
        %794 = vmatmul.mubr.f32.gmra.mrb[0].mxu0 %v414
        %v795 = vpop.f32.mrb[0].mxu0
        %v796 = vadd.f32 %v707, %v795
        %v797 = vpop.f32.mrb[0].mxu0
        %798 = vmatprep.mubr.f32.mxu0 0.0
        %799 = vmatmul.mubr.f32.gmra.mrb[0].mxu0 %v417
        %v800 = vpop.f32.mrb[0].mxu0
        %v801 = vadd.f32 %v707, %v800
        %v802 = vpop.f32.mrb[0].mxu0
        %803 = vmatprep.mubr.f32.mxu0 0.0
        %804 = vmatmul.mubr.f32.gmra.mrb[0].mxu0 %v420
        %v805 = vpop.f32.mrb[0].mxu0
        %v806 = vadd.f32 %v707, %v805
        %v807 = vpop.f32.mrb[0].mxu0
        %808 = vmatprep.mubr.f32.mxu0 0.0
        %809 = vmatmul.mubr.f32.gmra.mrb[0].mxu0 %v423
        %v810 = vpop.f32.mrb[0].mxu0
        %v811 = vadd.f32 %v707, %v810
        %v812 = vpop.f32.mrb[0].mxu0
        %813 = vdwg.mxu0
        %s814 = scalar_lea.vmem [#allocation2], 128
        %815 = vst.msk [vmem:[%s814] sm:$0xff] %vm400, %v776
        %816 = vst.msk [vmem:[%s814 + $0x8] sm:$0xff] %vm400, %v781
        %817 = vst.msk [vmem:[%s814 + $0x10] sm:$0xff] %vm400, %v786
        %818 = vst.msk [vmem:[%s814 + $0x18] sm:$0xff] %vm400, %v791
        %819 = vst.msk [vmem:[%s814 + $0x20] sm:$0xff] %vm400, %v796
        %820 = vst.msk [vmem:[%s814 + $0x28] sm:$0xff] %vm400, %v801
        %821 = vst.msk [vmem:[%s814 + $0x30] sm:$0xff] %vm400, %v806
        %822 = vst.msk [vmem:[%s814 + $0x38] sm:$0xff] %vm400, %v811
        %v823 = vld [vmem:[%s303] sm:$0xff]
        %v824 = vld [vmem:[%s303 + $0x8] sm:$0xff]
        %v825 = vld [vmem:[%s303 + $0x10] sm:$0xff]
        %v826 = vld [vmem:[%s303 + $0x18] sm:$0xff]
        %s827 = scalar_lea.vmem %s303, 32 [#allocation3]
        %v828 = vld [vmem:[%s827] sm:$0xff]
        %v829 = vld [vmem:[%s827 + $0x8] sm:$0xff]
        %v830 = vld [vmem:[%s827 + $0x10] sm:$0xff]
        %v831 = vld [vmem:[%s827 + $0x18] sm:$0xff]
        %s832 = scalar_lea.vmem %s303, 64 [#allocation3]
        %v833 = vld [vmem:[%s832] sm:$0xff]
        %v834 = vld [vmem:[%s832 + $0x8] sm:$0xff]
        %v835 = vld [vmem:[%s832 + $0x10] sm:$0xff]
        %v836 = vld [vmem:[%s832 + $0x18] sm:$0xff]
        %s837 = scalar_lea.vmem %s367, 2
        %v838 = vld [vmem:[%s837] sm:$0x1]
        %v840 = vlaneseq
        %v841 = vshrl.u32 %v840, 7
        %v842 = vsub.s32 0, %v841
        %v843 = vrot.slane %v838, %v842
        %s845 = smul.u32 %s22, 7
        %s846 = smul.u32 %s22, 2
        %s847 = ssub.s32 1, %s846
        %v848 = vld [vmem:[%s371] sm:$0xff]
        %s849 = smul.u32 %s22, 56
        %s850 = scalar_lea.vmem [#allocation2], %s849
        %v851 = vld [vmem:[%s850] sm:$0xff]
        %s852 = sadd.s32 %s849, 64
        %s853 = scalar_lea.vmem [#allocation2], %s852
        %v854 = vld [vmem:[%s853] sm:$0xff]
        %s855 = sadd.s32 %s849, 128
        %s856 = scalar_lea.vmem [#allocation2], %s855
        %v857 = vld [vmem:[%s856] sm:$0xff]
        %v859 = vsel %vm400, %v848, 0
        %861 = vmatprep.subr.mxu0 0.0
        %862 = vmatpush1.msra.mxu0 %v823
        %863 = vmatprep.subr.mxu0 0.0
        %864 = vmatpush1.msra.mxu0 %v824
        %865 = vmatprep.subr.mxu0 0.0
        %866 = vmatpush1.msra.mxu0 %v825
        %867 = vmatprep.subr.mxu0 0.0
        %868 = vmatpush1.msra.mxu0 %v826
        %869 = vmatprep.subr.mxu0 0.0
        %870 = vmatpush1.msra.mxu0 0.0
        %871 = vmatprep.subr.mxu0 0.0
        %872 = vmatpush1.msra.mxu0 0.0
        %873 = vmatprep.subr.mxu0 0.0
        %874 = vmatpush1.msra.mxu0 0.0
        %875 = vmatprep.subr.mxu0 0.0
        %876 = vmatpush1.msra.mxu0 0.0
        %877 = vmatprep.subr.mxu0 0.0
        %878 = vmatpush1.msra.mxu0 0.0
        %879 = vmatprep.subr.mxu0 0.0
        %880 = vmatpush1.msra.mxu0 0.0
        %881 = vmatprep.subr.mxu0 0.0
        %882 = vmatpush1.msra.mxu0 0.0
        %883 = vmatprep.subr.mxu0 0.0
        %884 = vmatpush1.msra.mxu0 0.0
        %885 = vmatprep.subr.mxu0 0.0
        %886 = vmatpush1.msra.mxu0 0.0
        %887 = vmatprep.subr.mxu0 0.0
        %888 = vmatpush1.msra.mxu0 0.0
        %889 = vmatprep.subr.mxu0 0.0
        %890 = vmatpush1.msra.mxu0 0.0
        %891 = vmatprep.subr.mxu0 0.0
        %892 = vmatpush1.msra.mxu0 0.0
        %893 = vmatprep.subr.mxu0 0.0
        %894 = vmatpush1.msra.mxu0 0.0
        %895 = vmatprep.subr.mxu0 0.0
        %896 = vmatpush1.msra.mxu0 0.0
        %897 = vmatprep.subr.mxu0 0.0
        %898 = vmatpush1.msra.mxu0 0.0
        %899 = vmatprep.subr.mxu0 0.0
        %900 = vmatpush1.msra.mxu0 0.0
        %901 = vmatprep.subr.mxu0 0.0
        %902 = vmatpush1.msra.mxu0 0.0
        %903 = vmatprep.subr.mxu0 0.0
        %904 = vmatpush1.msra.mxu0 0.0
        %905 = vmatprep.subr.mxu0 0.0
        %906 = vmatpush1.msra.mxu0 0.0
        %907 = vmatprep.subr.mxu0 0.0
        %908 = vmatpush1.msra.mxu0 0.0
        %909 = vmatprep.subr.mxu0 0.0
        %910 = vmatpush1.msra.mxu0 0.0
        %911 = vmatprep.subr.mxu0 0.0
        %912 = vmatpush1.msra.mxu0 0.0
        %913 = vmatprep.subr.mxu0 0.0
        %914 = vmatpush1.msra.mxu0 0.0
        %915 = vmatprep.subr.mxu0 0.0
        %916 = vmatpush1.msra.mxu0 0.0
        %917 = vmatprep.subr.mxu0 0.0
        %918 = vmatpush1.msra.mxu0 0.0
        %919 = vmatprep.subr.mxu0 0.0
        %920 = vmatpush1.msra.mxu0 0.0
        %921 = vmatprep.subr.mxu0 0.0
        %922 = vmatpush1.msra.mxu0 0.0
        %923 = vmatprep.subr.mxu0 0.0
        %924 = vmatpush1.msra.mxu0 0.0
        %925 = vmatprep.mubr.f32.mxu0 0.0
        %926 = vmatmul.mubr.f32.gmra.mrb[0].mxu0 %v859
        %v927 = vpop.f32.mrb[0].mxu0
        %v928 = vadd.f32 0.0, %v927
        %v929 = vpop.f32.mrb[0].mxu0
        %930 = vdwg.mxu0
        %931 = vmatprep.subr.mxu0 0.0
        %932 = vmatpush1.msra.mxu0 %v828
        %933 = vmatprep.subr.mxu0 0.0
        %934 = vmatpush1.msra.mxu0 %v829
        %935 = vmatprep.subr.mxu0 0.0
        %936 = vmatpush1.msra.mxu0 %v830
        %937 = vmatprep.subr.mxu0 0.0
        %938 = vmatpush1.msra.mxu0 %v831
        %939 = vmatprep.subr.mxu0 0.0
        %940 = vmatpush1.msra.mxu0 0.0
        %941 = vmatprep.subr.mxu0 0.0
        %942 = vmatpush1.msra.mxu0 0.0
        %943 = vmatprep.subr.mxu0 0.0
        %944 = vmatpush1.msra.mxu0 0.0
        %945 = vmatprep.subr.mxu0 0.0
        %946 = vmatpush1.msra.mxu0 0.0
        %947 = vmatprep.subr.mxu0 0.0
        %948 = vmatpush1.msra.mxu0 0.0
        %949 = vmatprep.subr.mxu0 0.0
        %950 = vmatpush1.msra.mxu0 0.0
        %951 = vmatprep.subr.mxu0 0.0
        %952 = vmatpush1.msra.mxu0 0.0
        %953 = vmatprep.subr.mxu0 0.0
        %954 = vmatpush1.msra.mxu0 0.0
        %955 = vmatprep.subr.mxu0 0.0
        %956 = vmatpush1.msra.mxu0 0.0
        %957 = vmatprep.subr.mxu0 0.0
        %958 = vmatpush1.msra.mxu0 0.0
        %959 = vmatprep.subr.mxu0 0.0
        %960 = vmatpush1.msra.mxu0 0.0
        %961 = vmatprep.subr.mxu0 0.0
        %962 = vmatpush1.msra.mxu0 0.0
        %963 = vmatprep.subr.mxu0 0.0
        %964 = vmatpush1.msra.mxu0 0.0
        %965 = vmatprep.subr.mxu0 0.0
        %966 = vmatpush1.msra.mxu0 0.0
        %967 = vmatprep.subr.mxu0 0.0
        %968 = vmatpush1.msra.mxu0 0.0
        %969 = vmatprep.subr.mxu0 0.0
        %970 = vmatpush1.msra.mxu0 0.0
        %971 = vmatprep.subr.mxu0 0.0
        %972 = vmatpush1.msra.mxu0 0.0
        %973 = vmatprep.subr.mxu0 0.0
        %974 = vmatpush1.msra.mxu0 0.0
        %975 = vmatprep.subr.mxu0 0.0
        %976 = vmatpush1.msra.mxu0 0.0
        %977 = vmatprep.subr.mxu0 0.0
        %978 = vmatpush1.msra.mxu0 0.0
        %979 = vmatprep.subr.mxu0 0.0
        %980 = vmatpush1.msra.mxu0 0.0
        %981 = vmatprep.subr.mxu0 0.0
        %982 = vmatpush1.msra.mxu0 0.0
        %983 = vmatprep.subr.mxu0 0.0
        %984 = vmatpush1.msra.mxu0 0.0
        %985 = vmatprep.subr.mxu0 0.0
        %986 = vmatpush1.msra.mxu0 0.0
        %987 = vmatprep.subr.mxu0 0.0
        %988 = vmatpush1.msra.mxu0 0.0
        %989 = vmatprep.subr.mxu0 0.0
        %990 = vmatpush1.msra.mxu0 0.0
        %991 = vmatprep.subr.mxu0 0.0
        %992 = vmatpush1.msra.mxu0 0.0
        %993 = vmatprep.subr.mxu0 0.0
        %994 = vmatpush1.msra.mxu0 0.0
        %995 = vmatprep.mubr.f32.mxu0 0.0
        %996 = vmatmul.mubr.f32.gmra.mrb[0].mxu0 %v859
        %v997 = vpop.f32.mrb[0].mxu0
        %v998 = vadd.f32 0.0, %v997
        %v999 = vpop.f32.mrb[0].mxu0
        %1000 = vdwg.mxu0
        %v1001 = vadd.f32 %v851, %v928
        %v1002 = vxor.u32 %v1001, 2147483648
        %v1003 = vmul.f32 %v1002, 1.442695
        %v1004 = vpow.pop %v1003
        %v1005 = vadd.f32 %v1004, 1.0
        %v1006 = vrcp.pop %v1005
        %v1007 = vmul.f32 1.0, %v1006
        %v1008 = vadd.f32 %v854, %v998
        %v1009 = vxor.u32 %v1008, 2147483648
        %v1010 = vmul.f32 %v1009, 1.442695
        %v1011 = vpow.pop %v1010
        %v1012 = vadd.f32 %v1011, 1.0
        %v1013 = vrcp.pop %v1012
        %v1014 = vmul.f32 1.0, %v1013
        %1015 = vmatprep.subr.mxu0 0.0
        %1016 = vmatpush1.msra.mxu0 %v833
        %1017 = vmatprep.subr.mxu0 0.0
        %1018 = vmatpush1.msra.mxu0 %v834
        %1019 = vmatprep.subr.mxu0 0.0
        %1020 = vmatpush1.msra.mxu0 %v835
        %1021 = vmatprep.subr.mxu0 0.0
        %1022 = vmatpush1.msra.mxu0 %v836
        %1023 = vmatprep.subr.mxu0 0.0
        %1024 = vmatpush1.msra.mxu0 0.0
        %1025 = vmatprep.subr.mxu0 0.0
        %1026 = vmatpush1.msra.mxu0 0.0
        %1027 = vmatprep.subr.mxu0 0.0
        %1028 = vmatpush1.msra.mxu0 0.0
        %1029 = vmatprep.subr.mxu0 0.0
        %1030 = vmatpush1.msra.mxu0 0.0
        %1031 = vmatprep.subr.mxu0 0.0
        %1032 = vmatpush1.msra.mxu0 0.0
        %1033 = vmatprep.subr.mxu0 0.0
        %1034 = vmatpush1.msra.mxu0 0.0
        %1035 = vmatprep.subr.mxu0 0.0
        %1036 = vmatpush1.msra.mxu0 0.0
        %1037 = vmatprep.subr.mxu0 0.0
        %1038 = vmatpush1.msra.mxu0 0.0
        %1039 = vmatprep.subr.mxu0 0.0
        %1040 = vmatpush1.msra.mxu0 0.0
        %1041 = vmatprep.subr.mxu0 0.0
        %1042 = vmatpush1.msra.mxu0 0.0
        %1043 = vmatprep.subr.mxu0 0.0
        %1044 = vmatpush1.msra.mxu0 0.0
        %1045 = vmatprep.subr.mxu0 0.0
        %1046 = vmatpush1.msra.mxu0 0.0
        %1047 = vmatprep.subr.mxu0 0.0
        %1048 = vmatpush1.msra.mxu0 0.0
        %1049 = vmatprep.subr.mxu0 0.0
        %1050 = vmatpush1.msra.mxu0 0.0
        %1051 = vmatprep.subr.mxu0 0.0
        %1052 = vmatpush1.msra.mxu0 0.0
        %1053 = vmatprep.subr.mxu0 0.0
        %1054 = vmatpush1.msra.mxu0 0.0
        %1055 = vmatprep.subr.mxu0 0.0
        %1056 = vmatpush1.msra.mxu0 0.0
        %1057 = vmatprep.subr.mxu0 0.0
        %1058 = vmatpush1.msra.mxu0 0.0
        %1059 = vmatprep.subr.mxu0 0.0
        %1060 = vmatpush1.msra.mxu0 0.0
        %1061 = vmatprep.subr.mxu0 0.0
        %1062 = vmatpush1.msra.mxu0 0.0
        %1063 = vmatprep.subr.mxu0 0.0
        %1064 = vmatpush1.msra.mxu0 0.0
        %1065 = vmatprep.subr.mxu0 0.0
        %1066 = vmatpush1.msra.mxu0 0.0
        %1067 = vmatprep.subr.mxu0 0.0
        %1068 = vmatpush1.msra.mxu0 0.0
        %1069 = vmatprep.subr.mxu0 0.0
        %1070 = vmatpush1.msra.mxu0 0.0
        %1071 = vmatprep.subr.mxu0 0.0
        %1072 = vmatpush1.msra.mxu0 0.0
        %1073 = vmatprep.subr.mxu0 0.0
        %1074 = vmatpush1.msra.mxu0 0.0
        %1075 = vmatprep.subr.mxu0 0.0
        %1076 = vmatpush1.msra.mxu0 0.0
        %1077 = vmatprep.subr.mxu0 0.0
        %1078 = vmatpush1.msra.mxu0 0.0
        %1079 = vmatprep.mubr.f32.mxu0 0.0
        %1080 = vmatmul.mubr.f32.gmra.mrb[0].mxu0 %v859
        %v1081 = vpop.f32.mrb[0].mxu0
        %v1082 = vadd.f32 %v843, %v1081
        %v1083 = vpop.f32.mrb[0].mxu0
        %1084 = vdwg.mxu0
        %v1085 = vmul.f32 %v1007, %v1082
        %v1086 = vadd.f32 %v857, %v1085
        %v1087 = vtanh.pop %v1086
        %v1088 = vsub.f32 1.0, %v1014
        %v1089 = vmul.f32 %v1088, %v1087
        %v1090 = vmul.f32 %v1014, %v848
        %v1091 = vadd.f32 %v1089, %v1090
        %s1092 = smul.u32 %s845, 8
        %s1093 = scalar_lea.vmem %s376, %s1092
        %1094 = vst.msk [vmem:[%s1093] sm:$0xff] %vm400, %v1091
        %s1095 = sadd.s32 %s845, %s847
        %s1096 = smul.u32 %s1095, 8
        %s1097 = scalar_lea.vmem [#allocation2], %s1096
        %v1098 = vld [vmem:[%s1097] sm:$0xff]
        %s1099 = sadd.s32 %s1096, 64
        %s1100 = scalar_lea.vmem [#allocation2], %s1099
        %v1101 = vld [vmem:[%s1100] sm:$0xff]
        %s1102 = sadd.s32 %s1096, 128
        %s1103 = scalar_lea.vmem [#allocation2], %s1102
        %v1104 = vld [vmem:[%s1103] sm:$0xff]
        %v1106 = vsel %vm400, %v1091, 0
        %1108 = vmatprep.subr.mxu0 0.0
        %1109 = vmatpush1.msra.mxu0 %v823
        %1110 = vmatprep.subr.mxu0 0.0
        %1111 = vmatpush1.msra.mxu0 %v824
        %1112 = vmatprep.subr.mxu0 0.0
        %1113 = vmatpush1.msra.mxu0 %v825
        %1114 = vmatprep.subr.mxu0 0.0
        %1115 = vmatpush1.msra.mxu0 %v826
        %1116 = vmatprep.subr.mxu0 0.0
        %1117 = vmatpush1.msra.mxu0 0.0
        %1118 = vmatprep.subr.mxu0 0.0
        %1119 = vmatpush1.msra.mxu0 0.0
        %1120 = vmatprep.subr.mxu0 0.0
        %1121 = vmatpush1.msra.mxu0 0.0
        %1122 = vmatprep.subr.mxu0 0.0
        %1123 = vmatpush1.msra.mxu0 0.0
        %1124 = vmatprep.subr.mxu0 0.0
        %1125 = vmatpush1.msra.mxu0 0.0
        %1126 = vmatprep.subr.mxu0 0.0
        %1127 = vmatpush1.msra.mxu0 0.0
        %1128 = vmatprep.subr.mxu0 0.0
        %1129 = vmatpush1.msra.mxu0 0.0
        %1130 = vmatprep.subr.mxu0 0.0
        %1131 = vmatpush1.msra.mxu0 0.0
        %1132 = vmatprep.subr.mxu0 0.0
        %1133 = vmatpush1.msra.mxu0 0.0
        %1134 = vmatprep.subr.mxu0 0.0
        %1135 = vmatpush1.msra.mxu0 0.0
        %1136 = vmatprep.subr.mxu0 0.0
        %1137 = vmatpush1.msra.mxu0 0.0
        %1138 = vmatprep.subr.mxu0 0.0
        %1139 = vmatpush1.msra.mxu0 0.0
        %1140 = vmatprep.subr.mxu0 0.0
        %1141 = vmatpush1.msra.mxu0 0.0
        %1142 = vmatprep.subr.mxu0 0.0
        %1143 = vmatpush1.msra.mxu0 0.0
        %1144 = vmatprep.subr.mxu0 0.0
        %1145 = vmatpush1.msra.mxu0 0.0
        %1146 = vmatprep.subr.mxu0 0.0
        %1147 = vmatpush1.msra.mxu0 0.0
        %1148 = vmatprep.subr.mxu0 0.0
        %1149 = vmatpush1.msra.mxu0 0.0
        %1150 = vmatprep.subr.mxu0 0.0
        %1151 = vmatpush1.msra.mxu0 0.0
        %1152 = vmatprep.subr.mxu0 0.0
        %1153 = vmatpush1.msra.mxu0 0.0
        %1154 = vmatprep.subr.mxu0 0.0
        %1155 = vmatpush1.msra.mxu0 0.0
        %1156 = vmatprep.subr.mxu0 0.0
        %1157 = vmatpush1.msra.mxu0 0.0
        %1158 = vmatprep.subr.mxu0 0.0
        %1159 = vmatpush1.msra.mxu0 0.0
        %1160 = vmatprep.subr.mxu0 0.0
        %1161 = vmatpush1.msra.mxu0 0.0
        %1162 = vmatprep.subr.mxu0 0.0
        %1163 = vmatpush1.msra.mxu0 0.0
        %1164 = vmatprep.subr.mxu0 0.0
        %1165 = vmatpush1.msra.mxu0 0.0
        %1166 = vmatprep.subr.mxu0 0.0
        %1167 = vmatpush1.msra.mxu0 0.0
        %1168 = vmatprep.subr.mxu0 0.0
        %1169 = vmatpush1.msra.mxu0 0.0
        %1170 = vmatprep.subr.mxu0 0.0
        %1171 = vmatpush1.msra.mxu0 0.0
        %1172 = vmatprep.mubr.f32.mxu0 0.0
        %1173 = vmatmul.mubr.f32.gmra.mrb[0].mxu0 %v1106
        %v1174 = vpop.f32.mrb[0].mxu0
        %v1175 = vadd.f32 0.0, %v1174
        %v1176 = vpop.f32.mrb[0].mxu0
        %1177 = vdwg.mxu0
        %1178 = vmatprep.subr.mxu0 0.0
        %1179 = vmatpush1.msra.mxu0 %v828
        %1180 = vmatprep.subr.mxu0 0.0
        %1181 = vmatpush1.msra.mxu0 %v829
        %1182 = vmatprep.subr.mxu0 0.0
        %1183 = vmatpush1.msra.mxu0 %v830
        %1184 = vmatprep.subr.mxu0 0.0
        %1185 = vmatpush1.msra.mxu0 %v831
        %1186 = vmatprep.subr.mxu0 0.0
        %1187 = vmatpush1.msra.mxu0 0.0
        %1188 = vmatprep.subr.mxu0 0.0
        %1189 = vmatpush1.msra.mxu0 0.0
        %1190 = vmatprep.subr.mxu0 0.0
        %1191 = vmatpush1.msra.mxu0 0.0
        %1192 = vmatprep.subr.mxu0 0.0
        %1193 = vmatpush1.msra.mxu0 0.0
        %1194 = vmatprep.subr.mxu0 0.0
        %1195 = vmatpush1.msra.mxu0 0.0
        %1196 = vmatprep.subr.mxu0 0.0
        %1197 = vmatpush1.msra.mxu0 0.0
        %1198 = vmatprep.subr.mxu0 0.0
        %1199 = vmatpush1.msra.mxu0 0.0
        %1200 = vmatprep.subr.mxu0 0.0
        %1201 = vmatpush1.msra.mxu0 0.0
        %1202 = vmatprep.subr.mxu0 0.0
        %1203 = vmatpush1.msra.mxu0 0.0
        %1204 = vmatprep.subr.mxu0 0.0
        %1205 = vmatpush1.msra.mxu0 0.0
        %1206 = vmatprep.subr.mxu0 0.0
        %1207 = vmatpush1.msra.mxu0 0.0
        %1208 = vmatprep.subr.mxu0 0.0
        %1209 = vmatpush1.msra.mxu0 0.0
        %1210 = vmatprep.subr.mxu0 0.0
        %1211 = vmatpush1.msra.mxu0 0.0
        %1212 = vmatprep.subr.mxu0 0.0
        %1213 = vmatpush1.msra.mxu0 0.0
        %1214 = vmatprep.subr.mxu0 0.0
        %1215 = vmatpush1.msra.mxu0 0.0
        %1216 = vmatprep.subr.mxu0 0.0
        %1217 = vmatpush1.msra.mxu0 0.0
        %1218 = vmatprep.subr.mxu0 0.0
        %1219 = vmatpush1.msra.mxu0 0.0
        %1220 = vmatprep.subr.mxu0 0.0
        %1221 = vmatpush1.msra.mxu0 0.0
        %1222 = vmatprep.subr.mxu0 0.0
        %1223 = vmatpush1.msra.mxu0 0.0
        %1224 = vmatprep.subr.mxu0 0.0
        %1225 = vmatpush1.msra.mxu0 0.0
        %1226 = vmatprep.subr.mxu0 0.0
        %1227 = vmatpush1.msra.mxu0 0.0
        %1228 = vmatprep.subr.mxu0 0.0
        %1229 = vmatpush1.msra.mxu0 0.0
        %1230 = vmatprep.subr.mxu0 0.0
        %1231 = vmatpush1.msra.mxu0 0.0
        %1232 = vmatprep.subr.mxu0 0.0
        %1233 = vmatpush1.msra.mxu0 0.0
        %1234 = vmatprep.subr.mxu0 0.0
        %1235 = vmatpush1.msra.mxu0 0.0
        %1236 = vmatprep.subr.mxu0 0.0
        %1237 = vmatpush1.msra.mxu0 0.0
        %1238 = vmatprep.subr.mxu0 0.0
        %1239 = vmatpush1.msra.mxu0 0.0
        %1240 = vmatprep.subr.mxu0 0.0
        %1241 = vmatpush1.msra.mxu0 0.0
        %1242 = vmatprep.mubr.f32.mxu0 0.0
        %1243 = vmatmul.mubr.f32.gmra.mrb[0].mxu0 %v1106
        %v1244 = vpop.f32.mrb[0].mxu0
        %v1245 = vadd.f32 0.0, %v1244
        %v1246 = vpop.f32.mrb[0].mxu0
        %1247 = vdwg.mxu0
        %v1248 = vadd.f32 %v1098, %v1175
        %v1249 = vxor.u32 %v1248, 2147483648
        %v1250 = vmul.f32 %v1249, 1.442695
        %v1251 = vpow.pop %v1250
        %v1252 = vadd.f32 %v1251, 1.0
        %v1253 = vrcp.pop %v1252
        %v1254 = vmul.f32 1.0, %v1253
        %v1255 = vadd.f32 %v1101, %v1245
        %v1256 = vxor.u32 %v1255, 2147483648
        %v1257 = vmul.f32 %v1256, 1.442695
        %v1258 = vpow.pop %v1257
        %v1259 = vadd.f32 %v1258, 1.0
        %v1260 = vrcp.pop %v1259
        %v1261 = vmul.f32 1.0, %v1260
        %1262 = vmatprep.subr.mxu0 0.0
        %1263 = vmatpush1.msra.mxu0 %v833
        %1264 = vmatprep.subr.mxu0 0.0
        %1265 = vmatpush1.msra.mxu0 %v834
        %1266 = vmatprep.subr.mxu0 0.0
        %1267 = vmatpush1.msra.mxu0 %v835
        %1268 = vmatprep.subr.mxu0 0.0
        %1269 = vmatpush1.msra.mxu0 %v836
        %1270 = vmatprep.subr.mxu0 0.0
        %1271 = vmatpush1.msra.mxu0 0.0
        %1272 = vmatprep.subr.mxu0 0.0
        %1273 = vmatpush1.msra.mxu0 0.0
        %1274 = vmatprep.subr.mxu0 0.0
        %1275 = vmatpush1.msra.mxu0 0.0
        %1276 = vmatprep.subr.mxu0 0.0
        %1277 = vmatpush1.msra.mxu0 0.0
        %1278 = vmatprep.subr.mxu0 0.0
        %1279 = vmatpush1.msra.mxu0 0.0
        %1280 = vmatprep.subr.mxu0 0.0
        %1281 = vmatpush1.msra.mxu0 0.0
        %1282 = vmatprep.subr.mxu0 0.0
        %1283 = vmatpush1.msra.mxu0 0.0
        %1284 = vmatprep.subr.mxu0 0.0
        %1285 = vmatpush1.msra.mxu0 0.0
        %1286 = vmatprep.subr.mxu0 0.0
        %1287 = vmatpush1.msra.mxu0 0.0
        %1288 = vmatprep.subr.mxu0 0.0
        %1289 = vmatpush1.msra.mxu0 0.0
        %1290 = vmatprep.subr.mxu0 0.0
        %1291 = vmatpush1.msra.mxu0 0.0
        %1292 = vmatprep.subr.mxu0 0.0
        %1293 = vmatpush1.msra.mxu0 0.0
        %1294 = vmatprep.subr.mxu0 0.0
        %1295 = vmatpush1.msra.mxu0 0.0
        %1296 = vmatprep.subr.mxu0 0.0
        %1297 = vmatpush1.msra.mxu0 0.0
        %1298 = vmatprep.subr.mxu0 0.0
        %1299 = vmatpush1.msra.mxu0 0.0
        %1300 = vmatprep.subr.mxu0 0.0
        %1301 = vmatpush1.msra.mxu0 0.0
        %1302 = vmatprep.subr.mxu0 0.0
        %1303 = vmatpush1.msra.mxu0 0.0
        %1304 = vmatprep.subr.mxu0 0.0
        %1305 = vmatpush1.msra.mxu0 0.0
        %1306 = vmatprep.subr.mxu0 0.0
        %1307 = vmatpush1.msra.mxu0 0.0
        %1308 = vmatprep.subr.mxu0 0.0
        %1309 = vmatpush1.msra.mxu0 0.0
        %1310 = vmatprep.subr.mxu0 0.0
        %1311 = vmatpush1.msra.mxu0 0.0
        %1312 = vmatprep.subr.mxu0 0.0
        %1313 = vmatpush1.msra.mxu0 0.0
        %1314 = vmatprep.subr.mxu0 0.0
        %1315 = vmatpush1.msra.mxu0 0.0
        %1316 = vmatprep.subr.mxu0 0.0
        %1317 = vmatpush1.msra.mxu0 0.0
        %1318 = vmatprep.subr.mxu0 0.0
        %1319 = vmatpush1.msra.mxu0 0.0
        %1320 = vmatprep.subr.mxu0 0.0
        %1321 = vmatpush1.msra.mxu0 0.0
        %1322 = vmatprep.subr.mxu0 0.0
        %1323 = vmatpush1.msra.mxu0 0.0
        %1324 = vmatprep.subr.mxu0 0.0
        %1325 = vmatpush1.msra.mxu0 0.0
        %1326 = vmatprep.mubr.f32.mxu0 0.0
        %1327 = vmatmul.mubr.f32.gmra.mrb[0].mxu0 %v1106
        %v1328 = vpop.f32.mrb[0].mxu0
        %v1329 = vadd.f32 %v843, %v1328
        %v1330 = vpop.f32.mrb[0].mxu0
        %1331 = vdwg.mxu0
        %v1332 = vmul.f32 %v1254, %v1329
        %v1333 = vadd.f32 %v1104, %v1332
        %v1334 = vtanh.pop %v1333
        %v1335 = vsub.f32 1.0, %v1261
        %v1336 = vmul.f32 %v1335, %v1334
        %v1337 = vmul.f32 %v1261, %v1091
        %v1338 = vadd.f32 %v1336, %v1337
        %s1339 = scalar_lea.vmem %s376, %s1096
        %1340 = vst.msk [vmem:[%s1339] sm:$0xff] %vm400, %v1338
        %s1341 = smul.u32 %s847, 2
        %s1342 = sadd.s32 %s845, %s1341
        %s1343 = smul.u32 %s1342, 8
        %s1344 = scalar_lea.vmem [#allocation2], %s1343
        %v1345 = vld [vmem:[%s1344] sm:$0xff]
        %s1346 = sadd.s32 %s1343, 64
        %s1347 = scalar_lea.vmem [#allocation2], %s1346
        %v1348 = vld [vmem:[%s1347] sm:$0xff]
        %s1349 = sadd.s32 %s1343, 128
        %s1350 = scalar_lea.vmem [#allocation2], %s1349
        %v1351 = vld [vmem:[%s1350] sm:$0xff]
        %v1353 = vsel %vm400, %v1338, 0
        %1355 = vmatprep.subr.mxu0 0.0
        %1356 = vmatpush1.msra.mxu0 %v823
        %1357 = vmatprep.subr.mxu0 0.0
        %1358 = vmatpush1.msra.mxu0 %v824
        %1359 = vmatprep.subr.mxu0 0.0
        %1360 = vmatpush1.msra.mxu0 %v825
        %1361 = vmatprep.subr.mxu0 0.0
        %1362 = vmatpush1.msra.mxu0 %v826
        %1363 = vmatprep.subr.mxu0 0.0
        %1364 = vmatpush1.msra.mxu0 0.0
        %1365 = vmatprep.subr.mxu0 0.0
        %1366 = vmatpush1.msra.mxu0 0.0
        %1367 = vmatprep.subr.mxu0 0.0
        %1368 = vmatpush1.msra.mxu0 0.0
        %1369 = vmatprep.subr.mxu0 0.0
        %1370 = vmatpush1.msra.mxu0 0.0
        %1371 = vmatprep.subr.mxu0 0.0
        %1372 = vmatpush1.msra.mxu0 0.0
        %1373 = vmatprep.subr.mxu0 0.0
        %1374 = vmatpush1.msra.mxu0 0.0
        %1375 = vmatprep.subr.mxu0 0.0
        %1376 = vmatpush1.msra.mxu0 0.0
        %1377 = vmatprep.subr.mxu0 0.0
        %1378 = vmatpush1.msra.mxu0 0.0
        %1379 = vmatprep.subr.mxu0 0.0
        %1380 = vmatpush1.msra.mxu0 0.0
        %1381 = vmatprep.subr.mxu0 0.0
        %1382 = vmatpush1.msra.mxu0 0.0
        %1383 = vmatprep.subr.mxu0 0.0
        %1384 = vmatpush1.msra.mxu0 0.0
        %1385 = vmatprep.subr.mxu0 0.0
        %1386 = vmatpush1.msra.mxu0 0.0
        %1387 = vmatprep.subr.mxu0 0.0
        %1388 = vmatpush1.msra.mxu0 0.0
        %1389 = vmatprep.subr.mxu0 0.0
        %1390 = vmatpush1.msra.mxu0 0.0
        %1391 = vmatprep.subr.mxu0 0.0
        %1392 = vmatpush1.msra.mxu0 0.0
        %1393 = vmatprep.subr.mxu0 0.0
        %1394 = vmatpush1.msra.mxu0 0.0
        %1395 = vmatprep.subr.mxu0 0.0
        %1396 = vmatpush1.msra.mxu0 0.0
        %1397 = vmatprep.subr.mxu0 0.0
        %1398 = vmatpush1.msra.mxu0 0.0
        %1399 = vmatprep.subr.mxu0 0.0
        %1400 = vmatpush1.msra.mxu0 0.0
        %1401 = vmatprep.subr.mxu0 0.0
        %1402 = vmatpush1.msra.mxu0 0.0
        %1403 = vmatprep.subr.mxu0 0.0
        %1404 = vmatpush1.msra.mxu0 0.0
        %1405 = vmatprep.subr.mxu0 0.0
        %1406 = vmatpush1.msra.mxu0 0.0
        %1407 = vmatprep.subr.mxu0 0.0
        %1408 = vmatpush1.msra.mxu0 0.0
        %1409 = vmatprep.subr.mxu0 0.0
        %1410 = vmatpush1.msra.mxu0 0.0
        %1411 = vmatprep.subr.mxu0 0.0
        %1412 = vmatpush1.msra.mxu0 0.0
        %1413 = vmatprep.subr.mxu0 0.0
        %1414 = vmatpush1.msra.mxu0 0.0
        %1415 = vmatprep.subr.mxu0 0.0
        %1416 = vmatpush1.msra.mxu0 0.0
        %1417 = vmatprep.subr.mxu0 0.0
        %1418 = vmatpush1.msra.mxu0 0.0
        %1419 = vmatprep.mubr.f32.mxu0 0.0
        %1420 = vmatmul.mubr.f32.gmra.mrb[0].mxu0 %v1353
        %v1421 = vpop.f32.mrb[0].mxu0
        %v1422 = vadd.f32 0.0, %v1421
        %v1423 = vpop.f32.mrb[0].mxu0
        %1424 = vdwg.mxu0
        %1425 = vmatprep.subr.mxu0 0.0
        %1426 = vmatpush1.msra.mxu0 %v828
        %1427 = vmatprep.subr.mxu0 0.0
        %1428 = vmatpush1.msra.mxu0 %v829
        %1429 = vmatprep.subr.mxu0 0.0
        %1430 = vmatpush1.msra.mxu0 %v830
        %1431 = vmatprep.subr.mxu0 0.0
        %1432 = vmatpush1.msra.mxu0 %v831
        %1433 = vmatprep.subr.mxu0 0.0
        %1434 = vmatpush1.msra.mxu0 0.0
        %1435 = vmatprep.subr.mxu0 0.0
        %1436 = vmatpush1.msra.mxu0 0.0
        %1437 = vmatprep.subr.mxu0 0.0
        %1438 = vmatpush1.msra.mxu0 0.0
        %1439 = vmatprep.subr.mxu0 0.0
        %1440 = vmatpush1.msra.mxu0 0.0
        %1441 = vmatprep.subr.mxu0 0.0
        %1442 = vmatpush1.msra.mxu0 0.0
        %1443 = vmatprep.subr.mxu0 0.0
        %1444 = vmatpush1.msra.mxu0 0.0
        %1445 = vmatprep.subr.mxu0 0.0
        %1446 = vmatpush1.msra.mxu0 0.0
        %1447 = vmatprep.subr.mxu0 0.0
        %1448 = vmatpush1.msra.mxu0 0.0
        %1449 = vmatprep.subr.mxu0 0.0
        %1450 = vmatpush1.msra.mxu0 0.0
        %1451 = vmatprep.subr.mxu0 0.0
        %1452 = vmatpush1.msra.mxu0 0.0
        %1453 = vmatprep.subr.mxu0 0.0
        %1454 = vmatpush1.msra.mxu0 0.0
        %1455 = vmatprep.subr.mxu0 0.0
        %1456 = vmatpush1.msra.mxu0 0.0
        %1457 = vmatprep.subr.mxu0 0.0
        %1458 = vmatpush1.msra.mxu0 0.0
        %1459 = vmatprep.subr.mxu0 0.0
        %1460 = vmatpush1.msra.mxu0 0.0
        %1461 = vmatprep.subr.mxu0 0.0
        %1462 = vmatpush1.msra.mxu0 0.0
        %1463 = vmatprep.subr.mxu0 0.0
        %1464 = vmatpush1.msra.mxu0 0.0
        %1465 = vmatprep.subr.mxu0 0.0
        %1466 = vmatpush1.msra.mxu0 0.0
        %1467 = vmatprep.subr.mxu0 0.0
        %1468 = vmatpush1.msra.mxu0 0.0
        %1469 = vmatprep.subr.mxu0 0.0
        %1470 = vmatpush1.msra.mxu0 0.0
        %1471 = vmatprep.subr.mxu0 0.0
        %1472 = vmatpush1.msra.mxu0 0.0
        %1473 = vmatprep.subr.mxu0 0.0
        %1474 = vmatpush1.msra.mxu0 0.0
        %1475 = vmatprep.subr.mxu0 0.0
        %1476 = vmatpush1.msra.mxu0 0.0
        %1477 = vmatprep.subr.mxu0 0.0
        %1478 = vmatpush1.msra.mxu0 0.0
        %1479 = vmatprep.subr.mxu0 0.0
        %1480 = vmatpush1.msra.mxu0 0.0
        %1481 = vmatprep.subr.mxu0 0.0
        %1482 = vmatpush1.msra.mxu0 0.0
        %1483 = vmatprep.subr.mxu0 0.0
        %1484 = vmatpush1.msra.mxu0 0.0
        %1485 = vmatprep.subr.mxu0 0.0
        %1486 = vmatpush1.msra.mxu0 0.0
        %1487 = vmatprep.subr.mxu0 0.0
        %1488 = vmatpush1.msra.mxu0 0.0
        %1489 = vmatprep.mubr.f32.mxu0 0.0
        %1490 = vmatmul.mubr.f32.gmra.mrb[0].mxu0 %v1353
        %v1491 = vpop.f32.mrb[0].mxu0
        %v1492 = vadd.f32 0.0, %v1491
        %v1493 = vpop.f32.mrb[0].mxu0
        %1494 = vdwg.mxu0
        %v1495 = vadd.f32 %v1345, %v1422
        %v1496 = vxor.u32 %v1495, 2147483648
        %v1497 = vmul.f32 %v1496, 1.442695
        %v1498 = vpow.pop %v1497
        %v1499 = vadd.f32 %v1498, 1.0
        %v1500 = vrcp.pop %v1499
        %v1501 = vmul.f32 1.0, %v1500
        %v1502 = vadd.f32 %v1348, %v1492
        %v1503 = vxor.u32 %v1502, 2147483648
        %v1504 = vmul.f32 %v1503, 1.442695
        %v1505 = vpow.pop %v1504
        %v1506 = vadd.f32 %v1505, 1.0
        %v1507 = vrcp.pop %v1506
        %v1508 = vmul.f32 1.0, %v1507
        %1509 = vmatprep.subr.mxu0 0.0
        %1510 = vmatpush1.msra.mxu0 %v833
        %1511 = vmatprep.subr.mxu0 0.0
        %1512 = vmatpush1.msra.mxu0 %v834
        %1513 = vmatprep.subr.mxu0 0.0
        %1514 = vmatpush1.msra.mxu0 %v835
        %1515 = vmatprep.subr.mxu0 0.0
        %1516 = vmatpush1.msra.mxu0 %v836
        %1517 = vmatprep.subr.mxu0 0.0
        %1518 = vmatpush1.msra.mxu0 0.0
        %1519 = vmatprep.subr.mxu0 0.0
        %1520 = vmatpush1.msra.mxu0 0.0
        %1521 = vmatprep.subr.mxu0 0.0
        %1522 = vmatpush1.msra.mxu0 0.0
        %1523 = vmatprep.subr.mxu0 0.0
        %1524 = vmatpush1.msra.mxu0 0.0
        %1525 = vmatprep.subr.mxu0 0.0
        %1526 = vmatpush1.msra.mxu0 0.0
        %1527 = vmatprep.subr.mxu0 0.0
        %1528 = vmatpush1.msra.mxu0 0.0
        %1529 = vmatprep.subr.mxu0 0.0
        %1530 = vmatpush1.msra.mxu0 0.0
        %1531 = vmatprep.subr.mxu0 0.0
        %1532 = vmatpush1.msra.mxu0 0.0
        %1533 = vmatprep.subr.mxu0 0.0
        %1534 = vmatpush1.msra.mxu0 0.0
        %1535 = vmatprep.subr.mxu0 0.0
        %1536 = vmatpush1.msra.mxu0 0.0
        %1537 = vmatprep.subr.mxu0 0.0
        %1538 = vmatpush1.msra.mxu0 0.0
        %1539 = vmatprep.subr.mxu0 0.0
        %1540 = vmatpush1.msra.mxu0 0.0
        %1541 = vmatprep.subr.mxu0 0.0
        %1542 = vmatpush1.msra.mxu0 0.0
        %1543 = vmatprep.subr.mxu0 0.0
        %1544 = vmatpush1.msra.mxu0 0.0
        %1545 = vmatprep.subr.mxu0 0.0
        %1546 = vmatpush1.msra.mxu0 0.0
        %1547 = vmatprep.subr.mxu0 0.0
        %1548 = vmatpush1.msra.mxu0 0.0
        %1549 = vmatprep.subr.mxu0 0.0
        %1550 = vmatpush1.msra.mxu0 0.0
        %1551 = vmatprep.subr.mxu0 0.0
        %1552 = vmatpush1.msra.mxu0 0.0
        %1553 = vmatprep.subr.mxu0 0.0
        %1554 = vmatpush1.msra.mxu0 0.0
        %1555 = vmatprep.subr.mxu0 0.0
        %1556 = vmatpush1.msra.mxu0 0.0
        %1557 = vmatprep.subr.mxu0 0.0
        %1558 = vmatpush1.msra.mxu0 0.0
        %1559 = vmatprep.subr.mxu0 0.0
        %1560 = vmatpush1.msra.mxu0 0.0
        %1561 = vmatprep.subr.mxu0 0.0
        %1562 = vmatpush1.msra.mxu0 0.0
        %1563 = vmatprep.subr.mxu0 0.0
        %1564 = vmatpush1.msra.mxu0 0.0
        %1565 = vmatprep.subr.mxu0 0.0
        %1566 = vmatpush1.msra.mxu0 0.0
        %1567 = vmatprep.subr.mxu0 0.0
        %1568 = vmatpush1.msra.mxu0 0.0
        %1569 = vmatprep.subr.mxu0 0.0
        %1570 = vmatpush1.msra.mxu0 0.0
        %1571 = vmatprep.subr.mxu0 0.0
        %1572 = vmatpush1.msra.mxu0 0.0
        %1573 = vmatprep.mubr.f32.mxu0 0.0
        %1574 = vmatmul.mubr.f32.gmra.mrb[0].mxu0 %v1353
        %v1575 = vpop.f32.mrb[0].mxu0
        %v1576 = vadd.f32 %v843, %v1575
        %v1577 = vpop.f32.mrb[0].mxu0
        %1578 = vdwg.mxu0
        %v1579 = vmul.f32 %v1501, %v1576
        %v1580 = vadd.f32 %v1351, %v1579
        %v1581 = vtanh.pop %v1580
        %v1582 = vsub.f32 1.0, %v1508
        %v1583 = vmul.f32 %v1582, %v1581
        %v1584 = vmul.f32 %v1508, %v1338
        %v1585 = vadd.f32 %v1583, %v1584
        %s1586 = scalar_lea.vmem %s376, %s1343
        %1587 = vst.msk [vmem:[%s1586] sm:$0xff] %vm400, %v1585
        %s1588 = smul.u32 %s847, 3
        %s1589 = sadd.s32 %s845, %s1588
        %s1590 = smul.u32 %s1589, 8
        %s1591 = scalar_lea.vmem [#allocation2], %s1590
        %v1592 = vld [vmem:[%s1591] sm:$0xff]
        %s1593 = sadd.s32 %s1590, 64
        %s1594 = scalar_lea.vmem [#allocation2], %s1593
        %v1595 = vld [vmem:[%s1594] sm:$0xff]
        %s1596 = sadd.s32 %s1590, 128
        %s1597 = scalar_lea.vmem [#allocation2], %s1596
        %v1598 = vld [vmem:[%s1597] sm:$0xff]
        %v1600 = vsel %vm400, %v1585, 0
        %1602 = vmatprep.subr.mxu0 0.0
        %1603 = vmatpush1.msra.mxu0 %v823
        %1604 = vmatprep.subr.mxu0 0.0
        %1605 = vmatpush1.msra.mxu0 %v824
        %1606 = vmatprep.subr.mxu0 0.0
        %1607 = vmatpush1.msra.mxu0 %v825
        %1608 = vmatprep.subr.mxu0 0.0
        %1609 = vmatpush1.msra.mxu0 %v826
        %1610 = vmatprep.subr.mxu0 0.0
        %1611 = vmatpush1.msra.mxu0 0.0
        %1612 = vmatprep.subr.mxu0 0.0
        %1613 = vmatpush1.msra.mxu0 0.0
        %1614 = vmatprep.subr.mxu0 0.0
        %1615 = vmatpush1.msra.mxu0 0.0
        %1616 = vmatprep.subr.mxu0 0.0
        %1617 = vmatpush1.msra.mxu0 0.0
        %1618 = vmatprep.subr.mxu0 0.0
        %1619 = vmatpush1.msra.mxu0 0.0
        %1620 = vmatprep.subr.mxu0 0.0
        %1621 = vmatpush1.msra.mxu0 0.0
        %1622 = vmatprep.subr.mxu0 0.0
        %1623 = vmatpush1.msra.mxu0 0.0
        %1624 = vmatprep.subr.mxu0 0.0
        %1625 = vmatpush1.msra.mxu0 0.0
        %1626 = vmatprep.subr.mxu0 0.0
        %1627 = vmatpush1.msra.mxu0 0.0
        %1628 = vmatprep.subr.mxu0 0.0
        %1629 = vmatpush1.msra.mxu0 0.0
        %1630 = vmatprep.subr.mxu0 0.0
        %1631 = vmatpush1.msra.mxu0 0.0
        %1632 = vmatprep.subr.mxu0 0.0
        %1633 = vmatpush1.msra.mxu0 0.0
        %1634 = vmatprep.subr.mxu0 0.0
        %1635 = vmatpush1.msra.mxu0 0.0
        %1636 = vmatprep.subr.mxu0 0.0
        %1637 = vmatpush1.msra.mxu0 0.0
        %1638 = vmatprep.subr.mxu0 0.0
        %1639 = vmatpush1.msra.mxu0 0.0
        %1640 = vmatprep.subr.mxu0 0.0
        %1641 = vmatpush1.msra.mxu0 0.0
        %1642 = vmatprep.subr.mxu0 0.0
        %1643 = vmatpush1.msra.mxu0 0.0
        %1644 = vmatprep.subr.mxu0 0.0
        %1645 = vmatpush1.msra.mxu0 0.0
        %1646 = vmatprep.subr.mxu0 0.0
        %1647 = vmatpush1.msra.mxu0 0.0
        %1648 = vmatprep.subr.mxu0 0.0
        %1649 = vmatpush1.msra.mxu0 0.0
        %1650 = vmatprep.subr.mxu0 0.0
        %1651 = vmatpush1.msra.mxu0 0.0
        %1652 = vmatprep.subr.mxu0 0.0
        %1653 = vmatpush1.msra.mxu0 0.0
        %1654 = vmatprep.subr.mxu0 0.0
        %1655 = vmatpush1.msra.mxu0 0.0
        %1656 = vmatprep.subr.mxu0 0.0
        %1657 = vmatpush1.msra.mxu0 0.0
        %1658 = vmatprep.subr.mxu0 0.0
        %1659 = vmatpush1.msra.mxu0 0.0
        %1660 = vmatprep.subr.mxu0 0.0
        %1661 = vmatpush1.msra.mxu0 0.0
        %1662 = vmatprep.subr.mxu0 0.0
        %1663 = vmatpush1.msra.mxu0 0.0
        %1664 = vmatprep.subr.mxu0 0.0
        %1665 = vmatpush1.msra.mxu0 0.0
        %1666 = vmatprep.mubr.f32.mxu0 0.0
        %1667 = vmatmul.mubr.f32.gmra.mrb[0].mxu0 %v1600
        %v1668 = vpop.f32.mrb[0].mxu0
        %v1669 = vadd.f32 0.0, %v1668
        %v1670 = vpop.f32.mrb[0].mxu0
        %1671 = vdwg.mxu0
        %1672 = vmatprep.subr.mxu0 0.0
        %1673 = vmatpush1.msra.mxu0 %v828
        %1674 = vmatprep.subr.mxu0 0.0
        %1675 = vmatpush1.msra.mxu0 %v829
        %1676 = vmatprep.subr.mxu0 0.0
        %1677 = vmatpush1.msra.mxu0 %v830
        %1678 = vmatprep.subr.mxu0 0.0
        %1679 = vmatpush1.msra.mxu0 %v831
        %1680 = vmatprep.subr.mxu0 0.0
        %1681 = vmatpush1.msra.mxu0 0.0
        %1682 = vmatprep.subr.mxu0 0.0
        %1683 = vmatpush1.msra.mxu0 0.0
        %1684 = vmatprep.subr.mxu0 0.0
        %1685 = vmatpush1.msra.mxu0 0.0
        %1686 = vmatprep.subr.mxu0 0.0
        %1687 = vmatpush1.msra.mxu0 0.0
        %1688 = vmatprep.subr.mxu0 0.0
        %1689 = vmatpush1.msra.mxu0 0.0
        %1690 = vmatprep.subr.mxu0 0.0
        %1691 = vmatpush1.msra.mxu0 0.0
        %1692 = vmatprep.subr.mxu0 0.0
        %1693 = vmatpush1.msra.mxu0 0.0
        %1694 = vmatprep.subr.mxu0 0.0
        %1695 = vmatpush1.msra.mxu0 0.0
        %1696 = vmatprep.subr.mxu0 0.0
        %1697 = vmatpush1.msra.mxu0 0.0
        %1698 = vmatprep.subr.mxu0 0.0
        %1699 = vmatpush1.msra.mxu0 0.0
        %1700 = vmatprep.subr.mxu0 0.0
        %1701 = vmatpush1.msra.mxu0 0.0
        %1702 = vmatprep.subr.mxu0 0.0
        %1703 = vmatpush1.msra.mxu0 0.0
        %1704 = vmatprep.subr.mxu0 0.0
        %1705 = vmatpush1.msra.mxu0 0.0
        %1706 = vmatprep.subr.mxu0 0.0
        %1707 = vmatpush1.msra.mxu0 0.0
        %1708 = vmatprep.subr.mxu0 0.0
        %1709 = vmatpush1.msra.mxu0 0.0
        %1710 = vmatprep.subr.mxu0 0.0
        %1711 = vmatpush1.msra.mxu0 0.0
        %1712 = vmatprep.subr.mxu0 0.0
        %1713 = vmatpush1.msra.mxu0 0.0
        %1714 = vmatprep.subr.mxu0 0.0
        %1715 = vmatpush1.msra.mxu0 0.0
        %1716 = vmatprep.subr.mxu0 0.0
        %1717 = vmatpush1.msra.mxu0 0.0
        %1718 = vmatprep.subr.mxu0 0.0
        %1719 = vmatpush1.msra.mxu0 0.0
        %1720 = vmatprep.subr.mxu0 0.0
        %1721 = vmatpush1.msra.mxu0 0.0
        %1722 = vmatprep.subr.mxu0 0.0
        %1723 = vmatpush1.msra.mxu0 0.0
        %1724 = vmatprep.subr.mxu0 0.0
        %1725 = vmatpush1.msra.mxu0 0.0
        %1726 = vmatprep.subr.mxu0 0.0
        %1727 = vmatpush1.msra.mxu0 0.0
        %1728 = vmatprep.subr.mxu0 0.0
        %1729 = vmatpush1.msra.mxu0 0.0
        %1730 = vmatprep.subr.mxu0 0.0
        %1731 = vmatpush1.msra.mxu0 0.0
        %1732 = vmatprep.subr.mxu0 0.0
        %1733 = vmatpush1.msra.mxu0 0.0
        %1734 = vmatprep.subr.mxu0 0.0
        %1735 = vmatpush1.msra.mxu0 0.0
        %1736 = vmatprep.mubr.f32.mxu0 0.0
        %1737 = vmatmul.mubr.f32.gmra.mrb[0].mxu0 %v1600
        %v1738 = vpop.f32.mrb[0].mxu0
        %v1739 = vadd.f32 0.0, %v1738
        %v1740 = vpop.f32.mrb[0].mxu0
        %1741 = vdwg.mxu0
        %v1742 = vadd.f32 %v1592, %v1669
        %v1743 = vxor.u32 %v1742, 2147483648
        %v1744 = vmul.f32 %v1743, 1.442695
        %v1745 = vpow.pop %v1744
        %v1746 = vadd.f32 %v1745, 1.0
        %v1747 = vrcp.pop %v1746
        %v1748 = vmul.f32 1.0, %v1747
        %v1749 = vadd.f32 %v1595, %v1739
        %v1750 = vxor.u32 %v1749, 2147483648
        %v1751 = vmul.f32 %v1750, 1.442695
        %v1752 = vpow.pop %v1751
        %v1753 = vadd.f32 %v1752, 1.0
        %v1754 = vrcp.pop %v1753
        %v1755 = vmul.f32 1.0, %v1754
        %1756 = vmatprep.subr.mxu0 0.0
        %1757 = vmatpush1.msra.mxu0 %v833
        %1758 = vmatprep.subr.mxu0 0.0
        %1759 = vmatpush1.msra.mxu0 %v834
        %1760 = vmatprep.subr.mxu0 0.0
        %1761 = vmatpush1.msra.mxu0 %v835
        %1762 = vmatprep.subr.mxu0 0.0
        %1763 = vmatpush1.msra.mxu0 %v836
        %1764 = vmatprep.subr.mxu0 0.0
        %1765 = vmatpush1.msra.mxu0 0.0
        %1766 = vmatprep.subr.mxu0 0.0
        %1767 = vmatpush1.msra.mxu0 0.0
        %1768 = vmatprep.subr.mxu0 0.0
        %1769 = vmatpush1.msra.mxu0 0.0
        %1770 = vmatprep.subr.mxu0 0.0
        %1771 = vmatpush1.msra.mxu0 0.0
        %1772 = vmatprep.subr.mxu0 0.0
        %1773 = vmatpush1.msra.mxu0 0.0
        %1774 = vmatprep.subr.mxu0 0.0
        %1775 = vmatpush1.msra.mxu0 0.0
        %1776 = vmatprep.subr.mxu0 0.0
        %1777 = vmatpush1.msra.mxu0 0.0
        %1778 = vmatprep.subr.mxu0 0.0
        %1779 = vmatpush1.msra.mxu0 0.0
        %1780 = vmatprep.subr.mxu0 0.0
        %1781 = vmatpush1.msra.mxu0 0.0
        %1782 = vmatprep.subr.mxu0 0.0
        %1783 = vmatpush1.msra.mxu0 0.0
        %1784 = vmatprep.subr.mxu0 0.0
        %1785 = vmatpush1.msra.mxu0 0.0
        %1786 = vmatprep.subr.mxu0 0.0
        %1787 = vmatpush1.msra.mxu0 0.0
        %1788 = vmatprep.subr.mxu0 0.0
        %1789 = vmatpush1.msra.mxu0 0.0
        %1790 = vmatprep.subr.mxu0 0.0
        %1791 = vmatpush1.msra.mxu0 0.0
        %1792 = vmatprep.subr.mxu0 0.0
        %1793 = vmatpush1.msra.mxu0 0.0
        %1794 = vmatprep.subr.mxu0 0.0
        %1795 = vmatpush1.msra.mxu0 0.0
        %1796 = vmatprep.subr.mxu0 0.0
        %1797 = vmatpush1.msra.mxu0 0.0
        %1798 = vmatprep.subr.mxu0 0.0
        %1799 = vmatpush1.msra.mxu0 0.0
        %1800 = vmatprep.subr.mxu0 0.0
        %1801 = vmatpush1.msra.mxu0 0.0
        %1802 = vmatprep.subr.mxu0 0.0
        %1803 = vmatpush1.msra.mxu0 0.0
        %1804 = vmatprep.subr.mxu0 0.0
        %1805 = vmatpush1.msra.mxu0 0.0
        %1806 = vmatprep.subr.mxu0 0.0
        %1807 = vmatpush1.msra.mxu0 0.0
        %1808 = vmatprep.subr.mxu0 0.0
        %1809 = vmatpush1.msra.mxu0 0.0
        %1810 = vmatprep.subr.mxu0 0.0
        %1811 = vmatpush1.msra.mxu0 0.0
        %1812 = vmatprep.subr.mxu0 0.0
        %1813 = vmatpush1.msra.mxu0 0.0
        %1814 = vmatprep.subr.mxu0 0.0
        %1815 = vmatpush1.msra.mxu0 0.0
        %1816 = vmatprep.subr.mxu0 0.0
        %1817 = vmatpush1.msra.mxu0 0.0
        %1818 = vmatprep.subr.mxu0 0.0
        %1819 = vmatpush1.msra.mxu0 0.0
        %1820 = vmatprep.mubr.f32.mxu0 0.0
        %1821 = vmatmul.mubr.f32.gmra.mrb[0].mxu0 %v1600
        %v1822 = vpop.f32.mrb[0].mxu0
        %v1823 = vadd.f32 %v843, %v1822
        %v1824 = vpop.f32.mrb[0].mxu0
        %1825 = vdwg.mxu0
        %v1826 = vmul.f32 %v1748, %v1823
        %v1827 = vadd.f32 %v1598, %v1826
        %v1828 = vtanh.pop %v1827
        %v1829 = vsub.f32 1.0, %v1755
        %v1830 = vmul.f32 %v1829, %v1828
        %v1831 = vmul.f32 %v1755, %v1585
        %v1832 = vadd.f32 %v1830, %v1831
        %s1833 = scalar_lea.vmem %s376, %s1590
        %1834 = vst.msk [vmem:[%s1833] sm:$0xff] %vm400, %v1832
        %s1835 = smul.u32 %s847, 4
        %s1836 = sadd.s32 %s845, %s1835
        %s1837 = smul.u32 %s1836, 8
        %s1838 = scalar_lea.vmem [#allocation2], %s1837
        %v1839 = vld [vmem:[%s1838] sm:$0xff]
        %s1840 = sadd.s32 %s1837, 64
        %s1841 = scalar_lea.vmem [#allocation2], %s1840
        %v1842 = vld [vmem:[%s1841] sm:$0xff]
        %s1843 = sadd.s32 %s1837, 128
        %s1844 = scalar_lea.vmem [#allocation2], %s1843
        %v1845 = vld [vmem:[%s1844] sm:$0xff]
        %v1847 = vsel %vm400, %v1832, 0
        %1849 = vmatprep.subr.mxu0 0.0
        %1850 = vmatpush1.msra.mxu0 %v823
        %1851 = vmatprep.subr.mxu0 0.0
        %1852 = vmatpush1.msra.mxu0 %v824
        %1853 = vmatprep.subr.mxu0 0.0
        %1854 = vmatpush1.msra.mxu0 %v825
        %1855 = vmatprep.subr.mxu0 0.0
        %1856 = vmatpush1.msra.mxu0 %v826
        %1857 = vmatprep.subr.mxu0 0.0
        %1858 = vmatpush1.msra.mxu0 0.0
        %1859 = vmatprep.subr.mxu0 0.0
        %1860 = vmatpush1.msra.mxu0 0.0
        %1861 = vmatprep.subr.mxu0 0.0
        %1862 = vmatpush1.msra.mxu0 0.0
        %1863 = vmatprep.subr.mxu0 0.0
        %1864 = vmatpush1.msra.mxu0 0.0
        %1865 = vmatprep.subr.mxu0 0.0
        %1866 = vmatpush1.msra.mxu0 0.0
        %1867 = vmatprep.subr.mxu0 0.0
        %1868 = vmatpush1.msra.mxu0 0.0
        %1869 = vmatprep.subr.mxu0 0.0
        %1870 = vmatpush1.msra.mxu0 0.0
        %1871 = vmatprep.subr.mxu0 0.0
        %1872 = vmatpush1.msra.mxu0 0.0
        %1873 = vmatprep.subr.mxu0 0.0
        %1874 = vmatpush1.msra.mxu0 0.0
        %1875 = vmatprep.subr.mxu0 0.0
        %1876 = vmatpush1.msra.mxu0 0.0
        %1877 = vmatprep.subr.mxu0 0.0
        %1878 = vmatpush1.msra.mxu0 0.0
        %1879 = vmatprep.subr.mxu0 0.0
        %1880 = vmatpush1.msra.mxu0 0.0
        %1881 = vmatprep.subr.mxu0 0.0
        %1882 = vmatpush1.msra.mxu0 0.0
        %1883 = vmatprep.subr.mxu0 0.0
        %1884 = vmatpush1.msra.mxu0 0.0
        %1885 = vmatprep.subr.mxu0 0.0
        %1886 = vmatpush1.msra.mxu0 0.0
        %1887 = vmatprep.subr.mxu0 0.0
        %1888 = vmatpush1.msra.mxu0 0.0
        %1889 = vmatprep.subr.mxu0 0.0
        %1890 = vmatpush1.msra.mxu0 0.0
        %1891 = vmatprep.subr.mxu0 0.0
        %1892 = vmatpush1.msra.mxu0 0.0
        %1893 = vmatprep.subr.mxu0 0.0
        %1894 = vmatpush1.msra.mxu0 0.0
        %1895 = vmatprep.subr.mxu0 0.0
        %1896 = vmatpush1.msra.mxu0 0.0
        %1897 = vmatprep.subr.mxu0 0.0
        %1898 = vmatpush1.msra.mxu0 0.0
        %1899 = vmatprep.subr.mxu0 0.0
        %1900 = vmatpush1.msra.mxu0 0.0
        %1901 = vmatprep.subr.mxu0 0.0
        %1902 = vmatpush1.msra.mxu0 0.0
        %1903 = vmatprep.subr.mxu0 0.0
        %1904 = vmatpush1.msra.mxu0 0.0
        %1905 = vmatprep.subr.mxu0 0.0
        %1906 = vmatpush1.msra.mxu0 0.0
        %1907 = vmatprep.subr.mxu0 0.0
        %1908 = vmatpush1.msra.mxu0 0.0
        %1909 = vmatprep.subr.mxu0 0.0
        %1910 = vmatpush1.msra.mxu0 0.0
        %1911 = vmatprep.subr.mxu0 0.0
        %1912 = vmatpush1.msra.mxu0 0.0
        %1913 = vmatprep.mubr.f32.mxu0 0.0
        %1914 = vmatmul.mubr.f32.gmra.mrb[0].mxu0 %v1847
        %v1915 = vpop.f32.mrb[0].mxu0
        %v1916 = vadd.f32 0.0, %v1915
        %v1917 = vpop.f32.mrb[0].mxu0
        %1918 = vdwg.mxu0
        %1919 = vmatprep.subr.mxu0 0.0
        %1920 = vmatpush1.msra.mxu0 %v828
        %1921 = vmatprep.subr.mxu0 0.0
        %1922 = vmatpush1.msra.mxu0 %v829
        %1923 = vmatprep.subr.mxu0 0.0
        %1924 = vmatpush1.msra.mxu0 %v830
        %1925 = vmatprep.subr.mxu0 0.0
        %1926 = vmatpush1.msra.mxu0 %v831
        %1927 = vmatprep.subr.mxu0 0.0
        %1928 = vmatpush1.msra.mxu0 0.0
        %1929 = vmatprep.subr.mxu0 0.0
        %1930 = vmatpush1.msra.mxu0 0.0
        %1931 = vmatprep.subr.mxu0 0.0
        %1932 = vmatpush1.msra.mxu0 0.0
        %1933 = vmatprep.subr.mxu0 0.0
        %1934 = vmatpush1.msra.mxu0 0.0
        %1935 = vmatprep.subr.mxu0 0.0
        %1936 = vmatpush1.msra.mxu0 0.0
        %1937 = vmatprep.subr.mxu0 0.0
        %1938 = vmatpush1.msra.mxu0 0.0
        %1939 = vmatprep.subr.mxu0 0.0
        %1940 = vmatpush1.msra.mxu0 0.0
        %1941 = vmatprep.subr.mxu0 0.0
        %1942 = vmatpush1.msra.mxu0 0.0
        %1943 = vmatprep.subr.mxu0 0.0
        %1944 = vmatpush1.msra.mxu0 0.0
        %1945 = vmatprep.subr.mxu0 0.0
        %1946 = vmatpush1.msra.mxu0 0.0
        %1947 = vmatprep.subr.mxu0 0.0
        %1948 = vmatpush1.msra.mxu0 0.0
        %1949 = vmatprep.subr.mxu0 0.0
        %1950 = vmatpush1.msra.mxu0 0.0
        %1951 = vmatprep.subr.mxu0 0.0
        %1952 = vmatpush1.msra.mxu0 0.0
        %1953 = vmatprep.subr.mxu0 0.0
        %1954 = vmatpush1.msra.mxu0 0.0
        %1955 = vmatprep.subr.mxu0 0.0
        %1956 = vmatpush1.msra.mxu0 0.0
        %1957 = vmatprep.subr.mxu0 0.0
        %1958 = vmatpush1.msra.mxu0 0.0
        %1959 = vmatprep.subr.mxu0 0.0
        %1960 = vmatpush1.msra.mxu0 0.0
        %1961 = vmatprep.subr.mxu0 0.0
        %1962 = vmatpush1.msra.mxu0 0.0
        %1963 = vmatprep.subr.mxu0 0.0
        %1964 = vmatpush1.msra.mxu0 0.0
        %1965 = vmatprep.subr.mxu0 0.0
        %1966 = vmatpush1.msra.mxu0 0.0
        %1967 = vmatprep.subr.mxu0 0.0
        %1968 = vmatpush1.msra.mxu0 0.0
        %1969 = vmatprep.subr.mxu0 0.0
        %1970 = vmatpush1.msra.mxu0 0.0
        %1971 = vmatprep.subr.mxu0 0.0
        %1972 = vmatpush1.msra.mxu0 0.0
        %1973 = vmatprep.subr.mxu0 0.0
        %1974 = vmatpush1.msra.mxu0 0.0
        %1975 = vmatprep.subr.mxu0 0.0
        %1976 = vmatpush1.msra.mxu0 0.0
        %1977 = vmatprep.subr.mxu0 0.0
        %1978 = vmatpush1.msra.mxu0 0.0
        %1979 = vmatprep.subr.mxu0 0.0
        %1980 = vmatpush1.msra.mxu0 0.0
        %1981 = vmatprep.subr.mxu0 0.0
        %1982 = vmatpush1.msra.mxu0 0.0
        %1983 = vmatprep.mubr.f32.mxu0 0.0
        %1984 = vmatmul.mubr.f32.gmra.mrb[0].mxu0 %v1847
        %v1985 = vpop.f32.mrb[0].mxu0
        %v1986 = vadd.f32 0.0, %v1985
        %v1987 = vpop.f32.mrb[0].mxu0
        %1988 = vdwg.mxu0
        %v1989 = vadd.f32 %v1839, %v1916
        %v1990 = vxor.u32 %v1989, 2147483648
        %v1991 = vmul.f32 %v1990, 1.442695
        %v1992 = vpow.pop %v1991
        %v1993 = vadd.f32 %v1992, 1.0
        %v1994 = vrcp.pop %v1993
        %v1995 = vmul.f32 1.0, %v1994
        %v1996 = vadd.f32 %v1842, %v1986
        %v1997 = vxor.u32 %v1996, 2147483648
        %v1998 = vmul.f32 %v1997, 1.442695
        %v1999 = vpow.pop %v1998
        %v2000 = vadd.f32 %v1999, 1.0
        %v2001 = vrcp.pop %v2000
        %v2002 = vmul.f32 1.0, %v2001
        %2003 = vmatprep.subr.mxu0 0.0
        %2004 = vmatpush1.msra.mxu0 %v833
        %2005 = vmatprep.subr.mxu0 0.0
        %2006 = vmatpush1.msra.mxu0 %v834
        %2007 = vmatprep.subr.mxu0 0.0
        %2008 = vmatpush1.msra.mxu0 %v835
        %2009 = vmatprep.subr.mxu0 0.0
        %2010 = vmatpush1.msra.mxu0 %v836
        %2011 = vmatprep.subr.mxu0 0.0
        %2012 = vmatpush1.msra.mxu0 0.0
        %2013 = vmatprep.subr.mxu0 0.0
        %2014 = vmatpush1.msra.mxu0 0.0
        %2015 = vmatprep.subr.mxu0 0.0
        %2016 = vmatpush1.msra.mxu0 0.0
        %2017 = vmatprep.subr.mxu0 0.0
        %2018 = vmatpush1.msra.mxu0 0.0
        %2019 = vmatprep.subr.mxu0 0.0
        %2020 = vmatpush1.msra.mxu0 0.0
        %2021 = vmatprep.subr.mxu0 0.0
        %2022 = vmatpush1.msra.mxu0 0.0
        %2023 = vmatprep.subr.mxu0 0.0
        %2024 = vmatpush1.msra.mxu0 0.0
        %2025 = vmatprep.subr.mxu0 0.0
        %2026 = vmatpush1.msra.mxu0 0.0
        %2027 = vmatprep.subr.mxu0 0.0
        %2028 = vmatpush1.msra.mxu0 0.0
        %2029 = vmatprep.subr.mxu0 0.0
        %2030 = vmatpush1.msra.mxu0 0.0
        %2031 = vmatprep.subr.mxu0 0.0
        %2032 = vmatpush1.msra.mxu0 0.0
        %2033 = vmatprep.subr.mxu0 0.0
        %2034 = vmatpush1.msra.mxu0 0.0
        %2035 = vmatprep.subr.mxu0 0.0
        %2036 = vmatpush1.msra.mxu0 0.0
        %2037 = vmatprep.subr.mxu0 0.0
        %2038 = vmatpush1.msra.mxu0 0.0
        %2039 = vmatprep.subr.mxu0 0.0
        %2040 = vmatpush1.msra.mxu0 0.0
        %2041 = vmatprep.subr.mxu0 0.0
        %2042 = vmatpush1.msra.mxu0 0.0
        %2043 = vmatprep.subr.mxu0 0.0
        %2044 = vmatpush1.msra.mxu0 0.0
        %2045 = vmatprep.subr.mxu0 0.0
        %2046 = vmatpush1.msra.mxu0 0.0
        %2047 = vmatprep.subr.mxu0 0.0
        %2048 = vmatpush1.msra.mxu0 0.0
        %2049 = vmatprep.subr.mxu0 0.0
        %2050 = vmatpush1.msra.mxu0 0.0
        %2051 = vmatprep.subr.mxu0 0.0
        %2052 = vmatpush1.msra.mxu0 0.0
        %2053 = vmatprep.subr.mxu0 0.0
        %2054 = vmatpush1.msra.mxu0 0.0
        %2055 = vmatprep.subr.mxu0 0.0
        %2056 = vmatpush1.msra.mxu0 0.0
        %2057 = vmatprep.subr.mxu0 0.0
        %2058 = vmatpush1.msra.mxu0 0.0
        %2059 = vmatprep.subr.mxu0 0.0
        %2060 = vmatpush1.msra.mxu0 0.0
        %2061 = vmatprep.subr.mxu0 0.0
        %2062 = vmatpush1.msra.mxu0 0.0
        %2063 = vmatprep.subr.mxu0 0.0
        %2064 = vmatpush1.msra.mxu0 0.0
        %2065 = vmatprep.subr.mxu0 0.0
        %2066 = vmatpush1.msra.mxu0 0.0
        %2067 = vmatprep.mubr.f32.mxu0 0.0
        %2068 = vmatmul.mubr.f32.gmra.mrb[0].mxu0 %v1847
        %v2069 = vpop.f32.mrb[0].mxu0
        %v2070 = vadd.f32 %v843, %v2069
        %v2071 = vpop.f32.mrb[0].mxu0
        %2072 = vdwg.mxu0
        %v2073 = vmul.f32 %v1995, %v2070
        %v2074 = vadd.f32 %v1845, %v2073
        %v2075 = vtanh.pop %v2074
        %v2076 = vsub.f32 1.0, %v2002
        %v2077 = vmul.f32 %v2076, %v2075
        %v2078 = vmul.f32 %v2002, %v1832
        %v2079 = vadd.f32 %v2077, %v2078
        %s2080 = scalar_lea.vmem %s376, %s1837
        %2081 = vst.msk [vmem:[%s2080] sm:$0xff] %vm400, %v2079
        %s2082 = smul.u32 %s847, 5
        %s2083 = sadd.s32 %s845, %s2082
        %s2084 = smul.u32 %s2083, 8
        %s2085 = scalar_lea.vmem [#allocation2], %s2084
        %v2086 = vld [vmem:[%s2085] sm:$0xff]
        %s2087 = sadd.s32 %s2084, 64
        %s2088 = scalar_lea.vmem [#allocation2], %s2087
        %v2089 = vld [vmem:[%s2088] sm:$0xff]
        %s2090 = sadd.s32 %s2084, 128
        %s2091 = scalar_lea.vmem [#allocation2], %s2090
        %v2092 = vld [vmem:[%s2091] sm:$0xff]
        %v2094 = vsel %vm400, %v2079, 0
        %2096 = vmatprep.subr.mxu0 0.0
        %2097 = vmatpush1.msra.mxu0 %v823
        %2098 = vmatprep.subr.mxu0 0.0
        %2099 = vmatpush1.msra.mxu0 %v824
        %2100 = vmatprep.subr.mxu0 0.0
        %2101 = vmatpush1.msra.mxu0 %v825
        %2102 = vmatprep.subr.mxu0 0.0
        %2103 = vmatpush1.msra.mxu0 %v826
        %2104 = vmatprep.subr.mxu0 0.0
        %2105 = vmatpush1.msra.mxu0 0.0
        %2106 = vmatprep.subr.mxu0 0.0
        %2107 = vmatpush1.msra.mxu0 0.0
        %2108 = vmatprep.subr.mxu0 0.0
        %2109 = vmatpush1.msra.mxu0 0.0
        %2110 = vmatprep.subr.mxu0 0.0
        %2111 = vmatpush1.msra.mxu0 0.0
        %2112 = vmatprep.subr.mxu0 0.0
        %2113 = vmatpush1.msra.mxu0 0.0
        %2114 = vmatprep.subr.mxu0 0.0
        %2115 = vmatpush1.msra.mxu0 0.0
        %2116 = vmatprep.subr.mxu0 0.0
        %2117 = vmatpush1.msra.mxu0 0.0
        %2118 = vmatprep.subr.mxu0 0.0
        %2119 = vmatpush1.msra.mxu0 0.0
        %2120 = vmatprep.subr.mxu0 0.0
        %2121 = vmatpush1.msra.mxu0 0.0
        %2122 = vmatprep.subr.mxu0 0.0
        %2123 = vmatpush1.msra.mxu0 0.0
        %2124 = vmatprep.subr.mxu0 0.0
        %2125 = vmatpush1.msra.mxu0 0.0
        %2126 = vmatprep.subr.mxu0 0.0
        %2127 = vmatpush1.msra.mxu0 0.0
        %2128 = vmatprep.subr.mxu0 0.0
        %2129 = vmatpush1.msra.mxu0 0.0
        %2130 = vmatprep.subr.mxu0 0.0
        %2131 = vmatpush1.msra.mxu0 0.0
        %2132 = vmatprep.subr.mxu0 0.0
        %2133 = vmatpush1.msra.mxu0 0.0
        %2134 = vmatprep.subr.mxu0 0.0
        %2135 = vmatpush1.msra.mxu0 0.0
        %2136 = vmatprep.subr.mxu0 0.0
        %2137 = vmatpush1.msra.mxu0 0.0
        %2138 = vmatprep.subr.mxu0 0.0
        %2139 = vmatpush1.msra.mxu0 0.0
        %2140 = vmatprep.subr.mxu0 0.0
        %2141 = vmatpush1.msra.mxu0 0.0
        %2142 = vmatprep.subr.mxu0 0.0
        %2143 = vmatpush1.msra.mxu0 0.0
        %2144 = vmatprep.subr.mxu0 0.0
        %2145 = vmatpush1.msra.mxu0 0.0
        %2146 = vmatprep.subr.mxu0 0.0
        %2147 = vmatpush1.msra.mxu0 0.0
        %2148 = vmatprep.subr.mxu0 0.0
        %2149 = vmatpush1.msra.mxu0 0.0
        %2150 = vmatprep.subr.mxu0 0.0
        %2151 = vmatpush1.msra.mxu0 0.0
        %2152 = vmatprep.subr.mxu0 0.0
        %2153 = vmatpush1.msra.mxu0 0.0
        %2154 = vmatprep.subr.mxu0 0.0
        %2155 = vmatpush1.msra.mxu0 0.0
        %2156 = vmatprep.subr.mxu0 0.0
        %2157 = vmatpush1.msra.mxu0 0.0
        %2158 = vmatprep.subr.mxu0 0.0
        %2159 = vmatpush1.msra.mxu0 0.0
        %2160 = vmatprep.mubr.f32.mxu0 0.0
        %2161 = vmatmul.mubr.f32.gmra.mrb[0].mxu0 %v2094
        %v2162 = vpop.f32.mrb[0].mxu0
        %v2163 = vadd.f32 0.0, %v2162
        %v2164 = vpop.f32.mrb[0].mxu0
        %2165 = vdwg.mxu0
        %2166 = vmatprep.subr.mxu0 0.0
        %2167 = vmatpush1.msra.mxu0 %v828
        %2168 = vmatprep.subr.mxu0 0.0
        %2169 = vmatpush1.msra.mxu0 %v829
        %2170 = vmatprep.subr.mxu0 0.0
        %2171 = vmatpush1.msra.mxu0 %v830
        %2172 = vmatprep.subr.mxu0 0.0
        %2173 = vmatpush1.msra.mxu0 %v831
        %2174 = vmatprep.subr.mxu0 0.0
        %2175 = vmatpush1.msra.mxu0 0.0
        %2176 = vmatprep.subr.mxu0 0.0
        %2177 = vmatpush1.msra.mxu0 0.0
        %2178 = vmatprep.subr.mxu0 0.0
        %2179 = vmatpush1.msra.mxu0 0.0
        %2180 = vmatprep.subr.mxu0 0.0
        %2181 = vmatpush1.msra.mxu0 0.0
        %2182 = vmatprep.subr.mxu0 0.0
        %2183 = vmatpush1.msra.mxu0 0.0
        %2184 = vmatprep.subr.mxu0 0.0
        %2185 = vmatpush1.msra.mxu0 0.0
        %2186 = vmatprep.subr.mxu0 0.0
        %2187 = vmatpush1.msra.mxu0 0.0
        %2188 = vmatprep.subr.mxu0 0.0
        %2189 = vmatpush1.msra.mxu0 0.0
        %2190 = vmatprep.subr.mxu0 0.0
        %2191 = vmatpush1.msra.mxu0 0.0
        %2192 = vmatprep.subr.mxu0 0.0
        %2193 = vmatpush1.msra.mxu0 0.0
        %2194 = vmatprep.subr.mxu0 0.0
        %2195 = vmatpush1.msra.mxu0 0.0
        %2196 = vmatprep.subr.mxu0 0.0
        %2197 = vmatpush1.msra.mxu0 0.0
        %2198 = vmatprep.subr.mxu0 0.0
        %2199 = vmatpush1.msra.mxu0 0.0
        %2200 = vmatprep.subr.mxu0 0.0
        %2201 = vmatpush1.msra.mxu0 0.0
        %2202 = vmatprep.subr.mxu0 0.0
        %2203 = vmatpush1.msra.mxu0 0.0
        %2204 = vmatprep.subr.mxu0 0.0
        %2205 = vmatpush1.msra.mxu0 0.0
        %2206 = vmatprep.subr.mxu0 0.0
        %2207 = vmatpush1.msra.mxu0 0.0
        %2208 = vmatprep.subr.mxu0 0.0
        %2209 = vmatpush1.msra.mxu0 0.0
        %2210 = vmatprep.subr.mxu0 0.0
        %2211 = vmatpush1.msra.mxu0 0.0
        %2212 = vmatprep.subr.mxu0 0.0
        %2213 = vmatpush1.msra.mxu0 0.0
        %2214 = vmatprep.subr.mxu0 0.0
        %2215 = vmatpush1.msra.mxu0 0.0
        %2216 = vmatprep.subr.mxu0 0.0
        %2217 = vmatpush1.msra.mxu0 0.0
        %2218 = vmatprep.subr.mxu0 0.0
        %2219 = vmatpush1.msra.mxu0 0.0
        %2220 = vmatprep.subr.mxu0 0.0
        %2221 = vmatpush1.msra.mxu0 0.0
        %2222 = vmatprep.subr.mxu0 0.0
        %2223 = vmatpush1.msra.mxu0 0.0
        %2224 = vmatprep.subr.mxu0 0.0
        %2225 = vmatpush1.msra.mxu0 0.0
        %2226 = vmatprep.subr.mxu0 0.0
        %2227 = vmatpush1.msra.mxu0 0.0
        %2228 = vmatprep.subr.mxu0 0.0
        %2229 = vmatpush1.msra.mxu0 0.0
        %2230 = vmatprep.mubr.f32.mxu0 0.0
        %2231 = vmatmul.mubr.f32.gmra.mrb[0].mxu0 %v2094
        %v2232 = vpop.f32.mrb[0].mxu0
        %v2233 = vadd.f32 0.0, %v2232
        %v2234 = vpop.f32.mrb[0].mxu0
        %2235 = vdwg.mxu0
        %v2236 = vadd.f32 %v2086, %v2163
        %v2237 = vxor.u32 %v2236, 2147483648
        %v2238 = vmul.f32 %v2237, 1.442695
        %v2239 = vpow.pop %v2238
        %v2240 = vadd.f32 %v2239, 1.0
        %v2241 = vrcp.pop %v2240
        %v2242 = vmul.f32 1.0, %v2241
        %v2243 = vadd.f32 %v2089, %v2233
        %v2244 = vxor.u32 %v2243, 2147483648
        %v2245 = vmul.f32 %v2244, 1.442695
        %v2246 = vpow.pop %v2245
        %v2247 = vadd.f32 %v2246, 1.0
        %v2248 = vrcp.pop %v2247
        %v2249 = vmul.f32 1.0, %v2248
        %2250 = vmatprep.subr.mxu0 0.0
        %2251 = vmatpush1.msra.mxu0 %v833
        %2252 = vmatprep.subr.mxu0 0.0
        %2253 = vmatpush1.msra.mxu0 %v834
        %2254 = vmatprep.subr.mxu0 0.0
        %2255 = vmatpush1.msra.mxu0 %v835
        %2256 = vmatprep.subr.mxu0 0.0
        %2257 = vmatpush1.msra.mxu0 %v836
        %2258 = vmatprep.subr.mxu0 0.0
        %2259 = vmatpush1.msra.mxu0 0.0
        %2260 = vmatprep.subr.mxu0 0.0
        %2261 = vmatpush1.msra.mxu0 0.0
        %2262 = vmatprep.subr.mxu0 0.0
        %2263 = vmatpush1.msra.mxu0 0.0
        %2264 = vmatprep.subr.mxu0 0.0
        %2265 = vmatpush1.msra.mxu0 0.0
        %2266 = vmatprep.subr.mxu0 0.0
        %2267 = vmatpush1.msra.mxu0 0.0
        %2268 = vmatprep.subr.mxu0 0.0
        %2269 = vmatpush1.msra.mxu0 0.0
        %2270 = vmatprep.subr.mxu0 0.0
        %2271 = vmatpush1.msra.mxu0 0.0
        %2272 = vmatprep.subr.mxu0 0.0
        %2273 = vmatpush1.msra.mxu0 0.0
        %2274 = vmatprep.subr.mxu0 0.0
        %2275 = vmatpush1.msra.mxu0 0.0
        %2276 = vmatprep.subr.mxu0 0.0
        %2277 = vmatpush1.msra.mxu0 0.0
        %2278 = vmatprep.subr.mxu0 0.0
        %2279 = vmatpush1.msra.mxu0 0.0
        %2280 = vmatprep.subr.mxu0 0.0
        %2281 = vmatpush1.msra.mxu0 0.0
        %2282 = vmatprep.subr.mxu0 0.0
        %2283 = vmatpush1.msra.mxu0 0.0
        %2284 = vmatprep.subr.mxu0 0.0
        %2285 = vmatpush1.msra.mxu0 0.0
        %2286 = vmatprep.subr.mxu0 0.0
        %2287 = vmatpush1.msra.mxu0 0.0
        %2288 = vmatprep.subr.mxu0 0.0
        %2289 = vmatpush1.msra.mxu0 0.0
        %2290 = vmatprep.subr.mxu0 0.0
        %2291 = vmatpush1.msra.mxu0 0.0
        %2292 = vmatprep.subr.mxu0 0.0
        %2293 = vmatpush1.msra.mxu0 0.0
        %2294 = vmatprep.subr.mxu0 0.0
        %2295 = vmatpush1.msra.mxu0 0.0
        %2296 = vmatprep.subr.mxu0 0.0
        %2297 = vmatpush1.msra.mxu0 0.0
        %2298 = vmatprep.subr.mxu0 0.0
        %2299 = vmatpush1.msra.mxu0 0.0
        %2300 = vmatprep.subr.mxu0 0.0
        %2301 = vmatpush1.msra.mxu0 0.0
        %2302 = vmatprep.subr.mxu0 0.0
        %2303 = vmatpush1.msra.mxu0 0.0
        %2304 = vmatprep.subr.mxu0 0.0
        %2305 = vmatpush1.msra.mxu0 0.0
        %2306 = vmatprep.subr.mxu0 0.0
        %2307 = vmatpush1.msra.mxu0 0.0
        %2308 = vmatprep.subr.mxu0 0.0
        %2309 = vmatpush1.msra.mxu0 0.0
        %2310 = vmatprep.subr.mxu0 0.0
        %2311 = vmatpush1.msra.mxu0 0.0
        %2312 = vmatprep.subr.mxu0 0.0
        %2313 = vmatpush1.msra.mxu0 0.0
        %2314 = vmatprep.mubr.f32.mxu0 0.0
        %2315 = vmatmul.mubr.f32.gmra.mrb[0].mxu0 %v2094
        %v2316 = vpop.f32.mrb[0].mxu0
        %v2317 = vadd.f32 %v843, %v2316
        %v2318 = vpop.f32.mrb[0].mxu0
        %2319 = vdwg.mxu0
        %v2320 = vmul.f32 %v2242, %v2317
        %v2321 = vadd.f32 %v2092, %v2320
        %v2322 = vtanh.pop %v2321
        %v2323 = vsub.f32 1.0, %v2249
        %v2324 = vmul.f32 %v2323, %v2322
        %v2325 = vmul.f32 %v2249, %v2079
        %v2326 = vadd.f32 %v2324, %v2325
        %s2327 = scalar_lea.vmem %s376, %s2084
        %2328 = vst.msk [vmem:[%s2327] sm:$0xff] %vm400, %v2326
        %s2329 = smul.u32 %s847, 6
        %s2330 = sadd.s32 %s845, %s2329
        %s2331 = smul.u32 %s2330, 8
        %s2332 = scalar_lea.vmem [#allocation2], %s2331
        %v2333 = vld [vmem:[%s2332] sm:$0xff]
        %s2334 = sadd.s32 %s2331, 64
        %s2335 = scalar_lea.vmem [#allocation2], %s2334
        %v2336 = vld [vmem:[%s2335] sm:$0xff]
        %s2337 = sadd.s32 %s2331, 128
        %s2338 = scalar_lea.vmem [#allocation2], %s2337
        %v2339 = vld [vmem:[%s2338] sm:$0xff]
        %v2341 = vsel %vm400, %v2326, 0
        %2343 = vmatprep.subr.mxu0 0.0
        %2344 = vmatpush1.msra.mxu0 %v823
        %2345 = vmatprep.subr.mxu0 0.0
        %2346 = vmatpush1.msra.mxu0 %v824
        %2347 = vmatprep.subr.mxu0 0.0
        %2348 = vmatpush1.msra.mxu0 %v825
        %2349 = vmatprep.subr.mxu0 0.0
        %2350 = vmatpush1.msra.mxu0 %v826
        %2351 = vmatprep.subr.mxu0 0.0
        %2352 = vmatpush1.msra.mxu0 0.0
        %2353 = vmatprep.subr.mxu0 0.0
        %2354 = vmatpush1.msra.mxu0 0.0
        %2355 = vmatprep.subr.mxu0 0.0
        %2356 = vmatpush1.msra.mxu0 0.0
        %2357 = vmatprep.subr.mxu0 0.0
        %2358 = vmatpush1.msra.mxu0 0.0
        %2359 = vmatprep.subr.mxu0 0.0
        %2360 = vmatpush1.msra.mxu0 0.0
        %2361 = vmatprep.subr.mxu0 0.0
        %2362 = vmatpush1.msra.mxu0 0.0
        %2363 = vmatprep.subr.mxu0 0.0
        %2364 = vmatpush1.msra.mxu0 0.0
        %2365 = vmatprep.subr.mxu0 0.0
        %2366 = vmatpush1.msra.mxu0 0.0
        %2367 = vmatprep.subr.mxu0 0.0
        %2368 = vmatpush1.msra.mxu0 0.0
        %2369 = vmatprep.subr.mxu0 0.0
        %2370 = vmatpush1.msra.mxu0 0.0
        %2371 = vmatprep.subr.mxu0 0.0
        %2372 = vmatpush1.msra.mxu0 0.0
        %2373 = vmatprep.subr.mxu0 0.0
        %2374 = vmatpush1.msra.mxu0 0.0
        %2375 = vmatprep.subr.mxu0 0.0
        %2376 = vmatpush1.msra.mxu0 0.0
        %2377 = vmatprep.subr.mxu0 0.0
        %2378 = vmatpush1.msra.mxu0 0.0
        %2379 = vmatprep.subr.mxu0 0.0
        %2380 = vmatpush1.msra.mxu0 0.0
        %2381 = vmatprep.subr.mxu0 0.0
        %2382 = vmatpush1.msra.mxu0 0.0
        %2383 = vmatprep.subr.mxu0 0.0
        %2384 = vmatpush1.msra.mxu0 0.0
        %2385 = vmatprep.subr.mxu0 0.0
        %2386 = vmatpush1.msra.mxu0 0.0
        %2387 = vmatprep.subr.mxu0 0.0
        %2388 = vmatpush1.msra.mxu0 0.0
        %2389 = vmatprep.subr.mxu0 0.0
        %2390 = vmatpush1.msra.mxu0 0.0
        %2391 = vmatprep.subr.mxu0 0.0
        %2392 = vmatpush1.msra.mxu0 0.0
        %2393 = vmatprep.subr.mxu0 0.0
        %2394 = vmatpush1.msra.mxu0 0.0
        %2395 = vmatprep.subr.mxu0 0.0
        %2396 = vmatpush1.msra.mxu0 0.0
        %2397 = vmatprep.subr.mxu0 0.0
        %2398 = vmatpush1.msra.mxu0 0.0
        %2399 = vmatprep.subr.mxu0 0.0
        %2400 = vmatpush1.msra.mxu0 0.0
        %2401 = vmatprep.subr.mxu0 0.0
        %2402 = vmatpush1.msra.mxu0 0.0
        %2403 = vmatprep.subr.mxu0 0.0
        %2404 = vmatpush1.msra.mxu0 0.0
        %2405 = vmatprep.subr.mxu0 0.0
        %2406 = vmatpush1.msra.mxu0 0.0
        %2407 = vmatprep.mubr.f32.mxu0 0.0
        %2408 = vmatmul.mubr.f32.gmra.mrb[0].mxu0 %v2341
        %v2409 = vpop.f32.mrb[0].mxu0
        %v2410 = vadd.f32 0.0, %v2409
        %v2411 = vpop.f32.mrb[0].mxu0
        %2412 = vdwg.mxu0
        %2413 = vmatprep.subr.mxu0 0.0
        %2414 = vmatpush1.msra.mxu0 %v828
        %2415 = vmatprep.subr.mxu0 0.0
        %2416 = vmatpush1.msra.mxu0 %v829
        %2417 = vmatprep.subr.mxu0 0.0
        %2418 = vmatpush1.msra.mxu0 %v830
        %2419 = vmatprep.subr.mxu0 0.0
        %2420 = vmatpush1.msra.mxu0 %v831
        %2421 = vmatprep.subr.mxu0 0.0
        %2422 = vmatpush1.msra.mxu0 0.0
        %2423 = vmatprep.subr.mxu0 0.0
        %2424 = vmatpush1.msra.mxu0 0.0
        %2425 = vmatprep.subr.mxu0 0.0
        %2426 = vmatpush1.msra.mxu0 0.0
        %2427 = vmatprep.subr.mxu0 0.0
        %2428 = vmatpush1.msra.mxu0 0.0
        %2429 = vmatprep.subr.mxu0 0.0
        %2430 = vmatpush1.msra.mxu0 0.0
        %2431 = vmatprep.subr.mxu0 0.0
        %2432 = vmatpush1.msra.mxu0 0.0
        %2433 = vmatprep.subr.mxu0 0.0
        %2434 = vmatpush1.msra.mxu0 0.0
        %2435 = vmatprep.subr.mxu0 0.0
        %2436 = vmatpush1.msra.mxu0 0.0
        %2437 = vmatprep.subr.mxu0 0.0
        %2438 = vmatpush1.msra.mxu0 0.0
        %2439 = vmatprep.subr.mxu0 0.0
        %2440 = vmatpush1.msra.mxu0 0.0
        %2441 = vmatprep.subr.mxu0 0.0
        %2442 = vmatpush1.msra.mxu0 0.0
        %2443 = vmatprep.subr.mxu0 0.0
        %2444 = vmatpush1.msra.mxu0 0.0
        %2445 = vmatprep.subr.mxu0 0.0
        %2446 = vmatpush1.msra.mxu0 0.0
        %2447 = vmatprep.subr.mxu0 0.0
        %2448 = vmatpush1.msra.mxu0 0.0
        %2449 = vmatprep.subr.mxu0 0.0
        %2450 = vmatpush1.msra.mxu0 0.0
        %2451 = vmatprep.subr.mxu0 0.0
        %2452 = vmatpush1.msra.mxu0 0.0
        %2453 = vmatprep.subr.mxu0 0.0
        %2454 = vmatpush1.msra.mxu0 0.0
        %2455 = vmatprep.subr.mxu0 0.0
        %2456 = vmatpush1.msra.mxu0 0.0
        %2457 = vmatprep.subr.mxu0 0.0
        %2458 = vmatpush1.msra.mxu0 0.0
        %2459 = vmatprep.subr.mxu0 0.0
        %2460 = vmatpush1.msra.mxu0 0.0
        %2461 = vmatprep.subr.mxu0 0.0
        %2462 = vmatpush1.msra.mxu0 0.0
        %2463 = vmatprep.subr.mxu0 0.0
        %2464 = vmatpush1.msra.mxu0 0.0
        %2465 = vmatprep.subr.mxu0 0.0
        %2466 = vmatpush1.msra.mxu0 0.0
        %2467 = vmatprep.subr.mxu0 0.0
        %2468 = vmatpush1.msra.mxu0 0.0
        %2469 = vmatprep.subr.mxu0 0.0
        %2470 = vmatpush1.msra.mxu0 0.0
        %2471 = vmatprep.subr.mxu0 0.0
        %2472 = vmatpush1.msra.mxu0 0.0
        %2473 = vmatprep.subr.mxu0 0.0
        %2474 = vmatpush1.msra.mxu0 0.0
        %2475 = vmatprep.subr.mxu0 0.0
        %2476 = vmatpush1.msra.mxu0 0.0
        %2477 = vmatprep.mubr.f32.mxu0 0.0
        %2478 = vmatmul.mubr.f32.gmra.mrb[0].mxu0 %v2341
        %v2479 = vpop.f32.mrb[0].mxu0
        %v2480 = vadd.f32 0.0, %v2479
        %v2481 = vpop.f32.mrb[0].mxu0
        %2482 = vdwg.mxu0
        %v2483 = vadd.f32 %v2333, %v2410
        %v2484 = vxor.u32 %v2483, 2147483648
        %v2485 = vmul.f32 %v2484, 1.442695
        %v2486 = vpow.pop %v2485
        %v2487 = vadd.f32 %v2486, 1.0
        %v2488 = vrcp.pop %v2487
        %v2489 = vmul.f32 1.0, %v2488
        %v2490 = vadd.f32 %v2336, %v2480
        %v2491 = vxor.u32 %v2490, 2147483648
        %v2492 = vmul.f32 %v2491, 1.442695
        %v2493 = vpow.pop %v2492
        %v2494 = vadd.f32 %v2493, 1.0
        %v2495 = vrcp.pop %v2494
        %v2496 = vmul.f32 1.0, %v2495
        %2497 = vmatprep.subr.mxu0 0.0
        %2498 = vmatpush1.msra.mxu0 %v833
        %2499 = vmatprep.subr.mxu0 0.0
        %2500 = vmatpush1.msra.mxu0 %v834
        %2501 = vmatprep.subr.mxu0 0.0
        %2502 = vmatpush1.msra.mxu0 %v835
        %2503 = vmatprep.subr.mxu0 0.0
        %2504 = vmatpush1.msra.mxu0 %v836
        %2505 = vmatprep.subr.mxu0 0.0
        %2506 = vmatpush1.msra.mxu0 0.0
        %2507 = vmatprep.subr.mxu0 0.0
        %2508 = vmatpush1.msra.mxu0 0.0
        %2509 = vmatprep.subr.mxu0 0.0
        %2510 = vmatpush1.msra.mxu0 0.0
        %2511 = vmatprep.subr.mxu0 0.0
        %2512 = vmatpush1.msra.mxu0 0.0
        %2513 = vmatprep.subr.mxu0 0.0
        %2514 = vmatpush1.msra.mxu0 0.0
        %2515 = vmatprep.subr.mxu0 0.0
        %2516 = vmatpush1.msra.mxu0 0.0
        %2517 = vmatprep.subr.mxu0 0.0
        %2518 = vmatpush1.msra.mxu0 0.0
        %2519 = vmatprep.subr.mxu0 0.0
        %2520 = vmatpush1.msra.mxu0 0.0
        %2521 = vmatprep.subr.mxu0 0.0
        %2522 = vmatpush1.msra.mxu0 0.0
        %2523 = vmatprep.subr.mxu0 0.0
        %2524 = vmatpush1.msra.mxu0 0.0
        %2525 = vmatprep.subr.mxu0 0.0
        %2526 = vmatpush1.msra.mxu0 0.0
        %2527 = vmatprep.subr.mxu0 0.0
        %2528 = vmatpush1.msra.mxu0 0.0
        %2529 = vmatprep.subr.mxu0 0.0
        %2530 = vmatpush1.msra.mxu0 0.0
        %2531 = vmatprep.subr.mxu0 0.0
        %2532 = vmatpush1.msra.mxu0 0.0
        %2533 = vmatprep.subr.mxu0 0.0
        %2534 = vmatpush1.msra.mxu0 0.0
        %2535 = vmatprep.subr.mxu0 0.0
        %2536 = vmatpush1.msra.mxu0 0.0
        %2537 = vmatprep.subr.mxu0 0.0
        %2538 = vmatpush1.msra.mxu0 0.0
        %2539 = vmatprep.subr.mxu0 0.0
        %2540 = vmatpush1.msra.mxu0 0.0
        %2541 = vmatprep.subr.mxu0 0.0
        %2542 = vmatpush1.msra.mxu0 0.0
        %2543 = vmatprep.subr.mxu0 0.0
        %2544 = vmatpush1.msra.mxu0 0.0
        %2545 = vmatprep.subr.mxu0 0.0
        %2546 = vmatpush1.msra.mxu0 0.0
        %2547 = vmatprep.subr.mxu0 0.0
        %2548 = vmatpush1.msra.mxu0 0.0
        %2549 = vmatprep.subr.mxu0 0.0
        %2550 = vmatpush1.msra.mxu0 0.0
        %2551 = vmatprep.subr.mxu0 0.0
        %2552 = vmatpush1.msra.mxu0 0.0
        %2553 = vmatprep.subr.mxu0 0.0
        %2554 = vmatpush1.msra.mxu0 0.0
        %2555 = vmatprep.subr.mxu0 0.0
        %2556 = vmatpush1.msra.mxu0 0.0
        %2557 = vmatprep.subr.mxu0 0.0
        %2558 = vmatpush1.msra.mxu0 0.0
        %2559 = vmatprep.subr.mxu0 0.0
        %2560 = vmatpush1.msra.mxu0 0.0
        %2561 = vmatprep.mubr.f32.mxu0 0.0
        %2562 = vmatmul.mubr.f32.gmra.mrb[0].mxu0 %v2341
        %v2563 = vpop.f32.mrb[0].mxu0
        %v2564 = vadd.f32 %v843, %v2563
        %v2565 = vpop.f32.mrb[0].mxu0
        %2566 = vdwg.mxu0
        %v2567 = vmul.f32 %v2489, %v2564
        %v2568 = vadd.f32 %v2339, %v2567
        %v2569 = vtanh.pop %v2568
        %v2570 = vsub.f32 1.0, %v2496
        %v2571 = vmul.f32 %v2570, %v2569
        %v2572 = vmul.f32 %v2496, %v2326
        %v2573 = vadd.f32 %v2571, %v2572
        %s2574 = scalar_lea.vmem %s376, %s2331
        %2575 = vst.msk [vmem:[%s2574] sm:$0xff] %vm400, %v2573
        %s2576 = smul.u32 %s847, 7
        %s2577 = sadd.s32 %s845, %s2576
        %s2578 = smul.u32 %s2577, 8
        %s2579 = scalar_lea.vmem [#allocation2], %s2578
        %v2580 = vld [vmem:[%s2579] sm:$0xff]
        %s2581 = sadd.s32 %s2578, 64
        %s2582 = scalar_lea.vmem [#allocation2], %s2581
        %v2583 = vld [vmem:[%s2582] sm:$0xff]
        %s2584 = sadd.s32 %s2578, 128
        %s2585 = scalar_lea.vmem [#allocation2], %s2584
        %v2586 = vld [vmem:[%s2585] sm:$0xff]
        %v2588 = vsel %vm400, %v2573, 0
        %2590 = vmatprep.subr.mxu0 0.0
        %2591 = vmatpush1.msra.mxu0 %v823
        %2592 = vmatprep.subr.mxu0 0.0
        %2593 = vmatpush1.msra.mxu0 %v824
        %2594 = vmatprep.subr.mxu0 0.0
        %2595 = vmatpush1.msra.mxu0 %v825
        %2596 = vmatprep.subr.mxu0 0.0
        %2597 = vmatpush1.msra.mxu0 %v826
        %2598 = vmatprep.subr.mxu0 0.0
        %2599 = vmatpush1.msra.mxu0 0.0
        %2600 = vmatprep.subr.mxu0 0.0
        %2601 = vmatpush1.msra.mxu0 0.0
        %2602 = vmatprep.subr.mxu0 0.0
        %2603 = vmatpush1.msra.mxu0 0.0
        %2604 = vmatprep.subr.mxu0 0.0
        %2605 = vmatpush1.msra.mxu0 0.0
        %2606 = vmatprep.subr.mxu0 0.0
        %2607 = vmatpush1.msra.mxu0 0.0
        %2608 = vmatprep.subr.mxu0 0.0
        %2609 = vmatpush1.msra.mxu0 0.0
        %2610 = vmatprep.subr.mxu0 0.0
        %2611 = vmatpush1.msra.mxu0 0.0
        %2612 = vmatprep.subr.mxu0 0.0
        %2613 = vmatpush1.msra.mxu0 0.0
        %2614 = vmatprep.subr.mxu0 0.0
        %2615 = vmatpush1.msra.mxu0 0.0
        %2616 = vmatprep.subr.mxu0 0.0
        %2617 = vmatpush1.msra.mxu0 0.0
        %2618 = vmatprep.subr.mxu0 0.0
        %2619 = vmatpush1.msra.mxu0 0.0
        %2620 = vmatprep.subr.mxu0 0.0
        %2621 = vmatpush1.msra.mxu0 0.0
        %2622 = vmatprep.subr.mxu0 0.0
        %2623 = vmatpush1.msra.mxu0 0.0
        %2624 = vmatprep.subr.mxu0 0.0
        %2625 = vmatpush1.msra.mxu0 0.0
        %2626 = vmatprep.subr.mxu0 0.0
        %2627 = vmatpush1.msra.mxu0 0.0
        %2628 = vmatprep.subr.mxu0 0.0
        %2629 = vmatpush1.msra.mxu0 0.0
        %2630 = vmatprep.subr.mxu0 0.0
        %2631 = vmatpush1.msra.mxu0 0.0
        %2632 = vmatprep.subr.mxu0 0.0
        %2633 = vmatpush1.msra.mxu0 0.0
        %2634 = vmatprep.subr.mxu0 0.0
        %2635 = vmatpush1.msra.mxu0 0.0
        %2636 = vmatprep.subr.mxu0 0.0
        %2637 = vmatpush1.msra.mxu0 0.0
        %2638 = vmatprep.subr.mxu0 0.0
        %2639 = vmatpush1.msra.mxu0 0.0
        %2640 = vmatprep.subr.mxu0 0.0
        %2641 = vmatpush1.msra.mxu0 0.0
        %2642 = vmatprep.subr.mxu0 0.0
        %2643 = vmatpush1.msra.mxu0 0.0
        %2644 = vmatprep.subr.mxu0 0.0
        %2645 = vmatpush1.msra.mxu0 0.0
        %2646 = vmatprep.subr.mxu0 0.0
        %2647 = vmatpush1.msra.mxu0 0.0
        %2648 = vmatprep.subr.mxu0 0.0
        %2649 = vmatpush1.msra.mxu0 0.0
        %2650 = vmatprep.subr.mxu0 0.0
        %2651 = vmatpush1.msra.mxu0 0.0
        %2652 = vmatprep.subr.mxu0 0.0
        %2653 = vmatpush1.msra.mxu0 0.0
        %2654 = vmatprep.mubr.f32.mxu0 0.0
        %2655 = vmatmul.mubr.f32.gmra.mrb[0].mxu0 %v2588
        %v2656 = vpop.f32.mrb[0].mxu0
        %v2657 = vadd.f32 0.0, %v2656
        %v2658 = vpop.f32.mrb[0].mxu0
        %2659 = vdwg.mxu0
        %2660 = vmatprep.subr.mxu0 0.0
        %2661 = vmatpush1.msra.mxu0 %v828
        %2662 = vmatprep.subr.mxu0 0.0
        %2663 = vmatpush1.msra.mxu0 %v829
        %2664 = vmatprep.subr.mxu0 0.0
        %2665 = vmatpush1.msra.mxu0 %v830
        %2666 = vmatprep.subr.mxu0 0.0
        %2667 = vmatpush1.msra.mxu0 %v831
        %2668 = vmatprep.subr.mxu0 0.0
        %2669 = vmatpush1.msra.mxu0 0.0
        %2670 = vmatprep.subr.mxu0 0.0
        %2671 = vmatpush1.msra.mxu0 0.0
        %2672 = vmatprep.subr.mxu0 0.0
        %2673 = vmatpush1.msra.mxu0 0.0
        %2674 = vmatprep.subr.mxu0 0.0
        %2675 = vmatpush1.msra.mxu0 0.0
        %2676 = vmatprep.subr.mxu0 0.0
        %2677 = vmatpush1.msra.mxu0 0.0
        %2678 = vmatprep.subr.mxu0 0.0
        %2679 = vmatpush1.msra.mxu0 0.0
        %2680 = vmatprep.subr.mxu0 0.0
        %2681 = vmatpush1.msra.mxu0 0.0
        %2682 = vmatprep.subr.mxu0 0.0
        %2683 = vmatpush1.msra.mxu0 0.0
        %2684 = vmatprep.subr.mxu0 0.0
        %2685 = vmatpush1.msra.mxu0 0.0
        %2686 = vmatprep.subr.mxu0 0.0
        %2687 = vmatpush1.msra.mxu0 0.0
        %2688 = vmatprep.subr.mxu0 0.0
        %2689 = vmatpush1.msra.mxu0 0.0
        %2690 = vmatprep.subr.mxu0 0.0
        %2691 = vmatpush1.msra.mxu0 0.0
        %2692 = vmatprep.subr.mxu0 0.0
        %2693 = vmatpush1.msra.mxu0 0.0
        %2694 = vmatprep.subr.mxu0 0.0
        %2695 = vmatpush1.msra.mxu0 0.0
        %2696 = vmatprep.subr.mxu0 0.0
        %2697 = vmatpush1.msra.mxu0 0.0
        %2698 = vmatprep.subr.mxu0 0.0
        %2699 = vmatpush1.msra.mxu0 0.0
        %2700 = vmatprep.subr.mxu0 0.0
        %2701 = vmatpush1.msra.mxu0 0.0
        %2702 = vmatprep.subr.mxu0 0.0
        %2703 = vmatpush1.msra.mxu0 0.0
        %2704 = vmatprep.subr.mxu0 0.0
        %2705 = vmatpush1.msra.mxu0 0.0
        %2706 = vmatprep.subr.mxu0 0.0
        %2707 = vmatpush1.msra.mxu0 0.0
        %2708 = vmatprep.subr.mxu0 0.0
        %2709 = vmatpush1.msra.mxu0 0.0
        %2710 = vmatprep.subr.mxu0 0.0
        %2711 = vmatpush1.msra.mxu0 0.0
        %2712 = vmatprep.subr.mxu0 0.0
        %2713 = vmatpush1.msra.mxu0 0.0
        %2714 = vmatprep.subr.mxu0 0.0
        %2715 = vmatpush1.msra.mxu0 0.0
        %2716 = vmatprep.subr.mxu0 0.0
        %2717 = vmatpush1.msra.mxu0 0.0
        %2718 = vmatprep.subr.mxu0 0.0
        %2719 = vmatpush1.msra.mxu0 0.0
        %2720 = vmatprep.subr.mxu0 0.0
        %2721 = vmatpush1.msra.mxu0 0.0
        %2722 = vmatprep.subr.mxu0 0.0
        %2723 = vmatpush1.msra.mxu0 0.0
        %2724 = vmatprep.mubr.f32.mxu0 0.0
        %2725 = vmatmul.mubr.f32.gmra.mrb[0].mxu0 %v2588
        %v2726 = vpop.f32.mrb[0].mxu0
        %v2727 = vadd.f32 0.0, %v2726
        %v2728 = vpop.f32.mrb[0].mxu0
        %2729 = vdwg.mxu0
        %v2730 = vadd.f32 %v2580, %v2657
        %v2731 = vxor.u32 %v2730, 2147483648
        %v2732 = vmul.f32 %v2731, 1.442695
        %v2733 = vpow.pop %v2732
        %v2734 = vadd.f32 %v2733, 1.0
        %v2735 = vrcp.pop %v2734
        %v2736 = vmul.f32 1.0, %v2735
        %v2737 = vadd.f32 %v2583, %v2727
        %v2738 = vxor.u32 %v2737, 2147483648
        %v2739 = vmul.f32 %v2738, 1.442695
        %v2740 = vpow.pop %v2739
        %v2741 = vadd.f32 %v2740, 1.0
        %v2742 = vrcp.pop %v2741
        %v2743 = vmul.f32 1.0, %v2742
        %2744 = vmatprep.subr.mxu0 0.0
        %2745 = vmatpush1.msra.mxu0 %v833
        %2746 = vmatprep.subr.mxu0 0.0
        %2747 = vmatpush1.msra.mxu0 %v834
        %2748 = vmatprep.subr.mxu0 0.0
        %2749 = vmatpush1.msra.mxu0 %v835
        %2750 = vmatprep.subr.mxu0 0.0
        %2751 = vmatpush1.msra.mxu0 %v836
        %2752 = vmatprep.subr.mxu0 0.0
        %2753 = vmatpush1.msra.mxu0 0.0
        %2754 = vmatprep.subr.mxu0 0.0
        %2755 = vmatpush1.msra.mxu0 0.0
        %2756 = vmatprep.subr.mxu0 0.0
        %2757 = vmatpush1.msra.mxu0 0.0
        %2758 = vmatprep.subr.mxu0 0.0
        %2759 = vmatpush1.msra.mxu0 0.0
        %2760 = vmatprep.subr.mxu0 0.0
        %2761 = vmatpush1.msra.mxu0 0.0
        %2762 = vmatprep.subr.mxu0 0.0
        %2763 = vmatpush1.msra.mxu0 0.0
        %2764 = vmatprep.subr.mxu0 0.0
        %2765 = vmatpush1.msra.mxu0 0.0
        %2766 = vmatprep.subr.mxu0 0.0
        %2767 = vmatpush1.msra.mxu0 0.0
        %2768 = vmatprep.subr.mxu0 0.0
        %2769 = vmatpush1.msra.mxu0 0.0
        %2770 = vmatprep.subr.mxu0 0.0
        %2771 = vmatpush1.msra.mxu0 0.0
        %2772 = vmatprep.subr.mxu0 0.0
        %2773 = vmatpush1.msra.mxu0 0.0
        %2774 = vmatprep.subr.mxu0 0.0
        %2775 = vmatpush1.msra.mxu0 0.0
        %2776 = vmatprep.subr.mxu0 0.0
        %2777 = vmatpush1.msra.mxu0 0.0
        %2778 = vmatprep.subr.mxu0 0.0
        %2779 = vmatpush1.msra.mxu0 0.0
        %2780 = vmatprep.subr.mxu0 0.0
        %2781 = vmatpush1.msra.mxu0 0.0
        %2782 = vmatprep.subr.mxu0 0.0
        %2783 = vmatpush1.msra.mxu0 0.0
        %2784 = vmatprep.subr.mxu0 0.0
        %2785 = vmatpush1.msra.mxu0 0.0
        %2786 = vmatprep.subr.mxu0 0.0
        %2787 = vmatpush1.msra.mxu0 0.0
        %2788 = vmatprep.subr.mxu0 0.0
        %2789 = vmatpush1.msra.mxu0 0.0
        %2790 = vmatprep.subr.mxu0 0.0
        %2791 = vmatpush1.msra.mxu0 0.0
        %2792 = vmatprep.subr.mxu0 0.0
        %2793 = vmatpush1.msra.mxu0 0.0
        %2794 = vmatprep.subr.mxu0 0.0
        %2795 = vmatpush1.msra.mxu0 0.0
        %2796 = vmatprep.subr.mxu0 0.0
        %2797 = vmatpush1.msra.mxu0 0.0
        %2798 = vmatprep.subr.mxu0 0.0
        %2799 = vmatpush1.msra.mxu0 0.0
        %2800 = vmatprep.subr.mxu0 0.0
        %2801 = vmatpush1.msra.mxu0 0.0
        %2802 = vmatprep.subr.mxu0 0.0
        %2803 = vmatpush1.msra.mxu0 0.0
        %2804 = vmatprep.subr.mxu0 0.0
        %2805 = vmatpush1.msra.mxu0 0.0
        %2806 = vmatprep.subr.mxu0 0.0
        %2807 = vmatpush1.msra.mxu0 0.0
        %2808 = vmatprep.mubr.f32.mxu0 0.0
        %2809 = vmatmul.mubr.f32.gmra.mrb[0].mxu0 %v2588
        %v2810 = vpop.f32.mrb[0].mxu0
        %v2811 = vadd.f32 %v843, %v2810
        %v2812 = vpop.f32.mrb[0].mxu0
        %2813 = vdwg.mxu0
        %v2814 = vmul.f32 %v2736, %v2811
        %v2815 = vadd.f32 %v2586, %v2814
        %v2816 = vtanh.pop %v2815
        %v2817 = vsub.f32 1.0, %v2743
        %v2818 = vmul.f32 %v2817, %v2816
        %v2819 = vmul.f32 %v2743, %v2573
        %v2820 = vadd.f32 %v2818, %v2819
        %s2821 = scalar_lea.vmem %s376, %s2578
        %2822 = vst.msk [vmem:[%s2821] sm:$0xff] %vm400, %v2820
        %2823 = vst.msk [vmem:[%s380] sm:$0xff] %vm400, %v2820
        %p2824 = scmp.lt.s32.totalorder %s22, 1
        %s2825 = scalar_select %p2824, %s22, 1
        %s2826 = smul.addr %s2825, 8
        %s2827 = smul.addr %s2826, 8
        %s2828 = scalar_lea.vmem %s6, %s2827
        %p2829 = scmp.lt.s32.totalorder %s22, 1
        %s2830 = scalar_select %p2829, %s22, 1
        %s2831 = smul.addr %s2830, 8
        %s2832 = scalar_lea.vmem %s7, %s2831
        // Predicated region
        $region49: #{encoder_rnn_forward.1} parent=43 // pred_check
          %p2833 = pneg %p191
        $region50: #{encoder_rnn_forward.1} parent=43 // pred_check_branch
          %2835 = sbr.rel (%p2833) target = $region52
        $region51: #{encoder_rnn_forward.1} parent=43 // pred_region
          _
        $region52: #{encoder_rnn_forward.1} parent=43 // pred_fallthru
          _
        // Predicated region
        $region53: #{encoder_rnn_forward.1} parent=43 // pred_check
          %p2836 = pneg %p217
        $region54: #{encoder_rnn_forward.1} parent=43 // pred_check_branch
          %2838 = sbr.rel (%p2836) target = $region56
        $region55: #{encoder_rnn_forward.1} parent=43 // pred_region
          _
        $region56: #{encoder_rnn_forward.1} parent=43 // pred_fallthru
          _
      $region44: #{encoder_rnn_forward.1} parent=5 // pred_fallthru
        _
      %p2839 = scmp.le.s32.totalorder 2, %s17
      // Predicated region
      $region57: #{encoder_rnn_forward.1} parent=5 // pred_check
        %p2840 = pneg %p2839
      $region58: #{encoder_rnn_forward.1} parent=5 // pred_check_branch
        %2842 = sbr.rel (%p2840) target = $region60
      $region59: #{encoder_rnn_forward.1} parent=5 // pred_region
        %s2843 = ssub.s32 %s17, 2
        // Predicated region
        $region61: #{encoder_rnn_forward.1} parent=59 // pred_check
          %p2844 = pneg %p197
        $region62: #{encoder_rnn_forward.1} parent=59 // pred_check_branch
          %2846 = sbr.rel (%p2844) target = $region64
        $region63: #{encoder_rnn_forward.1} parent=59 // pred_region
          %p2847 = scmp.lt.s32.totalorder %s23, 1
          %s2848 = scalar_select %p2847, %s23, 1
          %s2849 = smul.addr %s2848, 8
          %s2850 = smul.addr %s2849, 8
          %s2851 = scalar_lea.vmem %s6, %s2850
        $region64: #{encoder_rnn_forward.1} parent=59 // pred_fallthru
          _
        // Predicated region
        $region65: #{encoder_rnn_forward.1} parent=59 // pred_check
          %p2852 = pneg %p223
        $region66: #{encoder_rnn_forward.1} parent=59 // pred_check_branch
          %2854 = sbr.rel (%p2852) target = $region68
        $region67: #{encoder_rnn_forward.1} parent=59 // pred_region
          %p2855 = scmp.lt.s32.totalorder %s23, 1
          %s2856 = scalar_select %p2855, %s23, 1
          %s2857 = smul.addr %s2856, 8
          %s2858 = scalar_lea.vmem %s7, %s2857
        $region68: #{encoder_rnn_forward.1} parent=59 // pred_fallthru
          _
      $region60: #{encoder_rnn_forward.1} parent=5 // pred_fallthru
        _
    $region6: #{encoder_rnn_forward.1} parent=1 // loop_footer
      %s21 = sadd.s32 1, %s17
    $region7: #{encoder_rnn_forward.1} parent=1 // loop_footer_branch
      %16 = sbr.rel target = $region3
    $region8: #{encoder_rnn_forward.1} parent=1 // loop_exit
      _
    %2859 = vsyncpa [#allocation4], 1
    %s2860 = scalar_lea.sflag [#allocation4], 1
    %2861 = vsyncpa %s2860, 1

</llo_original>
